<compile_context>
chip_gen: v7x
topology: tpu7x:2x2x1
jax: 0.10.0
libtpu: 0.0.40
codegen_flags: <defaults>
</compile_context>

<pallas_src>
import functools

import jax
import jax.numpy as jnp
from jax import lax
from jax.experimental import pallas as pl
from jax.experimental.pallas import tpu as pltpu

partial = functools.partial


# ----------------------------------------------------------------------------
# Generation-aware constants
# ----------------------------------------------------------------------------
def _vmem_capacity_bytes():
    try:
        info = pltpu.get_tpu_info()
        for attr in ("vmem_capacity_bytes", "vmem_bytes", "vmem_size_bytes"):
            v = getattr(info, attr, None)
            if v:
                return int(v)
    except Exception:
        pass
    return 64 * 1024 * 1024          # conservative default: v7x per-TC VMEM


_VMEM_CAP = _vmem_capacity_bytes()
_VMEM_LIMIT_BYTES = min(int(_VMEM_CAP * 0.85), 100 * 1024 * 1024)


def _round_up(x, m):
    return ((x + m - 1) // m) * m


def _pick_row_tile(hw_pad, bytes_per_row, n_batch):
    """Largest multiple-of-128 divisor of hw_pad whose double-buffered tiles fit VMEM."""
    budget = int(_VMEM_LIMIT_BYTES * 0.5)
    max_tp = max(128, (budget // (2 * max(bytes_per_row, 1))) // 128 * 128)
    if n_batch == 1 and hw_pad >= 256:
        # keep >= 2 grid steps along the parallel row axis so v7x's 2 TCs both get work
        max_tp = min(max_tp, max(128, (hw_pad // 2) // 128 * 128))
    best, t = 128, 128
    limit = min(hw_pad, max_tp)
    while t <= limit:
        if hw_pad % t == 0:
            best = t
        t += 128
    return best


# ----------------------------------------------------------------------------
# XLA-side helpers (im2col + tiny ops left to XLA)
# ----------------------------------------------------------------------------
def _im2col_nchw(x):
    """x: (N, C, H, W) -> (N, 9*C, H*W); patch row index = (dy*3+dx)*C + c."""
    N, C, H, W = x.shape
    xp = jnp.pad(x, ((0, 0), (0, 0), (1, 1), (1, 1)))
    taps = [xp[:, :, dy:dy + H, dx:dx + W] for dy in range(3) for dx in range(3)]
    return jnp.concatenate(taps, axis=1).reshape(N, 9 * C, H * W)


def _conv3x3_xla(x, w9, b):
    """NCHW 3x3 SAME conv via XLA. w9: (9*cin, cout) ordered (tap, cin); b: (1, cout)."""
    cin, cout = x.shape[1], w9.shape[1]
    w = jnp.transpose(w9.reshape(3, 3, cin, cout), (3, 2, 0, 1))     # OIHW
    y = lax.conv_general_dilated(x, w, (1, 1), "SAME",
                                 dimension_numbers=("NCHW", "OIHW", "NCHW"))
    return y + b.reshape(1, cout, 1, 1)


# ----------------------------------------------------------------------------
# Fused Pallas kernel: conv1||conv2 + oconv1||oconv2 + conv_f + BIADD gating
# ----------------------------------------------------------------------------
def _biadd_fused_kernel(pa_ref, po_ref, pf_ref,
                        w12_ref, b12_ref, wo12_ref, bo12_ref,
                        wf_ref, bf_ref,
                        hin_ref, s_ref, t_ref, mask_ref, idb_ref, o_ref):
    ch = o_ref.shape[1]

    # Three MXU matmuls, channel-major: (Cout, 9*Cin) @ (9*Cin, TP) -> (Cout, TP)
    attb = jnp.dot(w12_ref[...], pa_ref[0], preferred_element_type=jnp.float32) + b12_ref[...]
    occb = jnp.dot(wo12_ref[...], po_ref[0], preferred_element_type=jnp.float32) + bo12_ref[...]
    f = jnp.dot(wf_ref[...], pf_ref[0], preferred_element_type=jnp.float32) + bf_ref[...]
    m = jax.nn.sigmoid(f)                                            # (ch, TP), EUP

    # h_bar = BN(h_in) recomputed in-kernel (2 VPU ops) from f32 h_in: exact gating math.
    h_bar = hin_ref[0] * s_ref[...] + t_ref[...]                     # (ch, TP)
    msk = mask_ref[0]                                                # (1, TP)

    # lerp form: x = b + m*(a - b)
    r_att = occb[:ch] + msk * (attb[:ch] - occb[:ch])
    b_att = occb[ch:] + msk * (attb[ch:] - occb[ch:])

    idb = idb_ref[0]                                                 # (2*ch, 1)
    i_t = idb[:ch] * h_bar + idb[ch:]
    a_t = r_att * h_bar + b_att
    o_ref[0] = (a_t + m * (i_t - a_t)).astype(o_ref.dtype)           # lane-dense store


# ----------------------------------------------------------------------------
# Forward wrapper (PyTorch NCHW in, NCHW out)
# ----------------------------------------------------------------------------
@jax.jit
def biadd_forward(params, h_in, z_att, z_id, occ, mask):
    N, ch, H, W = h_in.shape
    z_ch = z_att.shape[1]
    HW = H * W
    hw_pad = _round_up(HW, 128)

    scale = params["bn"]["scale"]                                    # (1, ch)
    shift = params["bn"]["shift"]                                    # (1, ch)

    # mlp_shared: relu(conv3x3(occ; 3 -> z_ch)) -- tiny, left to XLA.
    actv = jnp.maximum(_conv3x3_xla(occ, params["mlp"]["w"], params["mlp"]["b"]), 0.0)

    # fc_1 || fc_2: tiny matmul, left to XLA; reshaped to per-channel columns.
    idb = (jnp.dot(z_id, params["fc12"]["w"]) + params["fc12"]["b"]).reshape(N, 2 * ch, 1)

    # BN affine applied in XLA so the conv_f patches are exact w.r.t. zero padding.
    h_bar = h_in * scale.reshape(1, ch, 1, 1) + shift.reshape(1, ch, 1, 1)

    # im2col patches, channel-major (HW-minor -> lane-dense), bf16 (MXU truncates anyway).
    bf16 = jnp.bfloat16
    pa = _im2col_nchw(z_att.astype(bf16))                            # (N, 9*z_ch, HW)
    po = _im2col_nchw(actv.astype(bf16))                             # (N, 9*z_ch, HW)
    pf = _im2col_nchw(h_bar.astype(bf16))                            # (N, 9*ch,  HW)

    hin_rows = h_in.reshape(N, ch, HW)
    mask_rows = mask[:, 0:1].reshape(N, 1, HW)

    if hw_pad != HW:
        pad = ((0, 0), (0, 0), (0, hw_pad - HW))
        pa, po, pf = jnp.pad(pa, pad), jnp.pad(po, pad), jnp.pad(pf, pad)
        hin_rows, mask_rows = jnp.pad(hin_rows, pad), jnp.pad(mask_rows, pad)

    # per-HW-column bytes of all pipelined tiles (bf16 patches + f32 rows + f32 out)
    bpr = 2 * (18 * z_ch + 9 * ch) + 4 * (ch + 1) + 4 * ch
    TP = _pick_row_tile(hw_pad, bpr, N)

    # Fused / transposed weights (bf16 operands, f32 accumulation).
    w12 = params["conv12"]["w"].T.astype(bf16)                       # (2*ch, 9*z_ch)
    b12 = params["conv12"]["b"].reshape(2 * ch, 1)
    wo12 = params["oconv12"]["w"].T.astype(bf16)                     # (2*ch, 9*z_ch)
    bo12 = params["oconv12"]["b"].reshape(2 * ch, 1)
    wf = params["convf"]["w"].T.astype(bf16)                         # (ch, 9*ch)
    bfv = params["convf"]["b"].reshape(ch, 1)
    s_col = scale.reshape(ch, 1)
    t_col = shift.reshape(ch, 1)

    def rows(c):
        return pl.BlockSpec((1, c, TP), lambda n, t: (n, 0, t))

    def full(arr):
        nd = arr.ndim
        return pl.BlockSpec(arr.shape, lambda n, t, _nd=nd: (0,) * _nd)

    out = pl.pallas_call(
        _biadd_fused_kernel,
        out_shape=jax.ShapeDtypeStruct((N, ch, hw_pad), jnp.float32),
        grid=(N, hw_pad // TP),
        in_specs=[
            rows(9 * z_ch),                                          # z_att patches
            rows(9 * z_ch),                                          # actv patches
            rows(9 * ch),                                            # h_bar patches
            full(w12), full(b12),                                    # conv1||conv2
            full(wo12), full(bo12),                                  # oconv1||oconv2
            full(wf), full(bfv),                                     # conv_f
            rows(ch),                                                # h_in
            full(s_col), full(t_col),                                # BN scale / shift
            rows(1),                                                 # mask
            pl.BlockSpec((1, 2 * ch, 1), lambda n, t: (n, 0, 0)),    # r_id || beta_id
        ],
        out_specs=rows(ch),
        compiler_params=pltpu.CompilerParams(
            dimension_semantics=("parallel", "parallel"),
            vmem_limit_bytes=_VMEM_LIMIT_BYTES),
    )(pa, po, pf, w12, b12, wo12, bo12, wf, bfv,
      hin_rows, s_col, t_col, mask_rows, idb)

    return out[:, :, :HW].reshape(N, ch, H, W)                       # already NCHW


# ----------------------------------------------------------------------------
# Parameter construction (deterministic, synthetic)
# ----------------------------------------------------------------------------
def conv3x3_params(key, cin, cout, std=0.05):
    kw, kb = jax.random.split(key)
    w = jax.random.normal(kw, (3, 3, cin, cout), jnp.float32) * std
    b = jax.random.normal(kb, (1, cout), jnp.float32) * std
    return {"w": w.reshape(9 * cin, cout), "b": b}


def fused_conv_pair_params(key, cin, cout, std=0.05):
    k1, k2 = jax.random.split(key)
    p1 = conv3x3_params(k1, cin, cout, std)
    p2 = conv3x3_params(k2, cin, cout, std)
    return {"w": jnp.concatenate([p1["w"], p2["w"]], axis=1),
            "b": jnp.concatenate([p1["b"], p2["b"]], axis=1)}


def fused_fc_pair_params(key, din, dout, std=0.05):
    k1, k2, kb1, kb2 = jax.random.split(key, 4)
    w = jnp.concatenate([jax.random.normal(k1, (din, dout), jnp.float32) * std,
                         jax.random.normal(k2, (din, dout), jnp.float32) * std], axis=1)
    b = jnp.concatenate([jax.random.normal(kb1, (1, dout), jnp.float32) * std,
                         jax.random.normal(kb2, (1, dout), jnp.float32) * std], axis=1)
    return {"w": w, "b": b}


def bn_params(key, c, eps=1e-5):
    kg, kb, km, kv = jax.random.split(key, 4)
    gamma = 1.0 + 0.05 * jax.random.normal(kg, (c,), jnp.float32)
    beta = 0.05 * jax.random.normal(kb, (c,), jnp.float32)
    mean = 0.05 * jax.random.normal(km, (c,), jnp.float32)
    var = jnp.abs(1.0 + 0.05 * jax.random.normal(kv, (c,), jnp.float32))
    scale = gamma / jnp.sqrt(var + eps)
    shift = beta - mean * scale
    return {"scale": scale.reshape(1, c), "shift": shift.reshape(1, c)}


def init_biadd_params(key, h_ch, z_ch, z_id_size):
    ks = jax.random.split(key, 6)
    return {
        "bn": bn_params(ks[0], h_ch),
        "convf": conv3x3_params(ks[1], h_ch, h_ch),
        "fc12": fused_fc_pair_params(ks[2], z_id_size, h_ch),
        "conv12": fused_conv_pair_params(ks[3], z_ch, h_ch),
        "mlp": conv3x3_params(ks[4], 3, z_ch),
        "oconv12": fused_conv_pair_params(ks[5], z_ch, h_ch),
    }


# ----------------------------------------------------------------------------
# Plain-JAX reference (mirrors the PyTorch forward, NCHW)
# ----------------------------------------------------------------------------
def _ref_biadd(params, h_in, z_att, z_id, occ, mask):
    ch = h_in.shape[1]
    s = params["bn"]["scale"].reshape(1, ch, 1, 1)
    t = params["bn"]["shift"].reshape(1, ch, 1, 1)
    h_bar = h_in * s + t
    m = jax.nn.sigmoid(_conv3x3_xla(h_bar, params["convf"]["w"], params["convf"]["b"]))
    idb = jnp.dot(z_id, params["fc12"]["w"]) + params["fc12"]["b"]
    i = idb[:, :ch].reshape(-1, ch, 1, 1) * h_bar + idb[:, ch:].reshape(-1, ch, 1, 1)
    actv = jnp.maximum(_conv3x3_xla(occ, params["mlp"]["w"], params["mlp"]["b"]), 0.0)
    ob = _conv3x3_xla(actv, params["oconv12"]["w"], params["oconv12"]["b"])
    ab = _conv3x3_xla(z_att, params["conv12"]["w"], params["conv12"]["b"])
    r_att = ab[:, :ch] * mask + ob[:, :ch] * (1.0 - mask)
    b_att = ab[:, ch:] * mask + ob[:, ch:] * (1.0 - mask)
    a = r_att * h_bar + b_att
    return (1.0 - m) * a + m * i


# ----------------------------------------------------------------------------
if __name__ == "__main__":
    B, H, W = 2, 32, 32
    h_ch, z_ch, z_id_size = 32, 16, 64

    key = jax.random.PRNGKey(0)
    kp, kh, kz, ki, ko, km = jax.random.split(key, 6)
    params = init_biadd_params(kp, h_ch, z_ch, z_id_size)

    h_in = jax.random.normal(kh, (B, h_ch, H, W), jnp.float32)
    z_att = 0.1 * jax.random.normal(kz, (B, z_ch, H, W), jnp.float32)
    z_id = jax.random.normal(ki, (B, z_id_size), jnp.float32)
    occ = 0.1 * jax.random.normal(ko, (B, 3, H, W), jnp.float32)
    mask = jax.random.uniform(km, (B, 1, H, W), jnp.float32)

    out = biadd_forward(params, h_in, z_att, z_id, occ, mask)
    out = jax.block_until_ready(out)

    assert out.shape == (B, h_ch, H, W), out.shape
    assert bool(jnp.all(jnp.isfinite(out)))

    ref = jax.block_until_ready(_ref_biadd(params, h_in, z_att, z_id, occ, mask))
    max_err = float(jnp.max(jnp.abs(out - ref)))
    # bf16 patches/weights with f32 accumulation (default MXU truncates f32 anyway)
    assert max_err < 5e-2, max_err

    print("KERNEL_OK")
</pallas_src>

<mosaic_0001>
module attributes {stable_mosaic.version = 11 : i64} {
  func.func @_biadd_fused_kernel(%arg0: i32, %arg1: i32, %arg2: memref<1x144x1024xbf16, #tpu.memory_space<vmem>>, %arg3: memref<1x144x1024xbf16, #tpu.memory_space<vmem>>, %arg4: memref<1x288x1024xbf16, #tpu.memory_space<vmem>>, %arg5: memref<64x144xbf16, #tpu.memory_space<vmem>>, %arg6: memref<64x1xf32, #tpu.memory_space<vmem>>, %arg7: memref<64x144xbf16, #tpu.memory_space<vmem>>, %arg8: memref<64x1xf32, #tpu.memory_space<vmem>>, %arg9: memref<32x288xbf16, #tpu.memory_space<vmem>>, %arg10: memref<32x1xf32, #tpu.memory_space<vmem>>, %arg11: memref<1x32x1024xf32, #tpu.memory_space<vmem>>, %arg12: memref<32x1xf32, #tpu.memory_space<vmem>>, %arg13: memref<32x1xf32, #tpu.memory_space<vmem>>, %arg14: memref<1x1x1024xf32, #tpu.memory_space<vmem>>, %arg15: memref<1x64x1xf32, #tpu.memory_space<vmem>>, %arg16: memref<1x32x1024xf32, #tpu.memory_space<vmem>>) attributes {dimension_semantics = [#tpu.dimension_semantics<parallel>, #tpu.dimension_semantics<parallel>], iteration_bounds = array<i64: 2, 1>, scalar_prefetch = 0 : i64, scratch_operands = 0 : i64, tpu.core_type = #tpu.core_type<tc>, window_params = [{transform_indices = @transform_0, window_bounds = array<i64: 1, 144, 1024>}, {transform_indices = @transform_1, window_bounds = array<i64: 1, 144, 1024>}, {transform_indices = @transform_2, window_bounds = array<i64: 1, 288, 1024>}, {pipeline_mode = #tpu.pipeline_mode<synchronous>, transform_indices = @transform_3, window_bounds = array<i64: 64, 144>}, {pipeline_mode = #tpu.pipeline_mode<synchronous>, transform_indices = @transform_4, window_bounds = array<i64: 64, 1>}, {pipeline_mode = #tpu.pipeline_mode<synchronous>, transform_indices = @transform_5, window_bounds = array<i64: 64, 144>}, {pipeline_mode = #tpu.pipeline_mode<synchronous>, transform_indices = @transform_6, window_bounds = array<i64: 64, 1>}, {pipeline_mode = #tpu.pipeline_mode<synchronous>, transform_indices = @transform_7, window_bounds = array<i64: 32, 288>}, {pipeline_mode = #tpu.pipeline_mode<synchronous>, transform_indices = @transform_8, window_bounds = array<i64: 32, 1>}, {transform_indices = @transform_9, window_bounds = array<i64: 1, 32, 1024>}, {pipeline_mode = #tpu.pipeline_mode<synchronous>, transform_indices = @transform_10, window_bounds = array<i64: 32, 1>}, {pipeline_mode = #tpu.pipeline_mode<synchronous>, transform_indices = @transform_11, window_bounds = array<i64: 32, 1>}, {transform_indices = @transform_12, window_bounds = array<i64: 1, 1, 1024>}, {transform_indices = @transform_13, window_bounds = array<i64: 1, 64, 1>}, {transform_indices = @transform_14, window_bounds = array<i64: 1, 32, 1024>}]} {
    %c0 = arith.constant 0 : index
    %c0_0 = arith.constant 0 : index
    %0 = vector.load %arg5[%c0, %c0_0] : memref<64x144xbf16, #tpu.memory_space<vmem>>, vector<64x144xbf16>
    %c0_1 = arith.constant 0 : index
    %c0_2 = arith.constant 0 : index
    %c0_3 = arith.constant 0 : index
    %1 = vector.load %arg2[%c0_1, %c0_2, %c0_3] : memref<1x144x1024xbf16, #tpu.memory_space<vmem>>, vector<1x144x1024xbf16>
    %2 = vector.shape_cast %1 : vector<1x144x1024xbf16> to vector<144x1024xbf16>
    %cst = arith.constant dense<0.000000e+00> : vector<64x1024xf32>
    %3 = tpu.matmul %0, %2, %cst {dimension_numbers = #tpu.dot_dimension_numbers<[1], [0], [0], [1], [0, 0, 1, 1], [], []>} : vector<64x144xbf16>, vector<144x1024xbf16>, vector<64x1024xf32> -> vector<64x1024xf32>
    %c0_4 = arith.constant 0 : index
    %c0_5 = arith.constant 0 : index
    %4 = vector.load %arg6[%c0_4, %c0_5] : memref<64x1xf32, #tpu.memory_space<vmem>>, vector<64x1xf32>
    %5 = vector.broadcast %4 : vector<64x1xf32> to vector<64x1024xf32>
    %6 = arith.addf %3, %5 : vector<64x1024xf32>
    %c0_6 = arith.constant 0 : index
    %c0_7 = arith.constant 0 : index
    %7 = vector.load %arg7[%c0_6, %c0_7] : memref<64x144xbf16, #tpu.memory_space<vmem>>, vector<64x144xbf16>
    %c0_8 = arith.constant 0 : index
    %c0_9 = arith.constant 0 : index
    %c0_10 = arith.constant 0 : index
    %8 = vector.load %arg3[%c0_8, %c0_9, %c0_10] : memref<1x144x1024xbf16, #tpu.memory_space<vmem>>, vector<1x144x1024xbf16>
    %9 = vector.shape_cast %8 : vector<1x144x1024xbf16> to vector<144x1024xbf16>
    %cst_11 = arith.constant dense<0.000000e+00> : vector<64x1024xf32>
    %10 = tpu.matmul %7, %9, %cst_11 {dimension_numbers = #tpu.dot_dimension_numbers<[1], [0], [0], [1], [0, 0, 1, 1], [], []>} : vector<64x144xbf16>, vector<144x1024xbf16>, vector<64x1024xf32> -> vector<64x1024xf32>
    %c0_12 = arith.constant 0 : index
    %c0_13 = arith.constant 0 : index
    %11 = vector.load %arg8[%c0_12, %c0_13] : memref<64x1xf32, #tpu.memory_space<vmem>>, vector<64x1xf32>
    %12 = vector.broadcast %11 : vector<64x1xf32> to vector<64x1024xf32>
    %13 = arith.addf %10, %12 : vector<64x1024xf32>
    %c0_14 = arith.constant 0 : index
    %c0_15 = arith.constant 0 : index
    %14 = vector.load %arg9[%c0_14, %c0_15] : memref<32x288xbf16, #tpu.memory_space<vmem>>, vector<32x288xbf16>
    %c0_16 = arith.constant 0 : index
    %c0_17 = arith.constant 0 : index
    %c0_18 = arith.constant 0 : index
    %15 = vector.load %arg4[%c0_16, %c0_17, %c0_18] : memref<1x288x1024xbf16, #tpu.memory_space<vmem>>, vector<1x288x1024xbf16>
    %16 = vector.shape_cast %15 : vector<1x288x1024xbf16> to vector<288x1024xbf16>
    %cst_19 = arith.constant dense<0.000000e+00> : vector<32x1024xf32>
    %17 = tpu.matmul %14, %16, %cst_19 {dimension_numbers = #tpu.dot_dimension_numbers<[1], [0], [0], [1], [0, 0, 1, 1], [], []>} : vector<32x288xbf16>, vector<288x1024xbf16>, vector<32x1024xf32> -> vector<32x1024xf32>
    %c0_20 = arith.constant 0 : index
    %c0_21 = arith.constant 0 : index
    %18 = vector.load %arg10[%c0_20, %c0_21] : memref<32x1xf32, #tpu.memory_space<vmem>>, vector<32x1xf32>
    %19 = vector.broadcast %18 : vector<32x1xf32> to vector<32x1024xf32>
    %20 = arith.addf %17, %19 : vector<32x1024xf32>
    %21 = arith.negf %20 : vector<32x1024xf32>
    %22 = math.exp %21 : vector<32x1024xf32>
    %cst_22 = arith.constant 1.000000e+00 : f32
    %23 = vector.broadcast %cst_22 : f32 to vector<32x1024xf32>
    %24 = arith.addf %23, %22 : vector<32x1024xf32>
    %25 = arith.divf %23, %24 : vector<32x1024xf32>
    %c0_23 = arith.constant 0 : index
    %c0_24 = arith.constant 0 : index
    %c0_25 = arith.constant 0 : index
    %26 = vector.load %arg11[%c0_23, %c0_24, %c0_25] : memref<1x32x1024xf32, #tpu.memory_space<vmem>>, vector<1x32x1024xf32>
    %27 = vector.shape_cast %26 : vector<1x32x1024xf32> to vector<32x1024xf32>
    %c0_26 = arith.constant 0 : index
    %c0_27 = arith.constant 0 : index
    %28 = vector.load %arg12[%c0_26, %c0_27] : memref<32x1xf32, #tpu.memory_space<vmem>>, vector<32x1xf32>
    %29 = vector.broadcast %28 : vector<32x1xf32> to vector<32x1024xf32>
    %30 = arith.mulf %27, %29 : vector<32x1024xf32>
    %c0_28 = arith.constant 0 : index
    %c0_29 = arith.constant 0 : index
    %31 = vector.load %arg13[%c0_28, %c0_29] : memref<32x1xf32, #tpu.memory_space<vmem>>, vector<32x1xf32>
    %32 = vector.broadcast %31 : vector<32x1xf32> to vector<32x1024xf32>
    %33 = arith.addf %30, %32 : vector<32x1024xf32>
    %c0_30 = arith.constant 0 : index
    %c0_31 = arith.constant 0 : index
    %c0_32 = arith.constant 0 : index
    %34 = vector.load %arg14[%c0_30, %c0_31, %c0_32] : memref<1x1x1024xf32, #tpu.memory_space<vmem>>, vector<1x1x1024xf32>
    %35 = vector.shape_cast %34 : vector<1x1x1024xf32> to vector<1x1024xf32>
    %36 = vector.extract_strided_slice %13 {offsets = [0, 0], sizes = [32, 1024], strides = [1, 1]} : vector<64x1024xf32> to vector<32x1024xf32>
    %37 = vector.extract_strided_slice %6 {offsets = [0, 0], sizes = [32, 1024], strides = [1, 1]} : vector<64x1024xf32> to vector<32x1024xf32>
    %38 = vector.extract_strided_slice %13 {offsets = [0, 0], sizes = [32, 1024], strides = [1, 1]} : vector<64x1024xf32> to vector<32x1024xf32>
    %39 = arith.subf %37, %38 : vector<32x1024xf32>
    %40 = vector.broadcast %35 : vector<1x1024xf32> to vector<32x1024xf32>
    %41 = arith.mulf %40, %39 : vector<32x1024xf32>
    %42 = arith.addf %36, %41 : vector<32x1024xf32>
    %43 = vector.extract_strided_slice %13 {offsets = [32, 0], sizes = [32, 1024], strides = [1, 1]} : vector<64x1024xf32> to vector<32x1024xf32>
    %44 = vector.extract_strided_slice %6 {offsets = [32, 0], sizes = [32, 1024], strides = [1, 1]} : vector<64x1024xf32> to vector<32x1024xf32>
    %45 = vector.extract_strided_slice %13 {offsets = [32, 0], sizes = [32, 1024], strides = [1, 1]} : vector<64x1024xf32> to vector<32x1024xf32>
    %46 = arith.subf %44, %45 : vector<32x1024xf32>
    %47 = vector.broadcast %35 : vector<1x1024xf32> to vector<32x1024xf32>
    %48 = arith.mulf %47, %46 : vector<32x1024xf32>
    %49 = arith.addf %43, %48 : vector<32x1024xf32>
    %c0_33 = arith.constant 0 : index
    %c0_34 = arith.constant 0 : index
    %c0_35 = arith.constant 0 : index
    %50 = vector.load %arg15[%c0_33, %c0_34, %c0_35] : memref<1x64x1xf32, #tpu.memory_space<vmem>>, vector<1x64x1xf32>
    %51 = vector.shape_cast %50 : vector<1x64x1xf32> to vector<64x1xf32>
    %52 = vector.extract_strided_slice %51 {offsets = [0, 0], sizes = [32, 1], strides = [1, 1]} : vector<64x1xf32> to vector<32x1xf32>
    %53 = vector.broadcast %52 : vector<32x1xf32> to vector<32x1024xf32>
    %54 = arith.mulf %53, %33 : vector<32x1024xf32>
    %55 = vector.extract_strided_slice %51 {offsets = [32, 0], sizes = [32, 1], strides = [1, 1]} : vector<64x1xf32> to vector<32x1xf32>
    %56 = vector.broadcast %55 : vector<32x1xf32> to vector<32x1024xf32>
    %57 = arith.addf %54, %56 : vector<32x1024xf32>
    %58 = arith.mulf %42, %33 : vector<32x1024xf32>
    %59 = arith.addf %58, %49 : vector<32x1024xf32>
    %60 = arith.subf %57, %59 : vector<32x1024xf32>
    %61 = arith.mulf %25, %60 : vector<32x1024xf32>
    %62 = arith.addf %59, %61 : vector<32x1024xf32>
    %c0_36 = arith.constant 0 : index
    %c0_37 = arith.constant 0 : index
    %c0_38 = arith.constant 0 : index
    %63 = vector.load %arg16[%c0_36, %c0_37, %c0_38] : memref<1x32x1024xf32, #tpu.memory_space<vmem>>, vector<1x32x1024xf32>
    %64 = vector.shape_cast %63 : vector<1x32x1024xf32> to vector<32x1024xf32>
    %65 = vector.shape_cast %62 : vector<32x1024xf32> to vector<1x32x1024xf32>
    tpu.vector_store %arg16[%c0_36, %c0_37, %c0_38], %65 {strides = array<i32>} : memref<1x32x1024xf32, #tpu.memory_space<vmem>>, vector<1x32x1024xf32>,
    return
  }
  func.func @transform_0(%arg0: i32, %arg1: i32) -> (i32, i32, i32) {
    %c0_i32 = arith.constant 0 : i32
    %c0_i32_0 = arith.constant 0 : i32
    return %arg0, %c0_i32, %arg1 : i32, i32, i32
  }
  func.func @transform_1(%arg0: i32, %arg1: i32) -> (i32, i32, i32) {
    %c0_i32 = arith.constant 0 : i32
    %c0_i32_0 = arith.constant 0 : i32
    return %arg0, %c0_i32, %arg1 : i32, i32, i32
  }
  func.func @transform_2(%arg0: i32, %arg1: i32) -> (i32, i32, i32) {
    %c0_i32 = arith.constant 0 : i32
    %c0_i32_0 = arith.constant 0 : i32
    return %arg0, %c0_i32, %arg1 : i32, i32, i32
  }
  func.func @transform_3(%arg0: i32, %arg1: i32) -> (i32, i32) {
    %c0_i32 = arith.constant 0 : i32
    %c0_i32_0 = arith.constant 0 : i32
    %c0_i32_1 = arith.constant 0 : i32
    return %c0_i32, %c0_i32_0 : i32, i32
  }
  func.func @transform_4(%arg0: i32, %arg1: i32) -> (i32, i32) {
    %c0_i32 = arith.constant 0 : i32
    %c0_i32_0 = arith.constant 0 : i32
    %c0_i32_1 = arith.constant 0 : i32
    return %c0_i32, %c0_i32_0 : i32, i32
  }
  func.func @transform_5(%arg0: i32, %arg1: i32) -> (i32, i32) {
    %c0_i32 = arith.constant 0 : i32
    %c0_i32_0 = arith.constant 0 : i32
    %c0_i32_1 = arith.constant 0 : i32
    return %c0_i32, %c0_i32_0 : i32, i32
  }
  func.func @transform_6(%arg0: i32, %arg1: i32) -> (i32, i32) {
    %c0_i32 = arith.constant 0 : i32
    %c0_i32_0 = arith.constant 0 : i32
    %c0_i32_1 = arith.constant 0 : i32
    return %c0_i32, %c0_i32_0 : i32, i32
  }
  func.func @transform_7(%arg0: i32, %arg1: i32) -> (i32, i32) {
    %c0_i32 = arith.constant 0 : i32
    %c0_i32_0 = arith.constant 0 : i32
    %c0_i32_1 = arith.constant 0 : i32
    return %c0_i32, %c0_i32_0 : i32, i32
  }
  func.func @transform_8(%arg0: i32, %arg1: i32) -> (i32, i32) {
    %c0_i32 = arith.constant 0 : i32
    %c0_i32_0 = arith.constant 0 : i32
    %c0_i32_1 = arith.constant 0 : i32
    return %c0_i32, %c0_i32_0 : i32, i32
  }
  func.func @transform_9(%arg0: i32, %arg1: i32) -> (i32, i32, i32) {
    %c0_i32 = arith.constant 0 : i32
    %c0_i32_0 = arith.constant 0 : i32
    return %arg0, %c0_i32, %arg1 : i32, i32, i32
  }
  func.func @transform_10(%arg0: i32, %arg1: i32) -> (i32, i32) {
    %c0_i32 = arith.constant 0 : i32
    %c0_i32_0 = arith.constant 0 : i32
    %c0_i32_1 = arith.constant 0 : i32
    return %c0_i32, %c0_i32_0 : i32, i32
  }
  func.func @transform_11(%arg0: i32, %arg1: i32) -> (i32, i32) {
    %c0_i32 = arith.constant 0 : i32
    %c0_i32_0 = arith.constant 0 : i32
    %c0_i32_1 = arith.constant 0 : i32
    return %c0_i32, %c0_i32_0 : i32, i32
  }
  func.func @transform_12(%arg0: i32, %arg1: i32) -> (i32, i32, i32) {
    %c0_i32 = arith.constant 0 : i32
    %c0_i32_0 = arith.constant 0 : i32
    return %arg0, %c0_i32, %arg1 : i32, i32, i32
  }
  func.func @transform_13(%arg0: i32, %arg1: i32) -> (i32, i32, i32) {
    %c0_i32 = arith.constant 0 : i32
    %c0_i32_0 = arith.constant 0 : i32
    %c0_i32_1 = arith.constant 0 : i32
    return %arg0, %c0_i32, %c0_i32_0 : i32, i32, i32
  }
  func.func @transform_14(%arg0: i32, %arg1: i32) -> (i32, i32, i32) {
    %c0_i32 = arith.constant 0 : i32
    %c0_i32_0 = arith.constant 0 : i32
    return %arg0, %c0_i32, %arg1 : i32, i32, i32
  }
}

</mosaic_0001>

<llo_original>
// kernel: biadd_forward.1
$region0: #{biadd_forward.1}
  #allocation0 [shape = 'u32[]', space=smem, size = 0x4, offset = 0x4, fixed_abs, tag = 'smem constant byte address 0x4 - core index']
  #allocation1 [shape = 'u32[144,128]{1,0:T(1,128)}', space=vmem, size = 0x12000, scoped, tag = 'internal scratch']
  %s0 = inlined_call_operand.vmem [shape: bf16[2,144,1024], index: 0, kind: input, shape index: {}]
  %s1 = inlined_call_operand.vmem [shape: bf16[2,144,1024], index: 1, kind: input, shape index: {}]
  %s2 = inlined_call_operand.vmem [shape: bf16[2,288,1024], index: 2, kind: input, shape index: {}]
  %s3 = inlined_call_operand.vmem [shape: bf16[64,144], index: 3, kind: input, shape index: {}]
  %s4 = inlined_call_operand.vmem [shape: f32[64,1], index: 4, kind: input, shape index: {}]
  %s5 = inlined_call_operand.vmem [shape: bf16[64,144], index: 5, kind: input, shape index: {}]
  %s6 = inlined_call_operand.vmem [shape: f32[64,1], index: 6, kind: input, shape index: {}]
  %s7 = inlined_call_operand.vmem [shape: bf16[32,288], index: 7, kind: input, shape index: {}]
  %s8 = inlined_call_operand.vmem [shape: f32[32,1], index: 8, kind: input, shape index: {}]
  %s9 = inlined_call_operand.vmem [shape: f32[2,32,1024], index: 9, kind: input, shape index: {}]
  %s10 = inlined_call_operand.vmem [shape: f32[32,1], index: 10, kind: input, shape index: {}]
  %s11 = inlined_call_operand.vmem [shape: f32[32,1], index: 11, kind: input, shape index: {}]
  %s12 = inlined_call_operand.vmem [shape: f32[2,1,1024], index: 12, kind: input, shape index: {}]
  %s13 = inlined_call_operand.vmem [shape: f32[2,64,1], index: 13, kind: input, shape index: {}]
  %s14 = inlined_call_operand.vmem [shape: f32[2,32,1024], index: 14, kind: output, shape index: {}]
  %s15 = sld [smem:[#allocation0]]
  $region89: #{biadd_forward.1} parent=0
    _
  %s17 = ssub.s32 1, %s15
  %s18 = scalar_select 0, %s17, %s15
  loop: start=0, step=1, limit=4
  $region2: #{biadd_forward.1} parent=0 // loop_pre_header
    _
  $region3: #{biadd_forward.1} parent=0 // loop_header
    %s20 = sphi 0, %s24
    %p21 = scmp.ge.s32.totalorder %s20, 4
    %s27 = sphi 0, %s39
    %s28 = sphi 0, %s35
    %s29 = sphi 0, %s27
    %s30 = sphi 0, %s28
    %s31 = sphi 0, %s29
    %s32 = sphi 0, %s30
    %s44 = sphi 0, %s46
    %s47 = sphi 0, %s44
    %s48 = sphi 0, %s47
    %s64 = sphi 0, %s48
    %s72 = sphi 0, %s74
    %s75 = sphi 0, %s72
    %s76 = sphi 0, %s75
    %s92 = sphi 0, %s76
    %s100 = sphi 0, %s102
    %s103 = sphi 0, %s100
    %s104 = sphi 0, %s103
    %s120 = sphi 0, %s104
    %s124 = sphi 0, %s124
    %s126 = sphi 0, %s124
    %s127 = sphi 0, %s126
    %s141 = sphi 0, %s127
    %s145 = sphi 0, %s145
    %s147 = sphi 0, %s145
    %s148 = sphi 0, %s147
    %s162 = sphi 0, %s148
    %s166 = sphi 0, %s166
    %s168 = sphi 0, %s166
    %s169 = sphi 0, %s168
    %s183 = sphi 0, %s169
    %s187 = sphi 0, %s187
    %s189 = sphi 0, %s187
    %s190 = sphi 0, %s189
    %s204 = sphi 0, %s190
    %s208 = sphi 0, %s208
    %s210 = sphi 0, %s208
    %s211 = sphi 0, %s210
    %s225 = sphi 0, %s211
    %s229 = sphi 0, %s229
    %s231 = sphi 0, %s229
    %s232 = sphi 0, %s231
    %s246 = sphi 0, %s232
    %s254 = sphi 0, %s256
    %s257 = sphi 0, %s254
    %s258 = sphi 0, %s257
    %s274 = sphi 0, %s258
    %s278 = sphi 0, %s278
    %s280 = sphi 0, %s278
    %s281 = sphi 0, %s280
    %s295 = sphi 0, %s281
    %s299 = sphi 0, %s299
    %s301 = sphi 0, %s299
    %s302 = sphi 0, %s301
    %s316 = sphi 0, %s302
    %s324 = sphi 0, %s326
    %s327 = sphi 0, %s324
    %s328 = sphi 0, %s327
    %s344 = sphi 0, %s328
    %s350 = sphi 0, %s352
    %s353 = sphi 0, %s350
    %s354 = sphi 0, %s353
    %s370 = sphi 0, %s354
    %s378 = sphi 0, %s380
    %s381 = sphi 0, %s378
    %s382 = sphi 0, %s381
    %s398 = sphi 0, %s382
  $region4: #{biadd_forward.1} parent=0 // loop_header_branch
    %23 = sbr.rel (%p21) target = $region8
  $region5: #{biadd_forward.1} parent=0 // loop_body
    %s25 = ssub.s32 %s20, 1
    %s26 = ssub.s32 %s20, 2
    %s33 = sadd.s32 1, %s28
    %p34 = scmp.ge.s32.totalorder %s33, 1
    %s35 = scalar_select %p34, 0, %s33
    %s36 = sadd.s32 1, %s27
    %s37 = scalar_select %p34, %s36, %s27
    %p38 = scmp.ge.s32.totalorder %s37, 2
    %s39 = scalar_select %p38, 0, %s37
    %s40 = ssub.s32 %s27, %s39
    %s41 = ssub.s32 %s28, %s35
    %s42 = sor.u32 %s40, %s41
    %p43 = scmp.eq.s32.totalorder %s42, 0
    %s45 = sadd.s32 %s44, 1
    %s46 = scalar_select %p43, %s44, %s45
    %p49 = pneg %p43
    %p50 = scmp.eq.s32.totalorder %s20, 1
    %p51 = por %p49, %p50
    %p52 = scmp.ne.s32.totalorder %s44, %s47
    %p53 = scmp.eq.s32.totalorder %s20, 0
    %p54 = por %p52, %p53
    %p55 = scmp.ne.s32.totalorder %s44, %s47
    %p56 = scmp.eq.s32.totalorder %s25, 1
    %p57 = por %p55, %p56
    %p58 = scmp.ne.s32.totalorder %s47, %s48
    %p59 = scmp.eq.s32.totalorder %s25, 0
    %p60 = por %p58, %p59
    %p61 = scmp.ne.s32.totalorder %s47, %s48
    %p62 = scmp.eq.s32.totalorder %s26, 1
    %p63 = por %p61, %p62
    %p65 = scmp.ne.s32.totalorder %s48, %s64
    %p66 = scmp.eq.s32.totalorder %s26, 0
    %p67 = por %p65, %p66
    %s68 = ssub.s32 %s27, %s39
    %s69 = ssub.s32 %s28, %s35
    %s70 = sor.u32 %s68, %s69
    %p71 = scmp.eq.s32.totalorder %s70, 0
    %s73 = sadd.s32 %s72, 1
    %s74 = scalar_select %p71, %s72, %s73
    %p77 = pneg %p71
    %p78 = scmp.eq.s32.totalorder %s20, 1
    %p79 = por %p77, %p78
    %p80 = scmp.ne.s32.totalorder %s72, %s75
    %p81 = scmp.eq.s32.totalorder %s20, 0
    %p82 = por %p80, %p81
    %p83 = scmp.ne.s32.totalorder %s72, %s75
    %p84 = scmp.eq.s32.totalorder %s25, 1
    %p85 = por %p83, %p84
    %p86 = scmp.ne.s32.totalorder %s75, %s76
    %p87 = scmp.eq.s32.totalorder %s25, 0
    %p88 = por %p86, %p87
    %p89 = scmp.ne.s32.totalorder %s75, %s76
    %p90 = scmp.eq.s32.totalorder %s26, 1
    %p91 = por %p89, %p90
    %p93 = scmp.ne.s32.totalorder %s76, %s92
    %p94 = scmp.eq.s32.totalorder %s26, 0
    %p95 = por %p93, %p94
    %s96 = ssub.s32 %s27, %s39
    %s97 = ssub.s32 %s28, %s35
    %s98 = sor.u32 %s96, %s97
    %p99 = scmp.eq.s32.totalorder %s98, 0
    %s101 = sadd.s32 %s100, 1
    %s102 = scalar_select %p99, %s100, %s101
    %p105 = pneg %p99
    %p106 = scmp.eq.s32.totalorder %s20, 1
    %p107 = por %p105, %p106
    %p108 = scmp.ne.s32.totalorder %s100, %s103
    %p109 = scmp.eq.s32.totalorder %s20, 0
    %p110 = por %p108, %p109
    %p111 = scmp.ne.s32.totalorder %s100, %s103
    %p112 = scmp.eq.s32.totalorder %s25, 1
    %p113 = por %p111, %p112
    %p114 = scmp.ne.s32.totalorder %s103, %s104
    %p115 = scmp.eq.s32.totalorder %s25, 0
    %p116 = por %p114, %p115
    %p117 = scmp.ne.s32.totalorder %s103, %s104
    %p118 = scmp.eq.s32.totalorder %s26, 1
    %p119 = por %p117, %p118
    %p121 = scmp.ne.s32.totalorder %s104, %s120
    %p122 = scmp.eq.s32.totalorder %s26, 0
    %p123 = por %p121, %p122
    %s125 = sadd.s32 %s124, 1
    %p128 = scmp.eq.s32.totalorder %s20, 1
    %p129 = scmp.ne.s32.totalorder %s124, %s126
    %p130 = scmp.eq.s32.totalorder %s20, 0
    %p131 = por %p129, %p130
    %p132 = scmp.ne.s32.totalorder %s124, %s126
    %p133 = scmp.eq.s32.totalorder %s25, 1
    %p134 = por %p132, %p133
    %p135 = scmp.ne.s32.totalorder %s126, %s127
    %p136 = scmp.eq.s32.totalorder %s25, 0
    %p137 = por %p135, %p136
    %p138 = scmp.ne.s32.totalorder %s126, %s127
    %p139 = scmp.eq.s32.totalorder %s26, 1
    %p140 = por %p138, %p139
    %p142 = scmp.ne.s32.totalorder %s127, %s141
    %p143 = scmp.eq.s32.totalorder %s26, 0
    %p144 = por %p142, %p143
    %s146 = sadd.s32 %s145, 1
    %p149 = scmp.eq.s32.totalorder %s20, 1
    %p150 = scmp.ne.s32.totalorder %s145, %s147
    %p151 = scmp.eq.s32.totalorder %s20, 0
    %p152 = por %p150, %p151
    %p153 = scmp.ne.s32.totalorder %s145, %s147
    %p154 = scmp.eq.s32.totalorder %s25, 1
    %p155 = por %p153, %p154
    %p156 = scmp.ne.s32.totalorder %s147, %s148
    %p157 = scmp.eq.s32.totalorder %s25, 0
    %p158 = por %p156, %p157
    %p159 = scmp.ne.s32.totalorder %s147, %s148
    %p160 = scmp.eq.s32.totalorder %s26, 1
    %p161 = por %p159, %p160
    %p163 = scmp.ne.s32.totalorder %s148, %s162
    %p164 = scmp.eq.s32.totalorder %s26, 0
    %p165 = por %p163, %p164
    %s167 = sadd.s32 %s166, 1
    %p170 = scmp.eq.s32.totalorder %s20, 1
    %p171 = scmp.ne.s32.totalorder %s166, %s168
    %p172 = scmp.eq.s32.totalorder %s20, 0
    %p173 = por %p171, %p172
    %p174 = scmp.ne.s32.totalorder %s166, %s168
    %p175 = scmp.eq.s32.totalorder %s25, 1
    %p176 = por %p174, %p175
    %p177 = scmp.ne.s32.totalorder %s168, %s169
    %p178 = scmp.eq.s32.totalorder %s25, 0
    %p179 = por %p177, %p178
    %p180 = scmp.ne.s32.totalorder %s168, %s169
    %p181 = scmp.eq.s32.totalorder %s26, 1
    %p182 = por %p180, %p181
    %p184 = scmp.ne.s32.totalorder %s169, %s183
    %p185 = scmp.eq.s32.totalorder %s26, 0
    %p186 = por %p184, %p185
    %s188 = sadd.s32 %s187, 1
    %p191 = scmp.eq.s32.totalorder %s20, 1
    %p192 = scmp.ne.s32.totalorder %s187, %s189
    %p193 = scmp.eq.s32.totalorder %s20, 0
    %p194 = por %p192, %p193
    %p195 = scmp.ne.s32.totalorder %s187, %s189
    %p196 = scmp.eq.s32.totalorder %s25, 1
    %p197 = por %p195, %p196
    %p198 = scmp.ne.s32.totalorder %s189, %s190
    %p199 = scmp.eq.s32.totalorder %s25, 0
    %p200 = por %p198, %p199
    %p201 = scmp.ne.s32.totalorder %s189, %s190
    %p202 = scmp.eq.s32.totalorder %s26, 1
    %p203 = por %p201, %p202
    %p205 = scmp.ne.s32.totalorder %s190, %s204
    %p206 = scmp.eq.s32.totalorder %s26, 0
    %p207 = por %p205, %p206
    %s209 = sadd.s32 %s208, 1
    %p212 = scmp.eq.s32.totalorder %s20, 1
    %p213 = scmp.ne.s32.totalorder %s208, %s210
    %p214 = scmp.eq.s32.totalorder %s20, 0
    %p215 = por %p213, %p214
    %p216 = scmp.ne.s32.totalorder %s208, %s210
    %p217 = scmp.eq.s32.totalorder %s25, 1
    %p218 = por %p216, %p217
    %p219 = scmp.ne.s32.totalorder %s210, %s211
    %p220 = scmp.eq.s32.totalorder %s25, 0
    %p221 = por %p219, %p220
    %p222 = scmp.ne.s32.totalorder %s210, %s211
    %p223 = scmp.eq.s32.totalorder %s26, 1
    %p224 = por %p222, %p223
    %p226 = scmp.ne.s32.totalorder %s211, %s225
    %p227 = scmp.eq.s32.totalorder %s26, 0
    %p228 = por %p226, %p227
    %s230 = sadd.s32 %s229, 1
    %p233 = scmp.eq.s32.totalorder %s20, 1
    %p234 = scmp.ne.s32.totalorder %s229, %s231
    %p235 = scmp.eq.s32.totalorder %s20, 0
    %p236 = por %p234, %p235
    %p237 = scmp.ne.s32.totalorder %s229, %s231
    %p238 = scmp.eq.s32.totalorder %s25, 1
    %p239 = por %p237, %p238
    %p240 = scmp.ne.s32.totalorder %s231, %s232
    %p241 = scmp.eq.s32.totalorder %s25, 0
    %p242 = por %p240, %p241
    %p243 = scmp.ne.s32.totalorder %s231, %s232
    %p244 = scmp.eq.s32.totalorder %s26, 1
    %p245 = por %p243, %p244
    %p247 = scmp.ne.s32.totalorder %s232, %s246
    %p248 = scmp.eq.s32.totalorder %s26, 0
    %p249 = por %p247, %p248
    %s250 = ssub.s32 %s27, %s39
    %s251 = ssub.s32 %s28, %s35
    %s252 = sor.u32 %s250, %s251
    %p253 = scmp.eq.s32.totalorder %s252, 0
    %s255 = sadd.s32 %s254, 1
    %s256 = scalar_select %p253, %s254, %s255
    %p259 = pneg %p253
    %p260 = scmp.eq.s32.totalorder %s20, 1
    %p261 = por %p259, %p260
    %p262 = scmp.ne.s32.totalorder %s254, %s257
    %p263 = scmp.eq.s32.totalorder %s20, 0
    %p264 = por %p262, %p263
    %p265 = scmp.ne.s32.totalorder %s254, %s257
    %p266 = scmp.eq.s32.totalorder %s25, 1
    %p267 = por %p265, %p266
    %p268 = scmp.ne.s32.totalorder %s257, %s258
    %p269 = scmp.eq.s32.totalorder %s25, 0
    %p270 = por %p268, %p269
    %p271 = scmp.ne.s32.totalorder %s257, %s258
    %p272 = scmp.eq.s32.totalorder %s26, 1
    %p273 = por %p271, %p272
    %p275 = scmp.ne.s32.totalorder %s258, %s274
    %p276 = scmp.eq.s32.totalorder %s26, 0
    %p277 = por %p275, %p276
    %s279 = sadd.s32 %s278, 1
    %p282 = scmp.eq.s32.totalorder %s20, 1
    %p283 = scmp.ne.s32.totalorder %s278, %s280
    %p284 = scmp.eq.s32.totalorder %s20, 0
    %p285 = por %p283, %p284
    %p286 = scmp.ne.s32.totalorder %s278, %s280
    %p287 = scmp.eq.s32.totalorder %s25, 1
    %p288 = por %p286, %p287
    %p289 = scmp.ne.s32.totalorder %s280, %s281
    %p290 = scmp.eq.s32.totalorder %s25, 0
    %p291 = por %p289, %p290
    %p292 = scmp.ne.s32.totalorder %s280, %s281
    %p293 = scmp.eq.s32.totalorder %s26, 1
    %p294 = por %p292, %p293
    %p296 = scmp.ne.s32.totalorder %s281, %s295
    %p297 = scmp.eq.s32.totalorder %s26, 0
    %p298 = por %p296, %p297
    %s300 = sadd.s32 %s299, 1
    %p303 = scmp.eq.s32.totalorder %s20, 1
    %p304 = scmp.ne.s32.totalorder %s299, %s301
    %p305 = scmp.eq.s32.totalorder %s20, 0
    %p306 = por %p304, %p305
    %p307 = scmp.ne.s32.totalorder %s299, %s301
    %p308 = scmp.eq.s32.totalorder %s25, 1
    %p309 = por %p307, %p308
    %p310 = scmp.ne.s32.totalorder %s301, %s302
    %p311 = scmp.eq.s32.totalorder %s25, 0
    %p312 = por %p310, %p311
    %p313 = scmp.ne.s32.totalorder %s301, %s302
    %p314 = scmp.eq.s32.totalorder %s26, 1
    %p315 = por %p313, %p314
    %p317 = scmp.ne.s32.totalorder %s302, %s316
    %p318 = scmp.eq.s32.totalorder %s26, 0
    %p319 = por %p317, %p318
    %s320 = ssub.s32 %s27, %s39
    %s321 = ssub.s32 %s28, %s35
    %s322 = sor.u32 %s320, %s321
    %p323 = scmp.eq.s32.totalorder %s322, 0
    %s325 = sadd.s32 %s324, 1
    %s326 = scalar_select %p323, %s324, %s325
    %p329 = pneg %p323
    %p330 = scmp.eq.s32.totalorder %s20, 1
    %p331 = por %p329, %p330
    %p332 = scmp.ne.s32.totalorder %s324, %s327
    %p333 = scmp.eq.s32.totalorder %s20, 0
    %p334 = por %p332, %p333
    %p335 = scmp.ne.s32.totalorder %s324, %s327
    %p336 = scmp.eq.s32.totalorder %s25, 1
    %p337 = por %p335, %p336
    %p338 = scmp.ne.s32.totalorder %s327, %s328
    %p339 = scmp.eq.s32.totalorder %s25, 0
    %p340 = por %p338, %p339
    %p341 = scmp.ne.s32.totalorder %s327, %s328
    %p342 = scmp.eq.s32.totalorder %s26, 1
    %p343 = por %p341, %p342
    %p345 = scmp.ne.s32.totalorder %s328, %s344
    %p346 = scmp.eq.s32.totalorder %s26, 0
    %p347 = por %p345, %p346
    %s348 = ssub.s32 %s27, %s39
    %p349 = scmp.eq.s32.totalorder %s348, 0
    %s351 = sadd.s32 %s350, 1
    %s352 = scalar_select %p349, %s350, %s351
    %p355 = pneg %p349
    %p356 = scmp.eq.s32.totalorder %s20, 1
    %p357 = por %p355, %p356
    %p358 = scmp.ne.s32.totalorder %s350, %s353
    %p359 = scmp.eq.s32.totalorder %s20, 0
    %p360 = por %p358, %p359
    %p361 = scmp.ne.s32.totalorder %s350, %s353
    %p362 = scmp.eq.s32.totalorder %s25, 1
    %p363 = por %p361, %p362
    %p364 = scmp.ne.s32.totalorder %s353, %s354
    %p365 = scmp.eq.s32.totalorder %s25, 0
    %p366 = por %p364, %p365
    %p367 = scmp.ne.s32.totalorder %s353, %s354
    %p368 = scmp.eq.s32.totalorder %s26, 1
    %p369 = por %p367, %p368
    %p371 = scmp.ne.s32.totalorder %s354, %s370
    %p372 = scmp.eq.s32.totalorder %s26, 0
    %p373 = por %p371, %p372
    %s374 = ssub.s32 %s27, %s39
    %s375 = ssub.s32 %s28, %s35
    %s376 = sor.u32 %s374, %s375
    %p377 = scmp.eq.s32.totalorder %s376, 0
    %s379 = sadd.s32 %s378, 1
    %s380 = scalar_select %p377, %s378, %s379
    %p383 = pneg %p377
    %p384 = scmp.eq.s32.totalorder %s20, 1
    %p385 = por %p383, %p384
    %p386 = scmp.ne.s32.totalorder %s378, %s381
    %p387 = scmp.eq.s32.totalorder %s20, 0
    %p388 = por %p386, %p387
    %p389 = scmp.ne.s32.totalorder %s378, %s381
    %p390 = scmp.eq.s32.totalorder %s25, 1
    %p391 = por %p389, %p390
    %p392 = scmp.ne.s32.totalorder %s381, %s382
    %p393 = scmp.eq.s32.totalorder %s25, 0
    %p394 = por %p392, %p393
    %p395 = scmp.ne.s32.totalorder %s381, %s382
    %p396 = scmp.eq.s32.totalorder %s26, 1
    %p397 = por %p395, %p396
    %p399 = scmp.ne.s32.totalorder %s382, %s398
    %p400 = scmp.eq.s32.totalorder %s26, 0
    %p401 = por %p399, %p400
    %p402 = scmp.le.s32.totalorder 1, %s20
    %p403 = scmp.lt.s32.totalorder %s20, 3
    %p404 = pnand %p402, %p403
    %p405 = pneg %p404
    // Predicated region
    $region9: #{biadd_forward.1} parent=5 // pred_check
      _
    $region10: #{biadd_forward.1} parent=5 // pred_check_branch
      %407 = sbr.rel (%p404) target = $region12
    $region11: #{biadd_forward.1} parent=5 // pred_region
      %s408 = ssub.s32 %s20, 1
      // Predicated region
      $region13: #{biadd_forward.1} parent=11 // pred_check
        %p409 = pneg %p137
      $region14: #{biadd_forward.1} parent=11 // pred_check_branch
        %411 = sbr.rel (%p409) target = $region16
      $region15: #{biadd_forward.1} parent=11 // pred_region
        _
      $region16: #{biadd_forward.1} parent=11 // pred_fallthru
        _
      // Predicated region
      $region17: #{biadd_forward.1} parent=11 // pred_check
        %p412 = pneg %p158
      $region18: #{biadd_forward.1} parent=11 // pred_check_branch
        %414 = sbr.rel (%p412) target = $region20
      $region19: #{biadd_forward.1} parent=11 // pred_region
        _
      $region20: #{biadd_forward.1} parent=11 // pred_fallthru
        _
      // Predicated region
      $region21: #{biadd_forward.1} parent=11 // pred_check
        %p415 = pneg %p179
      $region22: #{biadd_forward.1} parent=11 // pred_check_branch
        %417 = sbr.rel (%p415) target = $region24
      $region23: #{biadd_forward.1} parent=11 // pred_region
        _
      $region24: #{biadd_forward.1} parent=11 // pred_fallthru
        _
      // Predicated region
      $region25: #{biadd_forward.1} parent=11 // pred_check
        %p418 = pneg %p200
      $region26: #{biadd_forward.1} parent=11 // pred_check_branch
        %420 = sbr.rel (%p418) target = $region28
      $region27: #{biadd_forward.1} parent=11 // pred_region
        _
      $region28: #{biadd_forward.1} parent=11 // pred_fallthru
        _
      // Predicated region
      $region29: #{biadd_forward.1} parent=11 // pred_check
        %p421 = pneg %p221
      $region30: #{biadd_forward.1} parent=11 // pred_check_branch
        %423 = sbr.rel (%p421) target = $region32
      $region31: #{biadd_forward.1} parent=11 // pred_region
        _
      $region32: #{biadd_forward.1} parent=11 // pred_fallthru
        _
      // Predicated region
      $region33: #{biadd_forward.1} parent=11 // pred_check
        %p424 = pneg %p242
      $region34: #{biadd_forward.1} parent=11 // pred_check_branch
        %426 = sbr.rel (%p424) target = $region36
      $region35: #{biadd_forward.1} parent=11 // pred_region
        _
      $region36: #{biadd_forward.1} parent=11 // pred_fallthru
        _
      // Predicated region
      $region37: #{biadd_forward.1} parent=11 // pred_check
        %p427 = pneg %p291
      $region38: #{biadd_forward.1} parent=11 // pred_check_branch
        %429 = sbr.rel (%p427) target = $region40
      $region39: #{biadd_forward.1} parent=11 // pred_region
        _
      $region40: #{biadd_forward.1} parent=11 // pred_fallthru
        _
      // Predicated region
      $region41: #{biadd_forward.1} parent=11 // pred_check
        %p430 = pneg %p312
      $region42: #{biadd_forward.1} parent=11 // pred_check_branch
        %432 = sbr.rel (%p430) target = $region44
      $region43: #{biadd_forward.1} parent=11 // pred_region
        _
      $region44: #{biadd_forward.1} parent=11 // pred_fallthru
        _
    $region12: #{biadd_forward.1} parent=5 // pred_fallthru
      _
    %p433 = scmp.lt.s32.totalorder %s20, 2
    // Predicated region
    $region45: #{biadd_forward.1} parent=5 // pred_check
      %p434 = pneg %p433
    $region46: #{biadd_forward.1} parent=5 // pred_check_branch
      %436 = sbr.rel (%p434) target = $region48
    $region47: #{biadd_forward.1} parent=5 // pred_region
      // Predicated region
      $region49: #{biadd_forward.1} parent=47 // pred_check
        %p437 = pneg %p54
      $region50: #{biadd_forward.1} parent=47 // pred_check_branch
        %439 = sbr.rel (%p437) target = $region52
      $region51: #{biadd_forward.1} parent=47 // pred_region
        %s440 = smul.u32 8, %s28
        %p441 = scmp.lt.s32.totalorder %s27, 1
        %s442 = scalar_select %p441, %s27, 1
        %p443 = scmp.lt.s32.totalorder %s440, 7
        %s444 = scalar_select %p443, %s440, 7
        %s445 = smul.addr %s442, 144
        %s446 = sadd.s32 %s444, %s445
        %s447 = smul.addr %s446, 4
        %s448 = scalar_lea.vmem %s0, %s447
        %s449 = smul.u32 8, %s28
      $region52: #{biadd_forward.1} parent=47 // pred_fallthru
        _
      // Predicated region
      $region53: #{biadd_forward.1} parent=47 // pred_check
        %p450 = pneg %p82
      $region54: #{biadd_forward.1} parent=47 // pred_check_branch
        %452 = sbr.rel (%p450) target = $region56
      $region55: #{biadd_forward.1} parent=47 // pred_region
        %s453 = smul.u32 8, %s28
        %p454 = scmp.lt.s32.totalorder %s27, 1
        %s455 = scalar_select %p454, %s27, 1
        %p456 = scmp.lt.s32.totalorder %s453, 7
        %s457 = scalar_select %p456, %s453, 7
        %s458 = smul.addr %s455, 144
        %s459 = sadd.s32 %s457, %s458
        %s460 = smul.addr %s459, 4
        %s461 = scalar_lea.vmem %s1, %s460
        %s462 = smul.u32 8, %s28
      $region56: #{biadd_forward.1} parent=47 // pred_fallthru
        _
      // Predicated region
      $region57: #{biadd_forward.1} parent=47 // pred_check
        %p463 = pneg %p110
      $region58: #{biadd_forward.1} parent=47 // pred_check_branch
        %465 = sbr.rel (%p463) target = $region60
      $region59: #{biadd_forward.1} parent=47 // pred_region
        %s466 = smul.u32 8, %s28
        %p467 = scmp.lt.s32.totalorder %s27, 1
        %s468 = scalar_select %p467, %s27, 1
        %p469 = scmp.lt.s32.totalorder %s466, 7
        %s470 = scalar_select %p469, %s466, 7
        %s471 = smul.addr %s468, 288
        %s472 = sadd.s32 %s470, %s471
        %s473 = smul.addr %s472, 4
        %s474 = scalar_lea.vmem %s2, %s473
        %s475 = smul.u32 8, %s28
      $region60: #{biadd_forward.1} parent=47 // pred_fallthru
        _
      // Predicated region
      $region61: #{biadd_forward.1} parent=47 // pred_check
        %p476 = pneg %p264
      $region62: #{biadd_forward.1} parent=47 // pred_check_branch
        %478 = sbr.rel (%p476) target = $region64
      $region63: #{biadd_forward.1} parent=47 // pred_region
        %s479 = smul.u32 8, %s28
        %p480 = scmp.lt.s32.totalorder %s27, 1
        %s481 = scalar_select %p480, %s27, 1
        %p482 = scmp.lt.s32.totalorder %s479, 7
        %s483 = scalar_select %p482, %s479, 7
        %s484 = smul.addr %s481, 32
        %s485 = sadd.s32 %s483, %s484
        %s486 = smul.addr %s485, 8
        %s487 = scalar_lea.vmem %s9, %s486
        %s488 = smul.u32 8, %s28
      $region64: #{biadd_forward.1} parent=47 // pred_fallthru
        _
      // Predicated region
      $region65: #{biadd_forward.1} parent=47 // pred_check
        %p489 = pneg %p334
      $region66: #{biadd_forward.1} parent=47 // pred_check_branch
        %491 = sbr.rel (%p489) target = $region68
      $region67: #{biadd_forward.1} parent=47 // pred_region
        %s492 = smul.u32 8, %s28
        %p493 = scmp.lt.s32.totalorder %s27, 1
        %s494 = scalar_select %p493, %s27, 1
        %p495 = scmp.lt.s32.totalorder %s492, 7
        %s496 = scalar_select %p495, %s492, 7
        %s497 = smul.addr %s494, 8
        %s498 = sadd.s32 %s496, %s497
        %s499 = scalar_lea.vmem %s12, %s498
        %s500 = smul.u32 8, %s28
      $region68: #{biadd_forward.1} parent=47 // pred_fallthru
        _
      // Predicated region
      $region69: #{biadd_forward.1} parent=47 // pred_check
        %p501 = pneg %p360
      $region70: #{biadd_forward.1} parent=47 // pred_check_branch
        %503 = sbr.rel (%p501) target = $region72
      $region71: #{biadd_forward.1} parent=47 // pred_region
        %p504 = scmp.lt.s32.totalorder %s27, 1
        %s505 = scalar_select %p504, %s27, 1
        %s506 = smul.addr %s505, 8
        %s507 = smul.addr %s506, 8
        %s508 = scalar_lea.vmem %s13, %s507
      $region72: #{biadd_forward.1} parent=47 // pred_fallthru
        _
    $region48: #{biadd_forward.1} parent=5 // pred_fallthru
      _
    %p509 = scmp.le.s32.totalorder 1, %s20
    %p510 = scmp.lt.s32.totalorder %s20, 3
    %p511 = pnand %p509, %p510
    %p512 = pneg %p511
    // Predicated region
    $region73: #{biadd_forward.1} parent=5 // pred_check
      _
    $region74: #{biadd_forward.1} parent=5 // pred_check_branch
      %514 = sbr.rel (%p511) target = $region76
    $region75: #{biadd_forward.1} parent=5 // pred_region
      %s515 = ssub.s32 %s20, 1
      %s516 = smul.u32 8, %s30
      %p517 = scmp.lt.s32.totalorder %s29, 1
      %s518 = scalar_select %p517, %s29, 1
      %p519 = scmp.lt.s32.totalorder %s516, 7
      %s520 = scalar_select %p519, %s516, 7
      %s521 = smul.addr %s518, 144
      %s522 = sadd.s32 %s520, %s521
      %s523 = smul.addr %s522, 4
      %s524 = scalar_lea.vmem %s0, %s523
      %p525 = pneg %p60
      %p526 = pneg %p57
      %s527 = smul.u32 8, %s30
      %p528 = scmp.lt.s32.totalorder %s29, 1
      %s529 = scalar_select %p528, %s29, 1
      %p530 = scmp.lt.s32.totalorder %s527, 7
      %s531 = scalar_select %p530, %s527, 7
      %s532 = smul.addr %s529, 144
      %s533 = sadd.s32 %s531, %s532
      %s534 = smul.addr %s533, 4
      %s535 = scalar_lea.vmem %s1, %s534
      %p536 = pneg %p88
      %p537 = pneg %p85
      %s538 = smul.u32 8, %s30
      %p539 = scmp.lt.s32.totalorder %s29, 1
      %s540 = scalar_select %p539, %s29, 1
      %p541 = scmp.lt.s32.totalorder %s538, 7
      %s542 = scalar_select %p541, %s538, 7
      %s543 = smul.addr %s540, 288
      %s544 = sadd.s32 %s542, %s543
      %s545 = smul.addr %s544, 4
      %s546 = scalar_lea.vmem %s2, %s545
      %p547 = pneg %p116
      %p548 = pneg %p113
      %p549 = pneg %p137
      %p550 = pneg %p134
      %p551 = pneg %p158
      %p552 = pneg %p155
      %p553 = pneg %p179
      %p554 = pneg %p176
      %p555 = pneg %p200
      %p556 = pneg %p197
      %p557 = pneg %p221
      %p558 = pneg %p218
      %p559 = pneg %p242
      %p560 = pneg %p239
      %s561 = smul.u32 8, %s30
      %p562 = scmp.lt.s32.totalorder %s29, 1
      %s563 = scalar_select %p562, %s29, 1
      %p564 = scmp.lt.s32.totalorder %s561, 7
      %s565 = scalar_select %p564, %s561, 7
      %s566 = smul.addr %s563, 32
      %s567 = sadd.s32 %s565, %s566
      %s568 = smul.addr %s567, 8
      %s569 = scalar_lea.vmem %s9, %s568
      %p570 = pneg %p270
      %p571 = pneg %p267
      %p572 = pneg %p291
      %p573 = pneg %p288
      %p574 = pneg %p312
      %p575 = pneg %p309
      %s576 = smul.u32 8, %s30
      %p577 = scmp.lt.s32.totalorder %s29, 1
      %s578 = scalar_select %p577, %s29, 1
      %p579 = scmp.lt.s32.totalorder %s576, 7
      %s580 = scalar_select %p579, %s576, 7
      %s581 = smul.addr %s578, 8
      %s582 = sadd.s32 %s580, %s581
      %s583 = scalar_lea.vmem %s12, %s582
      %p584 = pneg %p340
      %p585 = pneg %p337
      %p586 = scmp.lt.s32.totalorder %s29, 1
      %s587 = scalar_select %p586, %s29, 1
      %s588 = smul.addr %s587, 8
      %s589 = smul.addr %s588, 8
      %s590 = scalar_lea.vmem %s13, %s589
      %p591 = pneg %p366
      %p592 = pneg %p363
      %p593 = pneg %p394
      %p594 = pneg %p391
      %s595 = smul.u32 8, %s30
      %p596 = scmp.lt.s32.totalorder %s29, 1
      %s597 = scalar_select %p596, %s29, 1
      %p598 = scmp.lt.s32.totalorder %s595, 7
      %s599 = scalar_select %p598, %s595, 7
      %s600 = smul.addr %s597, 32
      %s601 = sadd.s32 %s599, %s600
      %s602 = smul.addr %s601, 8
      %s603 = scalar_lea.vmem %s14, %s602
      %s604 = smul.u32 8, %s30
      %p605 = scmp.lt.s32.totalorder %s29, 1
      %s606 = scalar_select %p605, %s29, 1
      %p607 = scmp.lt.s32.totalorder %s604, 7
      %s608 = scalar_select %p607, %s604, 7
      %s609 = smul.addr %s606, 144
      %s610 = sadd.s32 %s608, %s609
      %s611 = smul.addr %s610, 4
      %s612 = scalar_lea.vmem %s0, %s611
      %s613 = smul.u32 8, %s30
      %s614 = smul.u32 8, %s30
      %p615 = scmp.lt.s32.totalorder %s29, 1
      %s616 = scalar_select %p615, %s29, 1
      %p617 = scmp.lt.s32.totalorder %s614, 7
      %s618 = scalar_select %p617, %s614, 7
      %s619 = smul.addr %s616, 144
      %s620 = sadd.s32 %s618, %s619
      %s621 = smul.addr %s620, 4
      %s622 = scalar_lea.vmem %s1, %s621
      %s623 = smul.u32 8, %s30
      %s624 = smul.u32 8, %s30
      %p625 = scmp.lt.s32.totalorder %s29, 1
      %s626 = scalar_select %p625, %s29, 1
      %p627 = scmp.lt.s32.totalorder %s624, 7
      %s628 = scalar_select %p627, %s624, 7
      %s629 = smul.addr %s626, 288
      %s630 = sadd.s32 %s628, %s629
      %s631 = smul.addr %s630, 4
      %s632 = scalar_lea.vmem %s2, %s631
      %s633 = smul.u32 8, %s30
      %s634 = smul.u32 8, %s30
      %p635 = scmp.lt.s32.totalorder %s29, 1
      %s636 = scalar_select %p635, %s29, 1
      %p637 = scmp.lt.s32.totalorder %s634, 7
      %s638 = scalar_select %p637, %s634, 7
      %s639 = smul.addr %s636, 32
      %s640 = sadd.s32 %s638, %s639
      %s641 = smul.addr %s640, 8
      %s642 = scalar_lea.vmem %s9, %s641
      %s643 = smul.u32 8, %s30
      %s644 = smul.u32 8, %s30
      %p645 = scmp.lt.s32.totalorder %s29, 1
      %s646 = scalar_select %p645, %s29, 1
      %p647 = scmp.lt.s32.totalorder %s644, 7
      %s648 = scalar_select %p647, %s644, 7
      %s649 = smul.addr %s646, 8
      %s650 = sadd.s32 %s648, %s649
      %s651 = scalar_lea.vmem %s12, %s650
      %s652 = smul.u32 8, %s30
      %p653 = scmp.lt.s32.totalorder %s29, 1
      %s654 = scalar_select %p653, %s29, 1
      %s655 = smul.addr %s654, 8
      %s656 = smul.addr %s655, 8
      %s657 = scalar_lea.vmem %s13, %s656
      %s658 = smul.u32 8, %s30
      %p659 = scmp.lt.s32.totalorder %s29, 1
      %s660 = scalar_select %p659, %s29, 1
      %p661 = scmp.lt.s32.totalorder %s658, 7
      %s662 = scalar_select %p661, %s658, 7
      %s663 = smul.addr %s660, 32
      %s664 = sadd.s32 %s662, %s663
      %s665 = smul.addr %s664, 8
      %s666 = scalar_lea.vmem %s14, %s665
      %s667 = smul.u32 8, %s30
      %v669 = vld [vmem:[%s3] sm:$0xff]
      %v670 = vld [vmem:[%s3 + $0x8] sm:$0xff]
      %v671 = vld [vmem:[%s3 + $0x10] sm:$0xff]
      %v672 = vld [vmem:[%s3 + $0x18] sm:$0xff]
      %v673 = vld [vmem:[%s3 + $0x20] sm:$0xff]
      %v674 = vld [vmem:[%s3 + $0x28] sm:$0xff]
      %v675 = vld [vmem:[%s3 + $0x30] sm:$0xff]
      %v676 = vld [vmem:[%s3 + $0x38] sm:$0xff]
      %v677 = vld [vmem:[%s612] sm:$0xff]
      %v678 = vld [vmem:[%s612 + $0x8] sm:$0xff]
      %v679 = vld [vmem:[%s612 + $0x10] sm:$0xff]
      %v680 = vld [vmem:[%s612 + $0x18] sm:$0xff]
      %v681 = vld [vmem:[%s612 + $0x20] sm:$0xff]
      %v682 = vld [vmem:[%s612 + $0x28] sm:$0xff]
      %v683 = vld [vmem:[%s612 + $0x30] sm:$0xff]
      %v684 = vld [vmem:[%s612 + $0x38] sm:$0xff]
      %v685 = vld [vmem:[%s612 + $0x40] sm:$0xff]
      %v686 = vld [vmem:[%s612 + $0x48] sm:$0xff]
      %v687 = vld [vmem:[%s612 + $0x50] sm:$0xff]
      %v688 = vld [vmem:[%s612 + $0x58] sm:$0xff]
      %v689 = vld [vmem:[%s612 + $0x60] sm:$0xff]
      %v690 = vld [vmem:[%s612 + $0x68] sm:$0xff]
      %v691 = vld [vmem:[%s612 + $0x70] sm:$0xff]
      %v692 = vld [vmem:[%s612 + $0x78] sm:$0xff]
      %v693 = vld [vmem:[%s612 + $0x80] sm:$0xff]
      %v694 = vld [vmem:[%s612 + $0x88] sm:$0xff]
      %v695 = vld [vmem:[%s612 + $0x90] sm:$0xff]
      %v696 = vld [vmem:[%s612 + $0x98] sm:$0xff]
      %v697 = vld [vmem:[%s612 + $0xa0] sm:$0xff]
      %v698 = vld [vmem:[%s612 + $0xa8] sm:$0xff]
      %v699 = vld [vmem:[%s612 + $0xb0] sm:$0xff]
      %v700 = vld [vmem:[%s612 + $0xb8] sm:$0xff]
      %v701 = vld [vmem:[%s612 + $0xc0] sm:$0xff]
      %v702 = vld [vmem:[%s612 + $0xc8] sm:$0xff]
      %v703 = vld [vmem:[%s612 + $0xd0] sm:$0xff]
      %v704 = vld [vmem:[%s612 + $0xd8] sm:$0xff]
      %v705 = vld [vmem:[%s612 + $0xe0] sm:$0xff]
      %v706 = vld [vmem:[%s612 + $0xe8] sm:$0xff]
      %v707 = vld [vmem:[%s612 + $0xf0] sm:$0xff]
      %v708 = vld [vmem:[%s612 + $0xf8] sm:$0xff]
      %v709 = vld [vmem:[%s612 + $0x100] sm:$0xff]
      %v710 = vld [vmem:[%s612 + $0x108] sm:$0xff]
      %v711 = vld [vmem:[%s612 + $0x110] sm:$0xff]
      %v712 = vld [vmem:[%s612 + $0x118] sm:$0xff]
      %v713 = vld [vmem:[%s612 + $0x120] sm:$0xff]
      %v714 = vld [vmem:[%s612 + $0x128] sm:$0xff]
      %v715 = vld [vmem:[%s612 + $0x130] sm:$0xff]
      %v716 = vld [vmem:[%s612 + $0x138] sm:$0xff]
      %v717 = vld [vmem:[%s612 + $0x140] sm:$0xff]
      %v718 = vld [vmem:[%s612 + $0x148] sm:$0xff]
      %v719 = vld [vmem:[%s612 + $0x150] sm:$0xff]
      %v720 = vld [vmem:[%s612 + $0x158] sm:$0xff]
      %v721 = vld [vmem:[%s612 + $0x160] sm:$0xff]
      %v722 = vld [vmem:[%s612 + $0x168] sm:$0xff]
      %v723 = vld [vmem:[%s612 + $0x170] sm:$0xff]
      %v724 = vld [vmem:[%s612 + $0x178] sm:$0xff]
      %v725 = vld [vmem:[%s612 + $0x180] sm:$0xff]
      %v726 = vld [vmem:[%s612 + $0x188] sm:$0xff]
      %v727 = vld [vmem:[%s612 + $0x190] sm:$0xff]
      %v728 = vld [vmem:[%s612 + $0x198] sm:$0xff]
      %v729 = vld [vmem:[%s612 + $0x1a0] sm:$0xff]
      %v730 = vld [vmem:[%s612 + $0x1a8] sm:$0xff]
      %v731 = vld [vmem:[%s612 + $0x1b0] sm:$0xff]
      %v732 = vld [vmem:[%s612 + $0x1b8] sm:$0xff]
      %v733 = vld [vmem:[%s612 + $0x1c0] sm:$0xff]
      %v734 = vld [vmem:[%s612 + $0x1c8] sm:$0xff]
      %v735 = vld [vmem:[%s612 + $0x1d0] sm:$0xff]
      %v736 = vld [vmem:[%s612 + $0x1d8] sm:$0xff]
      %v737 = vld [vmem:[%s612 + $0x1e0] sm:$0xff]
      %v738 = vld [vmem:[%s612 + $0x1e8] sm:$0xff]
      %v739 = vld [vmem:[%s612 + $0x1f0] sm:$0xff]
      %v740 = vld [vmem:[%s612 + $0x1f8] sm:$0xff]
      %v741 = vld [vmem:[%s612 + $0x200] sm:$0xff]
      %v742 = vld [vmem:[%s612 + $0x208] sm:$0xff]
      %v743 = vld [vmem:[%s612 + $0x210] sm:$0xff]
      %v744 = vld [vmem:[%s612 + $0x218] sm:$0xff]
      %v745 = vld [vmem:[%s612 + $0x220] sm:$0xff]
      %v746 = vld [vmem:[%s612 + $0x228] sm:$0xff]
      %v747 = vld [vmem:[%s612 + $0x230] sm:$0xff]
      %v748 = vld [vmem:[%s612 + $0x238] sm:$0xff]
      %v749 = vld [vmem:[%s4] sm:$0xff]
      %v750 = vld [vmem:[%s4 + $0x8] sm:$0xff]
      %v751 = vld [vmem:[%s4 + $0x10] sm:$0xff]
      %v752 = vld [vmem:[%s4 + $0x18] sm:$0xff]
      %v753 = vld [vmem:[%s4 + $0x20] sm:$0xff]
      %v754 = vld [vmem:[%s4 + $0x28] sm:$0xff]
      %v755 = vld [vmem:[%s4 + $0x30] sm:$0xff]
      %v756 = vld [vmem:[%s4 + $0x38] sm:$0xff]
      %758 = vset.pattern.permute.xlu0 0
      %759 = vperm.xlu0 %758, %v749
      %v760 = vpop.permute.xlu0 %759
      %763 = vset.pattern.permute.xlu0 0
      %764 = vperm.xlu0 %763, %v750
      %v765 = vpop.permute.xlu0 %764
      %768 = vset.pattern.permute.xlu0 0
      %769 = vperm.xlu0 %768, %v751
      %v770 = vpop.permute.xlu0 %769
      %773 = vset.pattern.permute.xlu0 0
      %774 = vperm.xlu0 %773, %v752
      %v775 = vpop.permute.xlu0 %774
      %778 = vset.pattern.permute.xlu0 0
      %779 = vperm.xlu0 %778, %v753
      %v780 = vpop.permute.xlu0 %779
      %783 = vset.pattern.permute.xlu0 0
      %784 = vperm.xlu0 %783, %v754
      %v785 = vpop.permute.xlu0 %784
      %788 = vset.pattern.permute.xlu0 0
      %789 = vperm.xlu0 %788, %v755
      %v790 = vpop.permute.xlu0 %789
      %793 = vset.pattern.permute.xlu0 0
      %794 = vperm.xlu0 %793, %v756
      %v795 = vpop.permute.xlu0 %794
      %v805 = vunpack.c.l.b16 %v669
      %v806 = vunpack.c.h.b16 %v669
      %v807 = vunpack.c.l.b16 %v670
      %v808 = vunpack.c.h.b16 %v670
      %v809 = vunpack.c.l.b16 %v671
      %v810 = vunpack.c.h.b16 %v671
      %v811 = vunpack.c.l.b16 %v672
      %v812 = vunpack.c.h.b16 %v672
      %v813 = vunpack.c.l.b16 %v673
      %v814 = vunpack.c.h.b16 %v673
      %v815 = vunpack.c.l.b16 %v674
      %v816 = vunpack.c.h.b16 %v674
      %v817 = vunpack.c.l.b16 %v675
      %v818 = vunpack.c.h.b16 %v675
      %v819 = vunpack.c.l.b16 %v676
      %v820 = vunpack.c.h.b16 %v676
      %v821 = vpack.c.b16 %v807, %v805
      %v822 = vpack.c.b16 %v808, %v806
      %v823 = vpack.c.b16 %v811, %v809
      %v824 = vpack.c.b16 %v812, %v810
      %v825 = vpack.c.b16 %v815, %v813
      %v826 = vpack.c.b16 %v816, %v814
      %v827 = vpack.c.b16 %v819, %v817
      %v828 = vpack.c.b16 %v820, %v818
      %v905 = vunpack.c.l.b16 %v677
      %v906 = vunpack.c.h.b16 %v677
      %v907 = vunpack.c.l.b16 %v678
      %v908 = vunpack.c.h.b16 %v678
      %v909 = vunpack.c.l.b16 %v679
      %v910 = vunpack.c.h.b16 %v679
      %v911 = vunpack.c.l.b16 %v680
      %v912 = vunpack.c.h.b16 %v680
      %v913 = vunpack.c.l.b16 %v681
      %v914 = vunpack.c.h.b16 %v681
      %v915 = vunpack.c.l.b16 %v682
      %v916 = vunpack.c.h.b16 %v682
      %v917 = vunpack.c.l.b16 %v683
      %v918 = vunpack.c.h.b16 %v683
      %v919 = vunpack.c.l.b16 %v684
      %v920 = vunpack.c.h.b16 %v684
      %v921 = vunpack.c.l.b16 %v685
      %v922 = vunpack.c.h.b16 %v685
      %v923 = vunpack.c.l.b16 %v686
      %v924 = vunpack.c.h.b16 %v686
      %v925 = vunpack.c.l.b16 %v687
      %v926 = vunpack.c.h.b16 %v687
      %v927 = vunpack.c.l.b16 %v688
      %v928 = vunpack.c.h.b16 %v688
      %v929 = vunpack.c.l.b16 %v689
      %v930 = vunpack.c.h.b16 %v689
      %v931 = vunpack.c.l.b16 %v690
      %v932 = vunpack.c.h.b16 %v690
      %v933 = vunpack.c.l.b16 %v691
      %v934 = vunpack.c.h.b16 %v691
      %v935 = vunpack.c.l.b16 %v692
      %v936 = vunpack.c.h.b16 %v692
      %v937 = vunpack.c.l.b16 %v693
      %v938 = vunpack.c.h.b16 %v693
      %v939 = vunpack.c.l.b16 %v694
      %v940 = vunpack.c.h.b16 %v694
      %v941 = vunpack.c.l.b16 %v695
      %v942 = vunpack.c.h.b16 %v695
      %v943 = vunpack.c.l.b16 %v696
      %v944 = vunpack.c.h.b16 %v696
      %v945 = vunpack.c.l.b16 %v697
      %v946 = vunpack.c.h.b16 %v697
      %v947 = vunpack.c.l.b16 %v698
      %v948 = vunpack.c.h.b16 %v698
      %v949 = vunpack.c.l.b16 %v699
      %v950 = vunpack.c.h.b16 %v699
      %v951 = vunpack.c.l.b16 %v700
      %v952 = vunpack.c.h.b16 %v700
      %v953 = vunpack.c.l.b16 %v701
      %v954 = vunpack.c.h.b16 %v701
      %v955 = vunpack.c.l.b16 %v702
      %v956 = vunpack.c.h.b16 %v702
      %v957 = vunpack.c.l.b16 %v703
      %v958 = vunpack.c.h.b16 %v703
      %v959 = vunpack.c.l.b16 %v704
      %v960 = vunpack.c.h.b16 %v704
      %v961 = vunpack.c.l.b16 %v705
      %v962 = vunpack.c.h.b16 %v705
      %v963 = vunpack.c.l.b16 %v706
      %v964 = vunpack.c.h.b16 %v706
      %v965 = vunpack.c.l.b16 %v707
      %v966 = vunpack.c.h.b16 %v707
      %v967 = vunpack.c.l.b16 %v708
      %v968 = vunpack.c.h.b16 %v708
      %v969 = vunpack.c.l.b16 %v709
      %v970 = vunpack.c.h.b16 %v709
      %v971 = vunpack.c.l.b16 %v710
      %v972 = vunpack.c.h.b16 %v710
      %v973 = vunpack.c.l.b16 %v711
      %v974 = vunpack.c.h.b16 %v711
      %v975 = vunpack.c.l.b16 %v712
      %v976 = vunpack.c.h.b16 %v712
      %v977 = vunpack.c.l.b16 %v713
      %v978 = vunpack.c.h.b16 %v713
      %v979 = vunpack.c.l.b16 %v714
      %v980 = vunpack.c.h.b16 %v714
      %v981 = vunpack.c.l.b16 %v715
      %v982 = vunpack.c.h.b16 %v715
      %v983 = vunpack.c.l.b16 %v716
      %v984 = vunpack.c.h.b16 %v716
      %v985 = vunpack.c.l.b16 %v717
      %v986 = vunpack.c.h.b16 %v717
      %v987 = vunpack.c.l.b16 %v718
      %v988 = vunpack.c.h.b16 %v718
      %v989 = vunpack.c.l.b16 %v719
      %v990 = vunpack.c.h.b16 %v719
      %v991 = vunpack.c.l.b16 %v720
      %v992 = vunpack.c.h.b16 %v720
      %v993 = vunpack.c.l.b16 %v721
      %v994 = vunpack.c.h.b16 %v721
      %v995 = vunpack.c.l.b16 %v722
      %v996 = vunpack.c.h.b16 %v722
      %v997 = vunpack.c.l.b16 %v723
      %v998 = vunpack.c.h.b16 %v723
      %v999 = vunpack.c.l.b16 %v724
      %v1000 = vunpack.c.h.b16 %v724
      %v1001 = vunpack.c.l.b16 %v725
      %v1002 = vunpack.c.h.b16 %v725
      %v1003 = vunpack.c.l.b16 %v726
      %v1004 = vunpack.c.h.b16 %v726
      %v1005 = vunpack.c.l.b16 %v727
      %v1006 = vunpack.c.h.b16 %v727
      %v1007 = vunpack.c.l.b16 %v728
      %v1008 = vunpack.c.h.b16 %v728
      %v1009 = vunpack.c.l.b16 %v729
      %v1010 = vunpack.c.h.b16 %v729
      %v1011 = vunpack.c.l.b16 %v730
      %v1012 = vunpack.c.h.b16 %v730
      %v1013 = vunpack.c.l.b16 %v731
      %v1014 = vunpack.c.h.b16 %v731
      %v1015 = vunpack.c.l.b16 %v732
      %v1016 = vunpack.c.h.b16 %v732
      %v1017 = vunpack.c.l.b16 %v733
      %v1018 = vunpack.c.h.b16 %v733
      %v1019 = vunpack.c.l.b16 %v734
      %v1020 = vunpack.c.h.b16 %v734
      %v1021 = vunpack.c.l.b16 %v735
      %v1022 = vunpack.c.h.b16 %v735
      %v1023 = vunpack.c.l.b16 %v736
      %v1024 = vunpack.c.h.b16 %v736
      %v1025 = vunpack.c.l.b16 %v737
      %v1026 = vunpack.c.h.b16 %v737
      %v1027 = vunpack.c.l.b16 %v738
      %v1028 = vunpack.c.h.b16 %v738
      %v1029 = vunpack.c.l.b16 %v739
      %v1030 = vunpack.c.h.b16 %v739
      %v1031 = vunpack.c.l.b16 %v740
      %v1032 = vunpack.c.h.b16 %v740
      %v1033 = vunpack.c.l.b16 %v741
      %v1034 = vunpack.c.h.b16 %v741
      %v1035 = vunpack.c.l.b16 %v742
      %v1036 = vunpack.c.h.b16 %v742
      %v1037 = vunpack.c.l.b16 %v743
      %v1038 = vunpack.c.h.b16 %v743
      %v1039 = vunpack.c.l.b16 %v744
      %v1040 = vunpack.c.h.b16 %v744
      %v1041 = vunpack.c.l.b16 %v745
      %v1042 = vunpack.c.h.b16 %v745
      %v1043 = vunpack.c.l.b16 %v746
      %v1044 = vunpack.c.h.b16 %v746
      %v1045 = vunpack.c.l.b16 %v747
      %v1046 = vunpack.c.h.b16 %v747
      %v1047 = vunpack.c.l.b16 %v748
      %v1048 = vunpack.c.h.b16 %v748
      %v1049 = vpack.c.b16 %v913, %v905
      %v1050 = vpack.c.b16 %v914, %v906
      %v1051 = vpack.c.b16 %v915, %v907
      %v1052 = vpack.c.b16 %v916, %v908
      %v1053 = vpack.c.b16 %v917, %v909
      %v1054 = vpack.c.b16 %v918, %v910
      %v1055 = vpack.c.b16 %v919, %v911
      %v1056 = vpack.c.b16 %v920, %v912
      %v1057 = vpack.c.b16 %v929, %v921
      %v1058 = vpack.c.b16 %v930, %v922
      %v1059 = vpack.c.b16 %v931, %v923
      %v1060 = vpack.c.b16 %v932, %v924
      %v1061 = vpack.c.b16 %v933, %v925
      %v1062 = vpack.c.b16 %v934, %v926
      %v1063 = vpack.c.b16 %v935, %v927
      %v1064 = vpack.c.b16 %v936, %v928
      %v1065 = vpack.c.b16 %v945, %v937
      %v1066 = vpack.c.b16 %v946, %v938
      %v1067 = vpack.c.b16 %v947, %v939
      %v1068 = vpack.c.b16 %v948, %v940
      %v1069 = vpack.c.b16 %v949, %v941
      %v1070 = vpack.c.b16 %v950, %v942
      %v1071 = vpack.c.b16 %v951, %v943
      %v1072 = vpack.c.b16 %v952, %v944
      %v1073 = vpack.c.b16 %v961, %v953
      %v1074 = vpack.c.b16 %v962, %v954
      %v1075 = vpack.c.b16 %v963, %v955
      %v1076 = vpack.c.b16 %v964, %v956
      %v1077 = vpack.c.b16 %v965, %v957
      %v1078 = vpack.c.b16 %v966, %v958
      %v1079 = vpack.c.b16 %v967, %v959
      %v1080 = vpack.c.b16 %v968, %v960
      %v1081 = vpack.c.b16 %v977, %v969
      %v1082 = vpack.c.b16 %v978, %v970
      %v1083 = vpack.c.b16 %v979, %v971
      %v1084 = vpack.c.b16 %v980, %v972
      %v1085 = vpack.c.b16 %v981, %v973
      %v1086 = vpack.c.b16 %v982, %v974
      %v1087 = vpack.c.b16 %v983, %v975
      %v1088 = vpack.c.b16 %v984, %v976
      %v1089 = vpack.c.b16 %v993, %v985
      %v1090 = vpack.c.b16 %v994, %v986
      %v1091 = vpack.c.b16 %v995, %v987
      %v1092 = vpack.c.b16 %v996, %v988
      %v1093 = vpack.c.b16 %v997, %v989
      %v1094 = vpack.c.b16 %v998, %v990
      %v1095 = vpack.c.b16 %v999, %v991
      %v1096 = vpack.c.b16 %v1000, %v992
      %v1097 = vpack.c.b16 %v1009, %v1001
      %v1098 = vpack.c.b16 %v1010, %v1002
      %v1099 = vpack.c.b16 %v1011, %v1003
      %v1100 = vpack.c.b16 %v1012, %v1004
      %v1101 = vpack.c.b16 %v1013, %v1005
      %v1102 = vpack.c.b16 %v1014, %v1006
      %v1103 = vpack.c.b16 %v1015, %v1007
      %v1104 = vpack.c.b16 %v1016, %v1008
      %v1105 = vpack.c.b16 %v1025, %v1017
      %v1106 = vpack.c.b16 %v1026, %v1018
      %v1107 = vpack.c.b16 %v1027, %v1019
      %v1108 = vpack.c.b16 %v1028, %v1020
      %v1109 = vpack.c.b16 %v1029, %v1021
      %v1110 = vpack.c.b16 %v1030, %v1022
      %v1111 = vpack.c.b16 %v1031, %v1023
      %v1112 = vpack.c.b16 %v1032, %v1024
      %v1113 = vpack.c.b16 %v1041, %v1033
      %v1114 = vpack.c.b16 %v1042, %v1034
      %v1115 = vpack.c.b16 %v1043, %v1035
      %v1116 = vpack.c.b16 %v1044, %v1036
      %v1117 = vpack.c.b16 %v1045, %v1037
      %v1118 = vpack.c.b16 %v1046, %v1038
      %v1119 = vpack.c.b16 %v1047, %v1039
      %v1120 = vpack.c.b16 %v1048, %v1040
      %vm1193 = vcmask 130048
      %v1195 = vsel %vm1193, %v822, 0
      %v1198 = vsel %vm1193, %v824, 0
      %v1201 = vsel %vm1193, %v826, 0
      %v1204 = vsel %vm1193, %v828, 0
      %1206 = vmatprep.subr.bf16.mxu0 %v1050
      %1207 = vmatpush1.bf16.msra.mxu0 %v1049
      %1208 = vmatprep.subr.bf16.mxu0 %v1058
      %1209 = vmatpush1.bf16.msra.mxu0 %v1057
      %1210 = vmatprep.subr.bf16.mxu0 %v1066
      %1211 = vmatpush1.bf16.msra.mxu0 %v1065
      %1212 = vmatprep.subr.bf16.mxu0 %v1074
      %1213 = vmatpush1.bf16.msra.mxu0 %v1073
      %1214 = vmatprep.subr.bf16.mxu0 %v1082
      %1215 = vmatpush1.bf16.msra.mxu0 %v1081
      %1216 = vmatprep.subr.bf16.mxu0 %v1090
      %1217 = vmatpush1.bf16.msra.mxu0 %v1089
      %1218 = vmatprep.subr.bf16.mxu0 %v1098
      %1219 = vmatpush1.bf16.msra.mxu0 %v1097
      %1220 = vmatprep.subr.bf16.mxu0 %v1106
      %1221 = vmatpush1.bf16.msra.mxu0 %v1105
      %1222 = vmatprep.subr.bf16.mxu0 %v1114
      %1223 = vmatpush1.bf16.msra.mxu0 %v1113
      %1224 = vmatprep.subr.bf16.mxu0 0
      %1225 = vmatpush1.bf16.msra.mxu0 0
      %1226 = vmatprep.subr.bf16.mxu0 0
      %1227 = vmatpush1.bf16.msra.mxu0 0
      %1228 = vmatprep.subr.bf16.mxu0 0
      %1229 = vmatpush1.bf16.msra.mxu0 0
      %1230 = vmatprep.subr.bf16.mxu0 0
      %1231 = vmatpush1.bf16.msra.mxu0 0
      %1232 = vmatprep.subr.bf16.mxu0 0
      %1233 = vmatpush1.bf16.msra.mxu0 0
      %1234 = vmatprep.subr.bf16.mxu0 0
      %1235 = vmatpush1.bf16.msra.mxu0 0
      %1236 = vmatprep.subr.bf16.mxu0 0
      %1237 = vmatpush1.bf16.msra.mxu0 0
      %1238 = vmatprep.mubr.bf16.mxu0 %v1195
      %1239 = vmatmul.mubr.bf16.gmra.mrb[0].mxu0 %v821
      %v1240 = vpop.f32.mrb[0].mxu0
      %v1241 = vadd.f32 %v760, %v1240
      %v1242 = vpop.f32.mrb[0].mxu0
      %v1243 = vadd.f32 %v760, %v1242
      %v1244 = vpop.f32.mrb[0].mxu0
      %v1245 = vadd.f32 %v765, %v1244
      %v1246 = vpop.f32.mrb[0].mxu0
      %v1247 = vadd.f32 %v765, %v1246
      %1248 = vmatprep.mubr.bf16.mxu0 %v1198
      %1249 = vmatmul.mubr.bf16.gmra.mrb[0].mxu0 %v823
      %v1250 = vpop.f32.mrb[0].mxu0
      %v1251 = vadd.f32 %v770, %v1250
      %v1252 = vpop.f32.mrb[0].mxu0
      %v1253 = vadd.f32 %v770, %v1252
      %v1254 = vpop.f32.mrb[0].mxu0
      %v1255 = vadd.f32 %v775, %v1254
      %v1256 = vpop.f32.mrb[0].mxu0
      %v1257 = vadd.f32 %v775, %v1256
      %1258 = vmatprep.mubr.bf16.mxu0 %v1201
      %1259 = vmatmul.mubr.bf16.gmra.mrb[0].mxu0 %v825
      %v1260 = vpop.f32.mrb[0].mxu0
      %v1261 = vadd.f32 %v780, %v1260
      %v1262 = vpop.f32.mrb[0].mxu0
      %v1263 = vadd.f32 %v780, %v1262
      %v1264 = vpop.f32.mrb[0].mxu0
      %v1265 = vadd.f32 %v785, %v1264
      %v1266 = vpop.f32.mrb[0].mxu0
      %v1267 = vadd.f32 %v785, %v1266
      %1268 = vmatprep.mubr.bf16.mxu0 %v1204
      %1269 = vmatmul.mubr.bf16.gmra.mrb[0].mxu0 %v827
      %v1270 = vpop.f32.mrb[0].mxu0
      %v1271 = vadd.f32 %v790, %v1270
      %v1272 = vpop.f32.mrb[0].mxu0
      %v1273 = vadd.f32 %v790, %v1272
      %v1274 = vpop.f32.mrb[0].mxu0
      %v1275 = vadd.f32 %v795, %v1274
      %v1276 = vpop.f32.mrb[0].mxu0
      %v1277 = vadd.f32 %v795, %v1276
      %1278 = vdwg.mxu0
      %1279 = vmatprep.subr.bf16.mxu0 %v1052
      %1280 = vmatpush1.bf16.msra.mxu0 %v1051
      %1281 = vmatprep.subr.bf16.mxu0 %v1060
      %1282 = vmatpush1.bf16.msra.mxu0 %v1059
      %1283 = vmatprep.subr.bf16.mxu0 %v1068
      %1284 = vmatpush1.bf16.msra.mxu0 %v1067
      %1285 = vmatprep.subr.bf16.mxu0 %v1076
      %1286 = vmatpush1.bf16.msra.mxu0 %v1075
      %1287 = vmatprep.subr.bf16.mxu0 %v1084
      %1288 = vmatpush1.bf16.msra.mxu0 %v1083
      %1289 = vmatprep.subr.bf16.mxu0 %v1092
      %1290 = vmatpush1.bf16.msra.mxu0 %v1091
      %1291 = vmatprep.subr.bf16.mxu0 %v1100
      %1292 = vmatpush1.bf16.msra.mxu0 %v1099
      %1293 = vmatprep.subr.bf16.mxu0 %v1108
      %1294 = vmatpush1.bf16.msra.mxu0 %v1107
      %1295 = vmatprep.subr.bf16.mxu0 %v1116
      %1296 = vmatpush1.bf16.msra.mxu0 %v1115
      %1297 = vmatprep.subr.bf16.mxu0 0
      %1298 = vmatpush1.bf16.msra.mxu0 0
      %1299 = vmatprep.subr.bf16.mxu0 0
      %1300 = vmatpush1.bf16.msra.mxu0 0
      %1301 = vmatprep.subr.bf16.mxu0 0
      %1302 = vmatpush1.bf16.msra.mxu0 0
      %1303 = vmatprep.subr.bf16.mxu0 0
      %1304 = vmatpush1.bf16.msra.mxu0 0
      %1305 = vmatprep.subr.bf16.mxu0 0
      %1306 = vmatpush1.bf16.msra.mxu0 0
      %1307 = vmatprep.subr.bf16.mxu0 0
      %1308 = vmatpush1.bf16.msra.mxu0 0
      %1309 = vmatprep.subr.bf16.mxu0 0
      %1310 = vmatpush1.bf16.msra.mxu0 0
      %1311 = vmatprep.mubr.bf16.mxu0 %v1195
      %1312 = vmatmul.mubr.bf16.gmra.mrb[0].mxu0 %v821
      %v1313 = vpop.f32.mrb[0].mxu0
      %v1314 = vadd.f32 %v760, %v1313
      %v1315 = vpop.f32.mrb[0].mxu0
      %v1316 = vadd.f32 %v760, %v1315
      %v1317 = vpop.f32.mrb[0].mxu0
      %v1318 = vadd.f32 %v765, %v1317
      %v1319 = vpop.f32.mrb[0].mxu0
      %v1320 = vadd.f32 %v765, %v1319
      %1321 = vmatprep.mubr.bf16.mxu0 %v1198
      %1322 = vmatmul.mubr.bf16.gmra.mrb[0].mxu0 %v823
      %v1323 = vpop.f32.mrb[0].mxu0
      %v1324 = vadd.f32 %v770, %v1323
      %v1325 = vpop.f32.mrb[0].mxu0
      %v1326 = vadd.f32 %v770, %v1325
      %v1327 = vpop.f32.mrb[0].mxu0
      %v1328 = vadd.f32 %v775, %v1327
      %v1329 = vpop.f32.mrb[0].mxu0
      %v1330 = vadd.f32 %v775, %v1329
      %1331 = vmatprep.mubr.bf16.mxu0 %v1201
      %1332 = vmatmul.mubr.bf16.gmra.mrb[0].mxu0 %v825
      %v1333 = vpop.f32.mrb[0].mxu0
      %v1334 = vadd.f32 %v780, %v1333
      %v1335 = vpop.f32.mrb[0].mxu0
      %v1336 = vadd.f32 %v780, %v1335
      %v1337 = vpop.f32.mrb[0].mxu0
      %v1338 = vadd.f32 %v785, %v1337
      %v1339 = vpop.f32.mrb[0].mxu0
      %v1340 = vadd.f32 %v785, %v1339
      %1341 = vmatprep.mubr.bf16.mxu0 %v1204
      %1342 = vmatmul.mubr.bf16.gmra.mrb[0].mxu0 %v827
      %v1343 = vpop.f32.mrb[0].mxu0
      %v1344 = vadd.f32 %v790, %v1343
      %v1345 = vpop.f32.mrb[0].mxu0
      %v1346 = vadd.f32 %v790, %v1345
      %v1347 = vpop.f32.mrb[0].mxu0
      %v1348 = vadd.f32 %v795, %v1347
      %v1349 = vpop.f32.mrb[0].mxu0
      %v1350 = vadd.f32 %v795, %v1349
      %1351 = vdwg.mxu0
      %1352 = vmatprep.subr.bf16.mxu0 %v1054
      %1353 = vmatpush1.bf16.msra.mxu0 %v1053
      %1354 = vmatprep.subr.bf16.mxu0 %v1062
      %1355 = vmatpush1.bf16.msra.mxu0 %v1061
      %1356 = vmatprep.subr.bf16.mxu0 %v1070
      %1357 = vmatpush1.bf16.msra.mxu0 %v1069
      %1358 = vmatprep.subr.bf16.mxu0 %v1078
      %1359 = vmatpush1.bf16.msra.mxu0 %v1077
      %1360 = vmatprep.subr.bf16.mxu0 %v1086
      %1361 = vmatpush1.bf16.msra.mxu0 %v1085
      %1362 = vmatprep.subr.bf16.mxu0 %v1094
      %1363 = vmatpush1.bf16.msra.mxu0 %v1093
      %1364 = vmatprep.subr.bf16.mxu0 %v1102
      %1365 = vmatpush1.bf16.msra.mxu0 %v1101
      %1366 = vmatprep.subr.bf16.mxu0 %v1110
      %1367 = vmatpush1.bf16.msra.mxu0 %v1109
      %1368 = vmatprep.subr.bf16.mxu0 %v1118
      %1369 = vmatpush1.bf16.msra.mxu0 %v1117
      %1370 = vmatprep.subr.bf16.mxu0 0
      %1371 = vmatpush1.bf16.msra.mxu0 0
      %1372 = vmatprep.subr.bf16.mxu0 0
      %1373 = vmatpush1.bf16.msra.mxu0 0
      %1374 = vmatprep.subr.bf16.mxu0 0
      %1375 = vmatpush1.bf16.msra.mxu0 0
      %1376 = vmatprep.subr.bf16.mxu0 0
      %1377 = vmatpush1.bf16.msra.mxu0 0
      %1378 = vmatprep.subr.bf16.mxu0 0
      %1379 = vmatpush1.bf16.msra.mxu0 0
      %1380 = vmatprep.subr.bf16.mxu0 0
      %1381 = vmatpush1.bf16.msra.mxu0 0
      %1382 = vmatprep.subr.bf16.mxu0 0
      %1383 = vmatpush1.bf16.msra.mxu0 0
      %1384 = vmatprep.mubr.bf16.mxu0 %v1195
      %1385 = vmatmul.mubr.bf16.gmra.mrb[0].mxu0 %v821
      %v1386 = vpop.f32.mrb[0].mxu0
      %v1387 = vadd.f32 %v760, %v1386
      %v1388 = vpop.f32.mrb[0].mxu0
      %v1389 = vadd.f32 %v760, %v1388
      %v1390 = vpop.f32.mrb[0].mxu0
      %v1391 = vadd.f32 %v765, %v1390
      %v1392 = vpop.f32.mrb[0].mxu0
      %v1393 = vadd.f32 %v765, %v1392
      %1394 = vmatprep.mubr.bf16.mxu0 %v1198
      %1395 = vmatmul.mubr.bf16.gmra.mrb[0].mxu0 %v823
      %v1396 = vpop.f32.mrb[0].mxu0
      %v1397 = vadd.f32 %v770, %v1396
      %v1398 = vpop.f32.mrb[0].mxu0
      %v1399 = vadd.f32 %v770, %v1398
      %v1400 = vpop.f32.mrb[0].mxu0
      %v1401 = vadd.f32 %v775, %v1400
      %v1402 = vpop.f32.mrb[0].mxu0
      %v1403 = vadd.f32 %v775, %v1402
      %1404 = vmatprep.mubr.bf16.mxu0 %v1201
      %1405 = vmatmul.mubr.bf16.gmra.mrb[0].mxu0 %v825
      %v1406 = vpop.f32.mrb[0].mxu0
      %v1407 = vadd.f32 %v780, %v1406
      %v1408 = vpop.f32.mrb[0].mxu0
      %v1409 = vadd.f32 %v780, %v1408
      %v1410 = vpop.f32.mrb[0].mxu0
      %v1411 = vadd.f32 %v785, %v1410
      %v1412 = vpop.f32.mrb[0].mxu0
      %v1413 = vadd.f32 %v785, %v1412
      %1414 = vmatprep.mubr.bf16.mxu0 %v1204
      %1415 = vmatmul.mubr.bf16.gmra.mrb[0].mxu0 %v827
      %v1416 = vpop.f32.mrb[0].mxu0
      %v1417 = vadd.f32 %v790, %v1416
      %v1418 = vpop.f32.mrb[0].mxu0
      %v1419 = vadd.f32 %v790, %v1418
      %v1420 = vpop.f32.mrb[0].mxu0
      %v1421 = vadd.f32 %v795, %v1420
      %v1422 = vpop.f32.mrb[0].mxu0
      %v1423 = vadd.f32 %v795, %v1422
      %1424 = vdwg.mxu0
      %1425 = vmatprep.subr.bf16.mxu0 %v1056
      %1426 = vmatpush1.bf16.msra.mxu0 %v1055
      %1427 = vmatprep.subr.bf16.mxu0 %v1064
      %1428 = vmatpush1.bf16.msra.mxu0 %v1063
      %1429 = vmatprep.subr.bf16.mxu0 %v1072
      %1430 = vmatpush1.bf16.msra.mxu0 %v1071
      %1431 = vmatprep.subr.bf16.mxu0 %v1080
      %1432 = vmatpush1.bf16.msra.mxu0 %v1079
      %1433 = vmatprep.subr.bf16.mxu0 %v1088
      %1434 = vmatpush1.bf16.msra.mxu0 %v1087
      %1435 = vmatprep.subr.bf16.mxu0 %v1096
      %1436 = vmatpush1.bf16.msra.mxu0 %v1095
      %1437 = vmatprep.subr.bf16.mxu0 %v1104
      %1438 = vmatpush1.bf16.msra.mxu0 %v1103
      %1439 = vmatprep.subr.bf16.mxu0 %v1112
      %1440 = vmatpush1.bf16.msra.mxu0 %v1111
      %1441 = vmatprep.subr.bf16.mxu0 %v1120
      %1442 = vmatpush1.bf16.msra.mxu0 %v1119
      %1443 = vmatprep.subr.bf16.mxu0 0
      %1444 = vmatpush1.bf16.msra.mxu0 0
      %1445 = vmatprep.subr.bf16.mxu0 0
      %1446 = vmatpush1.bf16.msra.mxu0 0
      %1447 = vmatprep.subr.bf16.mxu0 0
      %1448 = vmatpush1.bf16.msra.mxu0 0
      %1449 = vmatprep.subr.bf16.mxu0 0
      %1450 = vmatpush1.bf16.msra.mxu0 0
      %1451 = vmatprep.subr.bf16.mxu0 0
      %1452 = vmatpush1.bf16.msra.mxu0 0
      %1453 = vmatprep.subr.bf16.mxu0 0
      %1454 = vmatpush1.bf16.msra.mxu0 0
      %1455 = vmatprep.subr.bf16.mxu0 0
      %1456 = vmatpush1.bf16.msra.mxu0 0
      %1457 = vmatprep.mubr.bf16.mxu0 %v1195
      %1458 = vmatmul.mubr.bf16.gmra.mrb[0].mxu0 %v821
      %v1459 = vpop.f32.mrb[0].mxu0
      %v1460 = vadd.f32 %v760, %v1459
      %v1461 = vpop.f32.mrb[0].mxu0
      %v1462 = vadd.f32 %v760, %v1461
      %v1463 = vpop.f32.mrb[0].mxu0
      %v1464 = vadd.f32 %v765, %v1463
      %v1465 = vpop.f32.mrb[0].mxu0
      %v1466 = vadd.f32 %v765, %v1465
      %1467 = vmatprep.mubr.bf16.mxu0 %v1198
      %1468 = vmatmul.mubr.bf16.gmra.mrb[0].mxu0 %v823
      %v1469 = vpop.f32.mrb[0].mxu0
      %v1470 = vadd.f32 %v770, %v1469
      %v1471 = vpop.f32.mrb[0].mxu0
      %v1472 = vadd.f32 %v770, %v1471
      %v1473 = vpop.f32.mrb[0].mxu0
      %v1474 = vadd.f32 %v775, %v1473
      %v1475 = vpop.f32.mrb[0].mxu0
      %v1476 = vadd.f32 %v775, %v1475
      %1477 = vmatprep.mubr.bf16.mxu0 %v1201
      %1478 = vmatmul.mubr.bf16.gmra.mrb[0].mxu0 %v825
      %v1479 = vpop.f32.mrb[0].mxu0
      %v1480 = vadd.f32 %v780, %v1479
      %v1481 = vpop.f32.mrb[0].mxu0
      %v1482 = vadd.f32 %v780, %v1481
      %v1483 = vpop.f32.mrb[0].mxu0
      %v1484 = vadd.f32 %v785, %v1483
      %v1485 = vpop.f32.mrb[0].mxu0
      %v1486 = vadd.f32 %v785, %v1485
      %1487 = vmatprep.mubr.bf16.mxu0 %v1204
      %1488 = vmatmul.mubr.bf16.gmra.mrb[0].mxu0 %v827
      %v1489 = vpop.f32.mrb[0].mxu0
      %v1490 = vadd.f32 %v790, %v1489
      %v1491 = vpop.f32.mrb[0].mxu0
      %v1492 = vadd.f32 %v790, %v1491
      %v1493 = vpop.f32.mrb[0].mxu0
      %v1494 = vadd.f32 %v795, %v1493
      %v1495 = vpop.f32.mrb[0].mxu0
      %v1496 = vadd.f32 %v795, %v1495
      %1497 = vdwg.mxu0
      %v1498 = vld [vmem:[%s5] sm:$0xff]
      %v1499 = vld [vmem:[%s5 + $0x8] sm:$0xff]
      %v1500 = vld [vmem:[%s5 + $0x10] sm:$0xff]
      %v1501 = vld [vmem:[%s5 + $0x18] sm:$0xff]
      %v1502 = vld [vmem:[%s5 + $0x20] sm:$0xff]
      %v1503 = vld [vmem:[%s5 + $0x28] sm:$0xff]
      %v1504 = vld [vmem:[%s5 + $0x30] sm:$0xff]
      %v1505 = vld [vmem:[%s5 + $0x38] sm:$0xff]
      %v1506 = vld [vmem:[%s622] sm:$0xff]
      %v1507 = vld [vmem:[%s622 + $0x8] sm:$0xff]
      %v1508 = vld [vmem:[%s622 + $0x10] sm:$0xff]
      %v1509 = vld [vmem:[%s622 + $0x18] sm:$0xff]
      %v1510 = vld [vmem:[%s622 + $0x20] sm:$0xff]
      %v1511 = vld [vmem:[%s622 + $0x28] sm:$0xff]
      %v1512 = vld [vmem:[%s622 + $0x30] sm:$0xff]
      %v1513 = vld [vmem:[%s622 + $0x38] sm:$0xff]
      %v1514 = vld [vmem:[%s622 + $0x40] sm:$0xff]
      %v1515 = vld [vmem:[%s622 + $0x48] sm:$0xff]
      %v1516 = vld [vmem:[%s622 + $0x50] sm:$0xff]
      %v1517 = vld [vmem:[%s622 + $0x58] sm:$0xff]
      %v1518 = vld [vmem:[%s622 + $0x60] sm:$0xff]
      %v1519 = vld [vmem:[%s622 + $0x68] sm:$0xff]
      %v1520 = vld [vmem:[%s622 + $0x70] sm:$0xff]
      %v1521 = vld [vmem:[%s622 + $0x78] sm:$0xff]
      %v1522 = vld [vmem:[%s622 + $0x80] sm:$0xff]
      %v1523 = vld [vmem:[%s622 + $0x88] sm:$0xff]
      %v1524 = vld [vmem:[%s622 + $0x90] sm:$0xff]
      %v1525 = vld [vmem:[%s622 + $0x98] sm:$0xff]
      %v1526 = vld [vmem:[%s622 + $0xa0] sm:$0xff]
      %v1527 = vld [vmem:[%s622 + $0xa8] sm:$0xff]
      %v1528 = vld [vmem:[%s622 + $0xb0] sm:$0xff]
      %v1529 = vld [vmem:[%s622 + $0xb8] sm:$0xff]
      %v1530 = vld [vmem:[%s622 + $0xc0] sm:$0xff]
      %v1531 = vld [vmem:[%s622 + $0xc8] sm:$0xff]
      %v1532 = vld [vmem:[%s622 + $0xd0] sm:$0xff]
      %v1533 = vld [vmem:[%s622 + $0xd8] sm:$0xff]
      %v1534 = vld [vmem:[%s622 + $0xe0] sm:$0xff]
      %v1535 = vld [vmem:[%s622 + $0xe8] sm:$0xff]
      %v1536 = vld [vmem:[%s622 + $0xf0] sm:$0xff]
      %v1537 = vld [vmem:[%s622 + $0xf8] sm:$0xff]
      %v1538 = vld [vmem:[%s622 + $0x100] sm:$0xff]
      %v1539 = vld [vmem:[%s622 + $0x108] sm:$0xff]
      %v1540 = vld [vmem:[%s622 + $0x110] sm:$0xff]
      %v1541 = vld [vmem:[%s622 + $0x118] sm:$0xff]
      %v1542 = vld [vmem:[%s622 + $0x120] sm:$0xff]
      %v1543 = vld [vmem:[%s622 + $0x128] sm:$0xff]
      %v1544 = vld [vmem:[%s622 + $0x130] sm:$0xff]
      %v1545 = vld [vmem:[%s622 + $0x138] sm:$0xff]
      %v1546 = vld [vmem:[%s622 + $0x140] sm:$0xff]
      %v1547 = vld [vmem:[%s622 + $0x148] sm:$0xff]
      %v1548 = vld [vmem:[%s622 + $0x150] sm:$0xff]
      %v1549 = vld [vmem:[%s622 + $0x158] sm:$0xff]
      %v1550 = vld [vmem:[%s622 + $0x160] sm:$0xff]
      %v1551 = vld [vmem:[%s622 + $0x168] sm:$0xff]
      %v1552 = vld [vmem:[%s622 + $0x170] sm:$0xff]
      %v1553 = vld [vmem:[%s622 + $0x178] sm:$0xff]
      %v1554 = vld [vmem:[%s622 + $0x180] sm:$0xff]
      %v1555 = vld [vmem:[%s622 + $0x188] sm:$0xff]
      %v1556 = vld [vmem:[%s622 + $0x190] sm:$0xff]
      %v1557 = vld [vmem:[%s622 + $0x198] sm:$0xff]
      %v1558 = vld [vmem:[%s622 + $0x1a0] sm:$0xff]
      %v1559 = vld [vmem:[%s622 + $0x1a8] sm:$0xff]
      %v1560 = vld [vmem:[%s622 + $0x1b0] sm:$0xff]
      %v1561 = vld [vmem:[%s622 + $0x1b8] sm:$0xff]
      %v1562 = vld [vmem:[%s622 + $0x1c0] sm:$0xff]
      %v1563 = vld [vmem:[%s622 + $0x1c8] sm:$0xff]
      %v1564 = vld [vmem:[%s622 + $0x1d0] sm:$0xff]
      %v1565 = vld [vmem:[%s622 + $0x1d8] sm:$0xff]
      %v1566 = vld [vmem:[%s622 + $0x1e0] sm:$0xff]
      %v1567 = vld [vmem:[%s622 + $0x1e8] sm:$0xff]
      %v1568 = vld [vmem:[%s622 + $0x1f0] sm:$0xff]
      %v1569 = vld [vmem:[%s622 + $0x1f8] sm:$0xff]
      %v1570 = vld [vmem:[%s622 + $0x200] sm:$0xff]
      %v1571 = vld [vmem:[%s622 + $0x208] sm:$0xff]
      %v1572 = vld [vmem:[%s622 + $0x210] sm:$0xff]
      %v1573 = vld [vmem:[%s622 + $0x218] sm:$0xff]
      %v1574 = vld [vmem:[%s622 + $0x220] sm:$0xff]
      %v1575 = vld [vmem:[%s622 + $0x228] sm:$0xff]
      %v1576 = vld [vmem:[%s622 + $0x230] sm:$0xff]
      %v1577 = vld [vmem:[%s622 + $0x238] sm:$0xff]
      %v1578 = vld [vmem:[%s6] sm:$0xff]
      %v1579 = vld [vmem:[%s6 + $0x8] sm:$0xff]
      %v1580 = vld [vmem:[%s6 + $0x10] sm:$0xff]
      %v1581 = vld [vmem:[%s6 + $0x18] sm:$0xff]
      %v1582 = vld [vmem:[%s6 + $0x20] sm:$0xff]
      %v1583 = vld [vmem:[%s6 + $0x28] sm:$0xff]
      %v1584 = vld [vmem:[%s6 + $0x30] sm:$0xff]
      %v1585 = vld [vmem:[%s6 + $0x38] sm:$0xff]
      %1587 = vset.pattern.permute.xlu0 0
      %1588 = vperm.xlu0 %1587, %v1578
      %v1589 = vpop.permute.xlu0 %1588
      %1592 = vset.pattern.permute.xlu0 0
      %1593 = vperm.xlu0 %1592, %v1579
      %v1594 = vpop.permute.xlu0 %1593
      %1597 = vset.pattern.permute.xlu0 0
      %1598 = vperm.xlu0 %1597, %v1580
      %v1599 = vpop.permute.xlu0 %1598
      %1602 = vset.pattern.permute.xlu0 0
      %1603 = vperm.xlu0 %1602, %v1581
      %v1604 = vpop.permute.xlu0 %1603
      %1607 = vset.pattern.permute.xlu0 0
      %1608 = vperm.xlu0 %1607, %v1582
      %v1609 = vpop.permute.xlu0 %1608
      %1612 = vset.pattern.permute.xlu0 0
      %1613 = vperm.xlu0 %1612, %v1583
      %v1614 = vpop.permute.xlu0 %1613
      %1617 = vset.pattern.permute.xlu0 0
      %1618 = vperm.xlu0 %1617, %v1584
      %v1619 = vpop.permute.xlu0 %1618
      %1622 = vset.pattern.permute.xlu0 0
      %1623 = vperm.xlu0 %1622, %v1585
      %v1624 = vpop.permute.xlu0 %1623
      %v1634 = vunpack.c.l.b16 %v1498
      %v1635 = vunpack.c.h.b16 %v1498
      %v1636 = vunpack.c.l.b16 %v1499
      %v1637 = vunpack.c.h.b16 %v1499
      %v1638 = vunpack.c.l.b16 %v1500
      %v1639 = vunpack.c.h.b16 %v1500
      %v1640 = vunpack.c.l.b16 %v1501
      %v1641 = vunpack.c.h.b16 %v1501
      %v1642 = vunpack.c.l.b16 %v1502
      %v1643 = vunpack.c.h.b16 %v1502
      %v1644 = vunpack.c.l.b16 %v1503
      %v1645 = vunpack.c.h.b16 %v1503
      %v1646 = vunpack.c.l.b16 %v1504
      %v1647 = vunpack.c.h.b16 %v1504
      %v1648 = vunpack.c.l.b16 %v1505
      %v1649 = vunpack.c.h.b16 %v1505
      %v1650 = vpack.c.b16 %v1636, %v1634
      %v1651 = vpack.c.b16 %v1637, %v1635
      %v1652 = vpack.c.b16 %v1640, %v1638
      %v1653 = vpack.c.b16 %v1641, %v1639
      %v1654 = vpack.c.b16 %v1644, %v1642
      %v1655 = vpack.c.b16 %v1645, %v1643
      %v1656 = vpack.c.b16 %v1648, %v1646
      %v1657 = vpack.c.b16 %v1649, %v1647
      %v1734 = vunpack.c.l.b16 %v1506
      %v1735 = vunpack.c.h.b16 %v1506
      %v1736 = vunpack.c.l.b16 %v1507
      %v1737 = vunpack.c.h.b16 %v1507
      %v1738 = vunpack.c.l.b16 %v1508
      %v1739 = vunpack.c.h.b16 %v1508
      %v1740 = vunpack.c.l.b16 %v1509
      %v1741 = vunpack.c.h.b16 %v1509
      %v1742 = vunpack.c.l.b16 %v1510
      %v1743 = vunpack.c.h.b16 %v1510
      %v1744 = vunpack.c.l.b16 %v1511
      %v1745 = vunpack.c.h.b16 %v1511
      %v1746 = vunpack.c.l.b16 %v1512
      %v1747 = vunpack.c.h.b16 %v1512
      %v1748 = vunpack.c.l.b16 %v1513
      %v1749 = vunpack.c.h.b16 %v1513
      %v1750 = vunpack.c.l.b16 %v1514
      %v1751 = vunpack.c.h.b16 %v1514
      %v1752 = vunpack.c.l.b16 %v1515
      %v1753 = vunpack.c.h.b16 %v1515
      %v1754 = vunpack.c.l.b16 %v1516
      %v1755 = vunpack.c.h.b16 %v1516
      %v1756 = vunpack.c.l.b16 %v1517
      %v1757 = vunpack.c.h.b16 %v1517
      %v1758 = vunpack.c.l.b16 %v1518
      %v1759 = vunpack.c.h.b16 %v1518
      %v1760 = vunpack.c.l.b16 %v1519
      %v1761 = vunpack.c.h.b16 %v1519
      %v1762 = vunpack.c.l.b16 %v1520
      %v1763 = vunpack.c.h.b16 %v1520
      %v1764 = vunpack.c.l.b16 %v1521
      %v1765 = vunpack.c.h.b16 %v1521
      %v1766 = vunpack.c.l.b16 %v1522
      %v1767 = vunpack.c.h.b16 %v1522
      %v1768 = vunpack.c.l.b16 %v1523
      %v1769 = vunpack.c.h.b16 %v1523
      %v1770 = vunpack.c.l.b16 %v1524
      %v1771 = vunpack.c.h.b16 %v1524
      %v1772 = vunpack.c.l.b16 %v1525
      %v1773 = vunpack.c.h.b16 %v1525
      %v1774 = vunpack.c.l.b16 %v1526
      %v1775 = vunpack.c.h.b16 %v1526
      %v1776 = vunpack.c.l.b16 %v1527
      %v1777 = vunpack.c.h.b16 %v1527
      %v1778 = vunpack.c.l.b16 %v1528
      %v1779 = vunpack.c.h.b16 %v1528
      %v1780 = vunpack.c.l.b16 %v1529
      %v1781 = vunpack.c.h.b16 %v1529
      %v1782 = vunpack.c.l.b16 %v1530
      %v1783 = vunpack.c.h.b16 %v1530
      %v1784 = vunpack.c.l.b16 %v1531
      %v1785 = vunpack.c.h.b16 %v1531
      %v1786 = vunpack.c.l.b16 %v1532
      %v1787 = vunpack.c.h.b16 %v1532
      %v1788 = vunpack.c.l.b16 %v1533
      %v1789 = vunpack.c.h.b16 %v1533
      %v1790 = vunpack.c.l.b16 %v1534
      %v1791 = vunpack.c.h.b16 %v1534
      %v1792 = vunpack.c.l.b16 %v1535
      %v1793 = vunpack.c.h.b16 %v1535
      %v1794 = vunpack.c.l.b16 %v1536
      %v1795 = vunpack.c.h.b16 %v1536
      %v1796 = vunpack.c.l.b16 %v1537
      %v1797 = vunpack.c.h.b16 %v1537
      %v1798 = vunpack.c.l.b16 %v1538
      %v1799 = vunpack.c.h.b16 %v1538
      %v1800 = vunpack.c.l.b16 %v1539
      %v1801 = vunpack.c.h.b16 %v1539
      %v1802 = vunpack.c.l.b16 %v1540
      %v1803 = vunpack.c.h.b16 %v1540
      %v1804 = vunpack.c.l.b16 %v1541
      %v1805 = vunpack.c.h.b16 %v1541
      %v1806 = vunpack.c.l.b16 %v1542
      %v1807 = vunpack.c.h.b16 %v1542
      %v1808 = vunpack.c.l.b16 %v1543
      %v1809 = vunpack.c.h.b16 %v1543
      %v1810 = vunpack.c.l.b16 %v1544
      %v1811 = vunpack.c.h.b16 %v1544
      %v1812 = vunpack.c.l.b16 %v1545
      %v1813 = vunpack.c.h.b16 %v1545
      %v1814 = vunpack.c.l.b16 %v1546
      %v1815 = vunpack.c.h.b16 %v1546
      %v1816 = vunpack.c.l.b16 %v1547
      %v1817 = vunpack.c.h.b16 %v1547
      %v1818 = vunpack.c.l.b16 %v1548
      %v1819 = vunpack.c.h.b16 %v1548
      %v1820 = vunpack.c.l.b16 %v1549
      %v1821 = vunpack.c.h.b16 %v1549
      %v1822 = vunpack.c.l.b16 %v1550
      %v1823 = vunpack.c.h.b16 %v1550
      %v1824 = vunpack.c.l.b16 %v1551
      %v1825 = vunpack.c.h.b16 %v1551
      %v1826 = vunpack.c.l.b16 %v1552
      %v1827 = vunpack.c.h.b16 %v1552
      %v1828 = vunpack.c.l.b16 %v1553
      %v1829 = vunpack.c.h.b16 %v1553
      %v1830 = vunpack.c.l.b16 %v1554
      %v1831 = vunpack.c.h.b16 %v1554
      %v1832 = vunpack.c.l.b16 %v1555
      %v1833 = vunpack.c.h.b16 %v1555
      %v1834 = vunpack.c.l.b16 %v1556
      %v1835 = vunpack.c.h.b16 %v1556
      %v1836 = vunpack.c.l.b16 %v1557
      %v1837 = vunpack.c.h.b16 %v1557
      %v1838 = vunpack.c.l.b16 %v1558
      %v1839 = vunpack.c.h.b16 %v1558
      %v1840 = vunpack.c.l.b16 %v1559
      %v1841 = vunpack.c.h.b16 %v1559
      %v1842 = vunpack.c.l.b16 %v1560
      %v1843 = vunpack.c.h.b16 %v1560
      %v1844 = vunpack.c.l.b16 %v1561
      %v1845 = vunpack.c.h.b16 %v1561
      %v1846 = vunpack.c.l.b16 %v1562
      %v1847 = vunpack.c.h.b16 %v1562
      %v1848 = vunpack.c.l.b16 %v1563
      %v1849 = vunpack.c.h.b16 %v1563
      %v1850 = vunpack.c.l.b16 %v1564
      %v1851 = vunpack.c.h.b16 %v1564
      %v1852 = vunpack.c.l.b16 %v1565
      %v1853 = vunpack.c.h.b16 %v1565
      %v1854 = vunpack.c.l.b16 %v1566
      %v1855 = vunpack.c.h.b16 %v1566
      %v1856 = vunpack.c.l.b16 %v1567
      %v1857 = vunpack.c.h.b16 %v1567
      %v1858 = vunpack.c.l.b16 %v1568
      %v1859 = vunpack.c.h.b16 %v1568
      %v1860 = vunpack.c.l.b16 %v1569
      %v1861 = vunpack.c.h.b16 %v1569
      %v1862 = vunpack.c.l.b16 %v1570
      %v1863 = vunpack.c.h.b16 %v1570
      %v1864 = vunpack.c.l.b16 %v1571
      %v1865 = vunpack.c.h.b16 %v1571
      %v1866 = vunpack.c.l.b16 %v1572
      %v1867 = vunpack.c.h.b16 %v1572
      %v1868 = vunpack.c.l.b16 %v1573
      %v1869 = vunpack.c.h.b16 %v1573
      %v1870 = vunpack.c.l.b16 %v1574
      %v1871 = vunpack.c.h.b16 %v1574
      %v1872 = vunpack.c.l.b16 %v1575
      %v1873 = vunpack.c.h.b16 %v1575
      %v1874 = vunpack.c.l.b16 %v1576
      %v1875 = vunpack.c.h.b16 %v1576
      %v1876 = vunpack.c.l.b16 %v1577
      %v1877 = vunpack.c.h.b16 %v1577
      %v1878 = vpack.c.b16 %v1742, %v1734
      %v1879 = vpack.c.b16 %v1743, %v1735
      %v1880 = vpack.c.b16 %v1744, %v1736
      %v1881 = vpack.c.b16 %v1745, %v1737
      %v1882 = vpack.c.b16 %v1746, %v1738
      %v1883 = vpack.c.b16 %v1747, %v1739
      %v1884 = vpack.c.b16 %v1748, %v1740
      %v1885 = vpack.c.b16 %v1749, %v1741
      %v1886 = vpack.c.b16 %v1758, %v1750
      %v1887 = vpack.c.b16 %v1759, %v1751
      %v1888 = vpack.c.b16 %v1760, %v1752
      %v1889 = vpack.c.b16 %v1761, %v1753
      %v1890 = vpack.c.b16 %v1762, %v1754
      %v1891 = vpack.c.b16 %v1763, %v1755
      %v1892 = vpack.c.b16 %v1764, %v1756
      %v1893 = vpack.c.b16 %v1765, %v1757
      %v1894 = vpack.c.b16 %v1774, %v1766
      %v1895 = vpack.c.b16 %v1775, %v1767
      %v1896 = vpack.c.b16 %v1776, %v1768
      %v1897 = vpack.c.b16 %v1777, %v1769
      %v1898 = vpack.c.b16 %v1778, %v1770
      %v1899 = vpack.c.b16 %v1779, %v1771
      %v1900 = vpack.c.b16 %v1780, %v1772
      %v1901 = vpack.c.b16 %v1781, %v1773
      %v1902 = vpack.c.b16 %v1790, %v1782
      %v1903 = vpack.c.b16 %v1791, %v1783
      %v1904 = vpack.c.b16 %v1792, %v1784
      %v1905 = vpack.c.b16 %v1793, %v1785
      %v1906 = vpack.c.b16 %v1794, %v1786
      %v1907 = vpack.c.b16 %v1795, %v1787
      %v1908 = vpack.c.b16 %v1796, %v1788
      %v1909 = vpack.c.b16 %v1797, %v1789
      %v1910 = vpack.c.b16 %v1806, %v1798
      %v1911 = vpack.c.b16 %v1807, %v1799
      %v1912 = vpack.c.b16 %v1808, %v1800
      %v1913 = vpack.c.b16 %v1809, %v1801
      %v1914 = vpack.c.b16 %v1810, %v1802
      %v1915 = vpack.c.b16 %v1811, %v1803
      %v1916 = vpack.c.b16 %v1812, %v1804
      %v1917 = vpack.c.b16 %v1813, %v1805
      %v1918 = vpack.c.b16 %v1822, %v1814
      %v1919 = vpack.c.b16 %v1823, %v1815
      %v1920 = vpack.c.b16 %v1824, %v1816
      %v1921 = vpack.c.b16 %v1825, %v1817
      %v1922 = vpack.c.b16 %v1826, %v1818
      %v1923 = vpack.c.b16 %v1827, %v1819
      %v1924 = vpack.c.b16 %v1828, %v1820
      %v1925 = vpack.c.b16 %v1829, %v1821
      %v1926 = vpack.c.b16 %v1838, %v1830
      %v1927 = vpack.c.b16 %v1839, %v1831
      %v1928 = vpack.c.b16 %v1840, %v1832
      %v1929 = vpack.c.b16 %v1841, %v1833
      %v1930 = vpack.c.b16 %v1842, %v1834
      %v1931 = vpack.c.b16 %v1843, %v1835
      %v1932 = vpack.c.b16 %v1844, %v1836
      %v1933 = vpack.c.b16 %v1845, %v1837
      %v1934 = vpack.c.b16 %v1854, %v1846
      %v1935 = vpack.c.b16 %v1855, %v1847
      %v1936 = vpack.c.b16 %v1856, %v1848
      %v1937 = vpack.c.b16 %v1857, %v1849
      %v1938 = vpack.c.b16 %v1858, %v1850
      %v1939 = vpack.c.b16 %v1859, %v1851
      %v1940 = vpack.c.b16 %v1860, %v1852
      %v1941 = vpack.c.b16 %v1861, %v1853
      %v1942 = vpack.c.b16 %v1870, %v1862
      %v1943 = vpack.c.b16 %v1871, %v1863
      %v1944 = vpack.c.b16 %v1872, %v1864
      %v1945 = vpack.c.b16 %v1873, %v1865
      %v1946 = vpack.c.b16 %v1874, %v1866
      %v1947 = vpack.c.b16 %v1875, %v1867
      %v1948 = vpack.c.b16 %v1876, %v1868
      %v1949 = vpack.c.b16 %v1877, %v1869
      %v2023 = vsel %vm1193, %v1651, 0
      %v2026 = vsel %vm1193, %v1653, 0
      %v2029 = vsel %vm1193, %v1655, 0
      %v2032 = vsel %vm1193, %v1657, 0
      %2034 = vmatprep.subr.bf16.mxu0 %v1879
      %2035 = vmatpush1.bf16.msra.mxu0 %v1878
      %2036 = vmatprep.subr.bf16.mxu0 %v1887
      %2037 = vmatpush1.bf16.msra.mxu0 %v1886
      %2038 = vmatprep.subr.bf16.mxu0 %v1895
      %2039 = vmatpush1.bf16.msra.mxu0 %v1894
      %2040 = vmatprep.subr.bf16.mxu0 %v1903
      %2041 = vmatpush1.bf16.msra.mxu0 %v1902
      %2042 = vmatprep.subr.bf16.mxu0 %v1911
      %2043 = vmatpush1.bf16.msra.mxu0 %v1910
      %2044 = vmatprep.subr.bf16.mxu0 %v1919
      %2045 = vmatpush1.bf16.msra.mxu0 %v1918
      %2046 = vmatprep.subr.bf16.mxu0 %v1927
      %2047 = vmatpush1.bf16.msra.mxu0 %v1926
      %2048 = vmatprep.subr.bf16.mxu0 %v1935
      %2049 = vmatpush1.bf16.msra.mxu0 %v1934
      %2050 = vmatprep.subr.bf16.mxu0 %v1943
      %2051 = vmatpush1.bf16.msra.mxu0 %v1942
      %2052 = vmatprep.subr.bf16.mxu0 0
      %2053 = vmatpush1.bf16.msra.mxu0 0
      %2054 = vmatprep.subr.bf16.mxu0 0
      %2055 = vmatpush1.bf16.msra.mxu0 0
      %2056 = vmatprep.subr.bf16.mxu0 0
      %2057 = vmatpush1.bf16.msra.mxu0 0
      %2058 = vmatprep.subr.bf16.mxu0 0
      %2059 = vmatpush1.bf16.msra.mxu0 0
      %2060 = vmatprep.subr.bf16.mxu0 0
      %2061 = vmatpush1.bf16.msra.mxu0 0
      %2062 = vmatprep.subr.bf16.mxu0 0
      %2063 = vmatpush1.bf16.msra.mxu0 0
      %2064 = vmatprep.subr.bf16.mxu0 0
      %2065 = vmatpush1.bf16.msra.mxu0 0
      %2066 = vmatprep.mubr.bf16.mxu0 %v2023
      %2067 = vmatmul.mubr.bf16.gmra.mrb[0].mxu0 %v1650
      %v2068 = vpop.f32.mrb[0].mxu0
      %v2069 = vadd.f32 %v1589, %v2068
      %v2070 = vpop.f32.mrb[0].mxu0
      %v2071 = vadd.f32 %v1589, %v2070
      %v2072 = vpop.f32.mrb[0].mxu0
      %v2073 = vadd.f32 %v1594, %v2072
      %v2074 = vpop.f32.mrb[0].mxu0
      %v2075 = vadd.f32 %v1594, %v2074
      %2076 = vmatprep.mubr.bf16.mxu0 %v2026
      %2077 = vmatmul.mubr.bf16.gmra.mrb[0].mxu0 %v1652
      %v2078 = vpop.f32.mrb[0].mxu0
      %v2079 = vadd.f32 %v1599, %v2078
      %v2080 = vpop.f32.mrb[0].mxu0
      %v2081 = vadd.f32 %v1599, %v2080
      %v2082 = vpop.f32.mrb[0].mxu0
      %v2083 = vadd.f32 %v1604, %v2082
      %v2084 = vpop.f32.mrb[0].mxu0
      %v2085 = vadd.f32 %v1604, %v2084
      %2086 = vmatprep.mubr.bf16.mxu0 %v2029
      %2087 = vmatmul.mubr.bf16.gmra.mrb[0].mxu0 %v1654
      %v2088 = vpop.f32.mrb[0].mxu0
      %v2089 = vadd.f32 %v1609, %v2088
      %v2090 = vpop.f32.mrb[0].mxu0
      %v2091 = vadd.f32 %v1609, %v2090
      %v2092 = vpop.f32.mrb[0].mxu0
      %v2093 = vadd.f32 %v1614, %v2092
      %v2094 = vpop.f32.mrb[0].mxu0
      %v2095 = vadd.f32 %v1614, %v2094
      %2096 = vmatprep.mubr.bf16.mxu0 %v2032
      %2097 = vmatmul.mubr.bf16.gmra.mrb[0].mxu0 %v1656
      %v2098 = vpop.f32.mrb[0].mxu0
      %v2099 = vadd.f32 %v1619, %v2098
      %v2100 = vpop.f32.mrb[0].mxu0
      %v2101 = vadd.f32 %v1619, %v2100
      %v2102 = vpop.f32.mrb[0].mxu0
      %v2103 = vadd.f32 %v1624, %v2102
      %v2104 = vpop.f32.mrb[0].mxu0
      %v2105 = vadd.f32 %v1624, %v2104
      %2106 = vdwg.mxu0
      %2107 = vmatprep.subr.bf16.mxu0 %v1881
      %2108 = vmatpush1.bf16.msra.mxu0 %v1880
      %2109 = vmatprep.subr.bf16.mxu0 %v1889
      %2110 = vmatpush1.bf16.msra.mxu0 %v1888
      %2111 = vmatprep.subr.bf16.mxu0 %v1897
      %2112 = vmatpush1.bf16.msra.mxu0 %v1896
      %2113 = vmatprep.subr.bf16.mxu0 %v1905
      %2114 = vmatpush1.bf16.msra.mxu0 %v1904
      %2115 = vmatprep.subr.bf16.mxu0 %v1913
      %2116 = vmatpush1.bf16.msra.mxu0 %v1912
      %2117 = vmatprep.subr.bf16.mxu0 %v1921
      %2118 = vmatpush1.bf16.msra.mxu0 %v1920
      %2119 = vmatprep.subr.bf16.mxu0 %v1929
      %2120 = vmatpush1.bf16.msra.mxu0 %v1928
      %2121 = vmatprep.subr.bf16.mxu0 %v1937
      %2122 = vmatpush1.bf16.msra.mxu0 %v1936
      %2123 = vmatprep.subr.bf16.mxu0 %v1945
      %2124 = vmatpush1.bf16.msra.mxu0 %v1944
      %2125 = vmatprep.subr.bf16.mxu0 0
      %2126 = vmatpush1.bf16.msra.mxu0 0
      %2127 = vmatprep.subr.bf16.mxu0 0
      %2128 = vmatpush1.bf16.msra.mxu0 0
      %2129 = vmatprep.subr.bf16.mxu0 0
      %2130 = vmatpush1.bf16.msra.mxu0 0
      %2131 = vmatprep.subr.bf16.mxu0 0
      %2132 = vmatpush1.bf16.msra.mxu0 0
      %2133 = vmatprep.subr.bf16.mxu0 0
      %2134 = vmatpush1.bf16.msra.mxu0 0
      %2135 = vmatprep.subr.bf16.mxu0 0
      %2136 = vmatpush1.bf16.msra.mxu0 0
      %2137 = vmatprep.subr.bf16.mxu0 0
      %2138 = vmatpush1.bf16.msra.mxu0 0
      %2139 = vmatprep.mubr.bf16.mxu0 %v2023
      %2140 = vmatmul.mubr.bf16.gmra.mrb[0].mxu0 %v1650
      %v2141 = vpop.f32.mrb[0].mxu0
      %v2142 = vadd.f32 %v1589, %v2141
      %v2143 = vpop.f32.mrb[0].mxu0
      %v2144 = vadd.f32 %v1589, %v2143
      %v2145 = vpop.f32.mrb[0].mxu0
      %v2146 = vadd.f32 %v1594, %v2145
      %v2147 = vpop.f32.mrb[0].mxu0
      %v2148 = vadd.f32 %v1594, %v2147
      %2149 = vmatprep.mubr.bf16.mxu0 %v2026
      %2150 = vmatmul.mubr.bf16.gmra.mrb[0].mxu0 %v1652
      %v2151 = vpop.f32.mrb[0].mxu0
      %v2152 = vadd.f32 %v1599, %v2151
      %v2153 = vpop.f32.mrb[0].mxu0
      %v2154 = vadd.f32 %v1599, %v2153
      %v2155 = vpop.f32.mrb[0].mxu0
      %v2156 = vadd.f32 %v1604, %v2155
      %v2157 = vpop.f32.mrb[0].mxu0
      %v2158 = vadd.f32 %v1604, %v2157
      %2159 = vmatprep.mubr.bf16.mxu0 %v2029
      %2160 = vmatmul.mubr.bf16.gmra.mrb[0].mxu0 %v1654
      %v2161 = vpop.f32.mrb[0].mxu0
      %v2162 = vadd.f32 %v1609, %v2161
      %v2163 = vpop.f32.mrb[0].mxu0
      %v2164 = vadd.f32 %v1609, %v2163
      %v2165 = vpop.f32.mrb[0].mxu0
      %v2166 = vadd.f32 %v1614, %v2165
      %v2167 = vpop.f32.mrb[0].mxu0
      %v2168 = vadd.f32 %v1614, %v2167
      %2169 = vmatprep.mubr.bf16.mxu0 %v2032
      %2170 = vmatmul.mubr.bf16.gmra.mrb[0].mxu0 %v1656
      %v2171 = vpop.f32.mrb[0].mxu0
      %v2172 = vadd.f32 %v1619, %v2171
      %v2173 = vpop.f32.mrb[0].mxu0
      %v2174 = vadd.f32 %v1619, %v2173
      %v2175 = vpop.f32.mrb[0].mxu0
      %v2176 = vadd.f32 %v1624, %v2175
      %v2177 = vpop.f32.mrb[0].mxu0
      %v2178 = vadd.f32 %v1624, %v2177
      %2179 = vdwg.mxu0
      %2180 = vmatprep.subr.bf16.mxu0 %v1883
      %2181 = vmatpush1.bf16.msra.mxu0 %v1882
      %2182 = vmatprep.subr.bf16.mxu0 %v1891
      %2183 = vmatpush1.bf16.msra.mxu0 %v1890
      %2184 = vmatprep.subr.bf16.mxu0 %v1899
      %2185 = vmatpush1.bf16.msra.mxu0 %v1898
      %2186 = vmatprep.subr.bf16.mxu0 %v1907
      %2187 = vmatpush1.bf16.msra.mxu0 %v1906
      %2188 = vmatprep.subr.bf16.mxu0 %v1915
      %2189 = vmatpush1.bf16.msra.mxu0 %v1914
      %2190 = vmatprep.subr.bf16.mxu0 %v1923
      %2191 = vmatpush1.bf16.msra.mxu0 %v1922
      %2192 = vmatprep.subr.bf16.mxu0 %v1931
      %2193 = vmatpush1.bf16.msra.mxu0 %v1930
      %2194 = vmatprep.subr.bf16.mxu0 %v1939
      %2195 = vmatpush1.bf16.msra.mxu0 %v1938
      %2196 = vmatprep.subr.bf16.mxu0 %v1947
      %2197 = vmatpush1.bf16.msra.mxu0 %v1946
      %2198 = vmatprep.subr.bf16.mxu0 0
      %2199 = vmatpush1.bf16.msra.mxu0 0
      %2200 = vmatprep.subr.bf16.mxu0 0
      %2201 = vmatpush1.bf16.msra.mxu0 0
      %2202 = vmatprep.subr.bf16.mxu0 0
      %2203 = vmatpush1.bf16.msra.mxu0 0
      %2204 = vmatprep.subr.bf16.mxu0 0
      %2205 = vmatpush1.bf16.msra.mxu0 0
      %2206 = vmatprep.subr.bf16.mxu0 0
      %2207 = vmatpush1.bf16.msra.mxu0 0
      %2208 = vmatprep.subr.bf16.mxu0 0
      %2209 = vmatpush1.bf16.msra.mxu0 0
      %2210 = vmatprep.subr.bf16.mxu0 0
      %2211 = vmatpush1.bf16.msra.mxu0 0
      %2212 = vmatprep.mubr.bf16.mxu0 %v2023
      %2213 = vmatmul.mubr.bf16.gmra.mrb[0].mxu0 %v1650
      %v2214 = vpop.f32.mrb[0].mxu0
      %v2215 = vadd.f32 %v1589, %v2214
      %v2216 = vpop.f32.mrb[0].mxu0
      %v2217 = vadd.f32 %v1589, %v2216
      %v2218 = vpop.f32.mrb[0].mxu0
      %v2219 = vadd.f32 %v1594, %v2218
      %v2220 = vpop.f32.mrb[0].mxu0
      %v2221 = vadd.f32 %v1594, %v2220
      %2222 = vmatprep.mubr.bf16.mxu0 %v2026
      %2223 = vmatmul.mubr.bf16.gmra.mrb[0].mxu0 %v1652
      %v2224 = vpop.f32.mrb[0].mxu0
      %v2225 = vadd.f32 %v1599, %v2224
      %v2226 = vpop.f32.mrb[0].mxu0
      %v2227 = vadd.f32 %v1599, %v2226
      %v2228 = vpop.f32.mrb[0].mxu0
      %v2229 = vadd.f32 %v1604, %v2228
      %v2230 = vpop.f32.mrb[0].mxu0
      %v2231 = vadd.f32 %v1604, %v2230
      %2232 = vmatprep.mubr.bf16.mxu0 %v2029
      %2233 = vmatmul.mubr.bf16.gmra.mrb[0].mxu0 %v1654
      %v2234 = vpop.f32.mrb[0].mxu0
      %v2235 = vadd.f32 %v1609, %v2234
      %v2236 = vpop.f32.mrb[0].mxu0
      %v2237 = vadd.f32 %v1609, %v2236
      %v2238 = vpop.f32.mrb[0].mxu0
      %v2239 = vadd.f32 %v1614, %v2238
      %v2240 = vpop.f32.mrb[0].mxu0
      %v2241 = vadd.f32 %v1614, %v2240
      %2242 = vmatprep.mubr.bf16.mxu0 %v2032
      %2243 = vmatmul.mubr.bf16.gmra.mrb[0].mxu0 %v1656
      %v2244 = vpop.f32.mrb[0].mxu0
      %v2245 = vadd.f32 %v1619, %v2244
      %v2246 = vpop.f32.mrb[0].mxu0
      %v2247 = vadd.f32 %v1619, %v2246
      %v2248 = vpop.f32.mrb[0].mxu0
      %v2249 = vadd.f32 %v1624, %v2248
      %v2250 = vpop.f32.mrb[0].mxu0
      %v2251 = vadd.f32 %v1624, %v2250
      %2252 = vdwg.mxu0
      %2253 = vmatprep.subr.bf16.mxu0 %v1885
      %2254 = vmatpush1.bf16.msra.mxu0 %v1884
      %2255 = vmatprep.subr.bf16.mxu0 %v1893
      %2256 = vmatpush1.bf16.msra.mxu0 %v1892
      %2257 = vmatprep.subr.bf16.mxu0 %v1901
      %2258 = vmatpush1.bf16.msra.mxu0 %v1900
      %2259 = vmatprep.subr.bf16.mxu0 %v1909
      %2260 = vmatpush1.bf16.msra.mxu0 %v1908
      %2261 = vmatprep.subr.bf16.mxu0 %v1917
      %2262 = vmatpush1.bf16.msra.mxu0 %v1916
      %2263 = vmatprep.subr.bf16.mxu0 %v1925
      %2264 = vmatpush1.bf16.msra.mxu0 %v1924
      %2265 = vmatprep.subr.bf16.mxu0 %v1933
      %2266 = vmatpush1.bf16.msra.mxu0 %v1932
      %2267 = vmatprep.subr.bf16.mxu0 %v1941
      %2268 = vmatpush1.bf16.msra.mxu0 %v1940
      %2269 = vmatprep.subr.bf16.mxu0 %v1949
      %2270 = vmatpush1.bf16.msra.mxu0 %v1948
      %2271 = vmatprep.subr.bf16.mxu0 0
      %2272 = vmatpush1.bf16.msra.mxu0 0
      %2273 = vmatprep.subr.bf16.mxu0 0
      %2274 = vmatpush1.bf16.msra.mxu0 0
      %2275 = vmatprep.subr.bf16.mxu0 0
      %2276 = vmatpush1.bf16.msra.mxu0 0
      %2277 = vmatprep.subr.bf16.mxu0 0
      %2278 = vmatpush1.bf16.msra.mxu0 0
      %2279 = vmatprep.subr.bf16.mxu0 0
      %2280 = vmatpush1.bf16.msra.mxu0 0
      %2281 = vmatprep.subr.bf16.mxu0 0
      %2282 = vmatpush1.bf16.msra.mxu0 0
      %2283 = vmatprep.subr.bf16.mxu0 0
      %2284 = vmatpush1.bf16.msra.mxu0 0
      %2285 = vmatprep.mubr.bf16.mxu0 %v2023
      %2286 = vmatmul.mubr.bf16.gmra.mrb[0].mxu0 %v1650
      %v2287 = vpop.f32.mrb[0].mxu0
      %v2288 = vadd.f32 %v1589, %v2287
      %v2289 = vpop.f32.mrb[0].mxu0
      %v2290 = vadd.f32 %v1589, %v2289
      %v2291 = vpop.f32.mrb[0].mxu0
      %v2292 = vadd.f32 %v1594, %v2291
      %v2293 = vpop.f32.mrb[0].mxu0
      %v2294 = vadd.f32 %v1594, %v2293
      %2295 = vmatprep.mubr.bf16.mxu0 %v2026
      %2296 = vmatmul.mubr.bf16.gmra.mrb[0].mxu0 %v1652
      %v2297 = vpop.f32.mrb[0].mxu0
      %v2298 = vadd.f32 %v1599, %v2297
      %v2299 = vpop.f32.mrb[0].mxu0
      %v2300 = vadd.f32 %v1599, %v2299
      %v2301 = vpop.f32.mrb[0].mxu0
      %v2302 = vadd.f32 %v1604, %v2301
      %v2303 = vpop.f32.mrb[0].mxu0
      %v2304 = vadd.f32 %v1604, %v2303
      %2305 = vmatprep.mubr.bf16.mxu0 %v2029
      %2306 = vmatmul.mubr.bf16.gmra.mrb[0].mxu0 %v1654
      %v2307 = vpop.f32.mrb[0].mxu0
      %v2308 = vadd.f32 %v1609, %v2307
      %v2309 = vpop.f32.mrb[0].mxu0
      %v2310 = vadd.f32 %v1609, %v2309
      %v2311 = vpop.f32.mrb[0].mxu0
      %v2312 = vadd.f32 %v1614, %v2311
      %v2313 = vpop.f32.mrb[0].mxu0
      %v2314 = vadd.f32 %v1614, %v2313
      %2315 = vmatprep.mubr.bf16.mxu0 %v2032
      %2316 = vmatmul.mubr.bf16.gmra.mrb[0].mxu0 %v1656
      %v2317 = vpop.f32.mrb[0].mxu0
      %v2318 = vadd.f32 %v1619, %v2317
      %v2319 = vpop.f32.mrb[0].mxu0
      %v2320 = vadd.f32 %v1619, %v2319
      %v2321 = vpop.f32.mrb[0].mxu0
      %v2322 = vadd.f32 %v1624, %v2321
      %v2323 = vpop.f32.mrb[0].mxu0
      %v2324 = vadd.f32 %v1624, %v2323
      %2325 = vdwg.mxu0
      %v2326 = vld [vmem:[%s7] sm:$0xff]
      %v2327 = vld [vmem:[%s7 + $0x8] sm:$0xf]
      %v2328 = vld [vmem:[%s7 + $0xc] sm:$0xff]
      %v2329 = vld [vmem:[%s7 + $0x14] sm:$0xf]
      %v2330 = vld [vmem:[%s7 + $0x18] sm:$0xff]
      %v2331 = vld [vmem:[%s7 + $0x20] sm:$0xf]
      %v2332 = vld [vmem:[%s7 + $0x24] sm:$0xff]
      %v2333 = vld [vmem:[%s7 + $0x2c] sm:$0xf]
      %v2334 = vld [vmem:[%s632] sm:$0xff]
      %v2335 = vld [vmem:[%s632 + $0x8] sm:$0xff]
      %v2336 = vld [vmem:[%s632 + $0x10] sm:$0xff]
      %v2337 = vld [vmem:[%s632 + $0x18] sm:$0xff]
      %v2338 = vld [vmem:[%s632 + $0x20] sm:$0xff]
      %v2339 = vld [vmem:[%s632 + $0x28] sm:$0xff]
      %v2340 = vld [vmem:[%s632 + $0x30] sm:$0xff]
      %v2341 = vld [vmem:[%s632 + $0x38] sm:$0xff]
      %v2342 = vld [vmem:[%s632 + $0x40] sm:$0xff]
      %v2343 = vld [vmem:[%s632 + $0x48] sm:$0xff]
      %v2344 = vld [vmem:[%s632 + $0x50] sm:$0xff]
      %v2345 = vld [vmem:[%s632 + $0x58] sm:$0xff]
      %v2346 = vld [vmem:[%s632 + $0x60] sm:$0xff]
      %v2347 = vld [vmem:[%s632 + $0x68] sm:$0xff]
      %v2348 = vld [vmem:[%s632 + $0x70] sm:$0xff]
      %v2349 = vld [vmem:[%s632 + $0x78] sm:$0xff]
      %v2350 = vld [vmem:[%s632 + $0x80] sm:$0xff]
      %v2351 = vld [vmem:[%s632 + $0x88] sm:$0xff]
      %v2352 = vld [vmem:[%s632 + $0x90] sm:$0xff]
      %v2353 = vld [vmem:[%s632 + $0x98] sm:$0xff]
      %v2354 = vld [vmem:[%s632 + $0xa0] sm:$0xff]
      %v2355 = vld [vmem:[%s632 + $0xa8] sm:$0xff]
      %v2356 = vld [vmem:[%s632 + $0xb0] sm:$0xff]
      %v2357 = vld [vmem:[%s632 + $0xb8] sm:$0xff]
      %v2358 = vld [vmem:[%s632 + $0xc0] sm:$0xff]
      %v2359 = vld [vmem:[%s632 + $0xc8] sm:$0xff]
      %v2360 = vld [vmem:[%s632 + $0xd0] sm:$0xff]
      %v2361 = vld [vmem:[%s632 + $0xd8] sm:$0xff]
      %v2362 = vld [vmem:[%s632 + $0xe0] sm:$0xff]
      %v2363 = vld [vmem:[%s632 + $0xe8] sm:$0xff]
      %v2364 = vld [vmem:[%s632 + $0xf0] sm:$0xff]
      %v2365 = vld [vmem:[%s632 + $0xf8] sm:$0xff]
      %v2366 = vld [vmem:[%s632 + $0x100] sm:$0xff]
      %v2367 = vld [vmem:[%s632 + $0x108] sm:$0xff]
      %v2368 = vld [vmem:[%s632 + $0x110] sm:$0xff]
      %v2369 = vld [vmem:[%s632 + $0x118] sm:$0xff]
      %v2370 = vld [vmem:[%s632 + $0x120] sm:$0xff]
      %v2371 = vld [vmem:[%s632 + $0x128] sm:$0xff]
      %v2372 = vld [vmem:[%s632 + $0x130] sm:$0xff]
      %v2373 = vld [vmem:[%s632 + $0x138] sm:$0xff]
      %v2374 = vld [vmem:[%s632 + $0x140] sm:$0xff]
      %v2375 = vld [vmem:[%s632 + $0x148] sm:$0xff]
      %v2376 = vld [vmem:[%s632 + $0x150] sm:$0xff]
      %v2377 = vld [vmem:[%s632 + $0x158] sm:$0xff]
      %v2378 = vld [vmem:[%s632 + $0x160] sm:$0xff]
      %v2379 = vld [vmem:[%s632 + $0x168] sm:$0xff]
      %v2380 = vld [vmem:[%s632 + $0x170] sm:$0xff]
      %v2381 = vld [vmem:[%s632 + $0x178] sm:$0xff]
      %v2382 = vld [vmem:[%s632 + $0x180] sm:$0xff]
      %v2383 = vld [vmem:[%s632 + $0x188] sm:$0xff]
      %v2384 = vld [vmem:[%s632 + $0x190] sm:$0xff]
      %v2385 = vld [vmem:[%s632 + $0x198] sm:$0xff]
      %v2386 = vld [vmem:[%s632 + $0x1a0] sm:$0xff]
      %v2387 = vld [vmem:[%s632 + $0x1a8] sm:$0xff]
      %v2388 = vld [vmem:[%s632 + $0x1b0] sm:$0xff]
      %v2389 = vld [vmem:[%s632 + $0x1b8] sm:$0xff]
      %v2390 = vld [vmem:[%s632 + $0x1c0] sm:$0xff]
      %v2391 = vld [vmem:[%s632 + $0x1c8] sm:$0xff]
      %v2392 = vld [vmem:[%s632 + $0x1d0] sm:$0xff]
      %v2393 = vld [vmem:[%s632 + $0x1d8] sm:$0xff]
      %v2394 = vld [vmem:[%s632 + $0x1e0] sm:$0xff]
      %v2395 = vld [vmem:[%s632 + $0x1e8] sm:$0xff]
      %v2396 = vld [vmem:[%s632 + $0x1f0] sm:$0xff]
      %v2397 = vld [vmem:[%s632 + $0x1f8] sm:$0xff]
      %v2398 = vld [vmem:[%s632 + $0x200] sm:$0xff]
      %v2399 = vld [vmem:[%s632 + $0x208] sm:$0xff]
      %v2400 = vld [vmem:[%s632 + $0x210] sm:$0xff]
      %v2401 = vld [vmem:[%s632 + $0x218] sm:$0xff]
      %v2402 = vld [vmem:[%s632 + $0x220] sm:$0xff]
      %v2403 = vld [vmem:[%s632 + $0x228] sm:$0xff]
      %v2404 = vld [vmem:[%s632 + $0x230] sm:$0xff]
      %v2405 = vld [vmem:[%s632 + $0x238] sm:$0xff]
      %v2406 = vld [vmem:[%s632 + $0x240] sm:$0xff]
      %v2407 = vld [vmem:[%s632 + $0x248] sm:$0xff]
      %v2408 = vld [vmem:[%s632 + $0x250] sm:$0xff]
      %v2409 = vld [vmem:[%s632 + $0x258] sm:$0xff]
      %v2410 = vld [vmem:[%s632 + $0x260] sm:$0xff]
      %v2411 = vld [vmem:[%s632 + $0x268] sm:$0xff]
      %v2412 = vld [vmem:[%s632 + $0x270] sm:$0xff]
      %v2413 = vld [vmem:[%s632 + $0x278] sm:$0xff]
      %v2414 = vld [vmem:[%s632 + $0x280] sm:$0xff]
      %v2415 = vld [vmem:[%s632 + $0x288] sm:$0xff]
      %v2416 = vld [vmem:[%s632 + $0x290] sm:$0xff]
      %v2417 = vld [vmem:[%s632 + $0x298] sm:$0xff]
      %v2418 = vld [vmem:[%s632 + $0x2a0] sm:$0xff]
      %v2419 = vld [vmem:[%s632 + $0x2a8] sm:$0xff]
      %v2420 = vld [vmem:[%s632 + $0x2b0] sm:$0xff]
      %v2421 = vld [vmem:[%s632 + $0x2b8] sm:$0xff]
      %v2422 = vld [vmem:[%s632 + $0x2c0] sm:$0xff]
      %v2423 = vld [vmem:[%s632 + $0x2c8] sm:$0xff]
      %v2424 = vld [vmem:[%s632 + $0x2d0] sm:$0xff]
      %v2425 = vld [vmem:[%s632 + $0x2d8] sm:$0xff]
      %v2426 = vld [vmem:[%s632 + $0x2e0] sm:$0xff]
      %v2427 = vld [vmem:[%s632 + $0x2e8] sm:$0xff]
      %v2428 = vld [vmem:[%s632 + $0x2f0] sm:$0xff]
      %v2429 = vld [vmem:[%s632 + $0x2f8] sm:$0xff]
      %v2430 = vld [vmem:[%s632 + $0x300] sm:$0xff]
      %v2431 = vld [vmem:[%s632 + $0x308] sm:$0xff]
      %v2432 = vld [vmem:[%s632 + $0x310] sm:$0xff]
      %v2433 = vld [vmem:[%s632 + $0x318] sm:$0xff]
      %v2434 = vld [vmem:[%s632 + $0x320] sm:$0xff]
      %v2435 = vld [vmem:[%s632 + $0x328] sm:$0xff]
      %v2436 = vld [vmem:[%s632 + $0x330] sm:$0xff]
      %v2437 = vld [vmem:[%s632 + $0x338] sm:$0xff]
      %v2438 = vld [vmem:[%s632 + $0x340] sm:$0xff]
      %v2439 = vld [vmem:[%s632 + $0x348] sm:$0xff]
      %v2440 = vld [vmem:[%s632 + $0x350] sm:$0xff]
      %v2441 = vld [vmem:[%s632 + $0x358] sm:$0xff]
      %v2442 = vld [vmem:[%s632 + $0x360] sm:$0xff]
      %v2443 = vld [vmem:[%s632 + $0x368] sm:$0xff]
      %v2444 = vld [vmem:[%s632 + $0x370] sm:$0xff]
      %v2445 = vld [vmem:[%s632 + $0x378] sm:$0xff]
      %v2446 = vld [vmem:[%s632 + $0x380] sm:$0xff]
      %v2447 = vld [vmem:[%s632 + $0x388] sm:$0xff]
      %v2448 = vld [vmem:[%s632 + $0x390] sm:$0xff]
      %v2449 = vld [vmem:[%s632 + $0x398] sm:$0xff]
      %v2450 = vld [vmem:[%s632 + $0x3a0] sm:$0xff]
      %v2451 = vld [vmem:[%s632 + $0x3a8] sm:$0xff]
      %v2452 = vld [vmem:[%s632 + $0x3b0] sm:$0xff]
      %v2453 = vld [vmem:[%s632 + $0x3b8] sm:$0xff]
      %v2454 = vld [vmem:[%s632 + $0x3c0] sm:$0xff]
      %v2455 = vld [vmem:[%s632 + $0x3c8] sm:$0xff]
      %v2456 = vld [vmem:[%s632 + $0x3d0] sm:$0xff]
      %v2457 = vld [vmem:[%s632 + $0x3d8] sm:$0xff]
      %v2458 = vld [vmem:[%s632 + $0x3e0] sm:$0xff]
      %v2459 = vld [vmem:[%s632 + $0x3e8] sm:$0xff]
      %v2460 = vld [vmem:[%s632 + $0x3f0] sm:$0xff]
      %v2461 = vld [vmem:[%s632 + $0x3f8] sm:$0xff]
      %v2462 = vld [vmem:[%s632 + $0x400] sm:$0xff]
      %v2463 = vld [vmem:[%s632 + $0x408] sm:$0xff]
      %v2464 = vld [vmem:[%s632 + $0x410] sm:$0xff]
      %v2465 = vld [vmem:[%s632 + $0x418] sm:$0xff]
      %v2466 = vld [vmem:[%s632 + $0x420] sm:$0xff]
      %v2467 = vld [vmem:[%s632 + $0x428] sm:$0xff]
      %v2468 = vld [vmem:[%s632 + $0x430] sm:$0xff]
      %v2469 = vld [vmem:[%s632 + $0x438] sm:$0xff]
      %v2470 = vld [vmem:[%s632 + $0x440] sm:$0xff]
      %v2471 = vld [vmem:[%s632 + $0x448] sm:$0xff]
      %v2472 = vld [vmem:[%s632 + $0x450] sm:$0xff]
      %v2473 = vld [vmem:[%s632 + $0x458] sm:$0xff]
      %v2474 = vld [vmem:[%s632 + $0x460] sm:$0xff]
      %v2475 = vld [vmem:[%s632 + $0x468] sm:$0xff]
      %v2476 = vld [vmem:[%s632 + $0x470] sm:$0xff]
      %v2477 = vld [vmem:[%s632 + $0x478] sm:$0xff]
      %v2478 = vld [vmem:[%s8] sm:$0xff]
      %v2479 = vld [vmem:[%s8 + $0x8] sm:$0xff]
      %v2480 = vld [vmem:[%s8 + $0x10] sm:$0xff]
      %v2481 = vld [vmem:[%s8 + $0x18] sm:$0xff]
      %2483 = vset.pattern.permute.xlu0 0
      %2484 = vperm.xlu0 %2483, %v2478
      %v2485 = vpop.permute.xlu0 %2484
      %2488 = vset.pattern.permute.xlu0 0
      %2489 = vperm.xlu0 %2488, %v2479
      %v2490 = vpop.permute.xlu0 %2489
      %2493 = vset.pattern.permute.xlu0 0
      %2494 = vperm.xlu0 %2493, %v2480
      %v2495 = vpop.permute.xlu0 %2494
      %2498 = vset.pattern.permute.xlu0 0
      %2499 = vperm.xlu0 %2498, %v2481
      %v2500 = vpop.permute.xlu0 %2499
      %v2510 = vunpack.c.l.b16 %v2326
      %v2511 = vunpack.c.h.b16 %v2326
      %v2512 = vunpack.c.l.b16 %v2327
      %v2513 = vunpack.c.l.b16 %v2328
      %v2514 = vunpack.c.h.b16 %v2328
      %v2515 = vunpack.c.l.b16 %v2329
      %v2516 = vunpack.c.l.b16 %v2330
      %v2517 = vunpack.c.h.b16 %v2330
      %v2518 = vunpack.c.l.b16 %v2331
      %v2519 = vunpack.c.l.b16 %v2332
      %v2520 = vunpack.c.h.b16 %v2332
      %v2521 = vunpack.c.l.b16 %v2333
      %v2522 = vpack.c.b16 %v2513, %v2510
      %v2523 = vpack.c.b16 %v2514, %v2511
      %v2524 = vpack.c.b16 %v2515, %v2512
      %v2525 = vpack.c.b16 %v2519, %v2516
      %v2526 = vpack.c.b16 %v2520, %v2517
      %v2527 = vpack.c.b16 %v2521, %v2518
      %v2676 = vunpack.c.l.b16 %v2334
      %v2677 = vunpack.c.h.b16 %v2334
      %v2678 = vunpack.c.l.b16 %v2335
      %v2679 = vunpack.c.h.b16 %v2335
      %v2680 = vunpack.c.l.b16 %v2336
      %v2681 = vunpack.c.h.b16 %v2336
      %v2682 = vunpack.c.l.b16 %v2337
      %v2683 = vunpack.c.h.b16 %v2337
      %v2684 = vunpack.c.l.b16 %v2338
      %v2685 = vunpack.c.h.b16 %v2338
      %v2686 = vunpack.c.l.b16 %v2339
      %v2687 = vunpack.c.h.b16 %v2339
      %v2688 = vunpack.c.l.b16 %v2340
      %v2689 = vunpack.c.h.b16 %v2340
      %v2690 = vunpack.c.l.b16 %v2341
      %v2691 = vunpack.c.h.b16 %v2341
      %v2692 = vunpack.c.l.b16 %v2342
      %v2693 = vunpack.c.h.b16 %v2342
      %v2694 = vunpack.c.l.b16 %v2343
      %v2695 = vunpack.c.h.b16 %v2343
      %v2696 = vunpack.c.l.b16 %v2344
      %v2697 = vunpack.c.h.b16 %v2344
      %v2698 = vunpack.c.l.b16 %v2345
      %v2699 = vunpack.c.h.b16 %v2345
      %v2700 = vunpack.c.l.b16 %v2346
      %v2701 = vunpack.c.h.b16 %v2346
      %v2702 = vunpack.c.l.b16 %v2347
      %v2703 = vunpack.c.h.b16 %v2347
      %v2704 = vunpack.c.l.b16 %v2348
      %v2705 = vunpack.c.h.b16 %v2348
      %v2706 = vunpack.c.l.b16 %v2349
      %v2707 = vunpack.c.h.b16 %v2349
      %v2708 = vunpack.c.l.b16 %v2350
      %v2709 = vunpack.c.h.b16 %v2350
      %v2710 = vunpack.c.l.b16 %v2351
      %v2711 = vunpack.c.h.b16 %v2351
      %v2712 = vunpack.c.l.b16 %v2352
      %v2713 = vunpack.c.h.b16 %v2352
      %v2714 = vunpack.c.l.b16 %v2353
      %v2715 = vunpack.c.h.b16 %v2353
      %v2716 = vunpack.c.l.b16 %v2354
      %v2717 = vunpack.c.h.b16 %v2354
      %v2718 = vunpack.c.l.b16 %v2355
      %v2719 = vunpack.c.h.b16 %v2355
      %v2720 = vunpack.c.l.b16 %v2356
      %v2721 = vunpack.c.h.b16 %v2356
      %v2722 = vunpack.c.l.b16 %v2357
      %v2723 = vunpack.c.h.b16 %v2357
      %v2724 = vunpack.c.l.b16 %v2358
      %v2725 = vunpack.c.h.b16 %v2358
      %v2726 = vunpack.c.l.b16 %v2359
      %v2727 = vunpack.c.h.b16 %v2359
      %v2728 = vunpack.c.l.b16 %v2360
      %v2729 = vunpack.c.h.b16 %v2360
      %v2730 = vunpack.c.l.b16 %v2361
      %v2731 = vunpack.c.h.b16 %v2361
      %v2732 = vunpack.c.l.b16 %v2362
      %v2733 = vunpack.c.h.b16 %v2362
      %v2734 = vunpack.c.l.b16 %v2363
      %v2735 = vunpack.c.h.b16 %v2363
      %v2736 = vunpack.c.l.b16 %v2364
      %v2737 = vunpack.c.h.b16 %v2364
      %v2738 = vunpack.c.l.b16 %v2365
      %v2739 = vunpack.c.h.b16 %v2365
      %v2740 = vunpack.c.l.b16 %v2366
      %v2741 = vunpack.c.h.b16 %v2366
      %v2742 = vunpack.c.l.b16 %v2367
      %v2743 = vunpack.c.h.b16 %v2367
      %v2744 = vunpack.c.l.b16 %v2368
      %v2745 = vunpack.c.h.b16 %v2368
      %v2746 = vunpack.c.l.b16 %v2369
      %v2747 = vunpack.c.h.b16 %v2369
      %v2748 = vunpack.c.l.b16 %v2370
      %v2749 = vunpack.c.h.b16 %v2370
      %v2750 = vunpack.c.l.b16 %v2371
      %v2751 = vunpack.c.h.b16 %v2371
      %v2752 = vunpack.c.l.b16 %v2372
      %v2753 = vunpack.c.h.b16 %v2372
      %v2754 = vunpack.c.l.b16 %v2373
      %v2755 = vunpack.c.h.b16 %v2373
      %v2756 = vunpack.c.l.b16 %v2374
      %v2757 = vunpack.c.h.b16 %v2374
      %v2758 = vunpack.c.l.b16 %v2375
      %v2759 = vunpack.c.h.b16 %v2375
      %v2760 = vunpack.c.l.b16 %v2376
      %v2761 = vunpack.c.h.b16 %v2376
      %v2762 = vunpack.c.l.b16 %v2377
      %v2763 = vunpack.c.h.b16 %v2377
      %v2764 = vunpack.c.l.b16 %v2378
      %v2765 = vunpack.c.h.b16 %v2378
      %v2766 = vunpack.c.l.b16 %v2379
      %v2767 = vunpack.c.h.b16 %v2379
      %v2768 = vunpack.c.l.b16 %v2380
      %v2769 = vunpack.c.h.b16 %v2380
      %v2770 = vunpack.c.l.b16 %v2381
      %v2771 = vunpack.c.h.b16 %v2381
      %v2772 = vunpack.c.l.b16 %v2382
      %v2773 = vunpack.c.h.b16 %v2382
      %v2774 = vunpack.c.l.b16 %v2383
      %v2775 = vunpack.c.h.b16 %v2383
      %v2776 = vunpack.c.l.b16 %v2384
      %v2777 = vunpack.c.h.b16 %v2384
      %v2778 = vunpack.c.l.b16 %v2385
      %v2779 = vunpack.c.h.b16 %v2385
      %v2780 = vunpack.c.l.b16 %v2386
      %v2781 = vunpack.c.h.b16 %v2386
      %v2782 = vunpack.c.l.b16 %v2387
      %v2783 = vunpack.c.h.b16 %v2387
      %v2784 = vunpack.c.l.b16 %v2388
      %v2785 = vunpack.c.h.b16 %v2388
      %v2786 = vunpack.c.l.b16 %v2389
      %v2787 = vunpack.c.h.b16 %v2389
      %v2788 = vunpack.c.l.b16 %v2390
      %v2789 = vunpack.c.h.b16 %v2390
      %v2790 = vunpack.c.l.b16 %v2391
      %v2791 = vunpack.c.h.b16 %v2391
      %v2792 = vunpack.c.l.b16 %v2392
      %v2793 = vunpack.c.h.b16 %v2392
      %v2794 = vunpack.c.l.b16 %v2393
      %v2795 = vunpack.c.h.b16 %v2393
      %v2796 = vunpack.c.l.b16 %v2394
      %v2797 = vunpack.c.h.b16 %v2394
      %v2798 = vunpack.c.l.b16 %v2395
      %v2799 = vunpack.c.h.b16 %v2395
      %v2800 = vunpack.c.l.b16 %v2396
      %v2801 = vunpack.c.h.b16 %v2396
      %v2802 = vunpack.c.l.b16 %v2397
      %v2803 = vunpack.c.h.b16 %v2397
      %v2804 = vunpack.c.l.b16 %v2398
      %v2805 = vunpack.c.h.b16 %v2398
      %v2806 = vunpack.c.l.b16 %v2399
      %v2807 = vunpack.c.h.b16 %v2399
      %v2808 = vunpack.c.l.b16 %v2400
      %v2809 = vunpack.c.h.b16 %v2400
      %v2810 = vunpack.c.l.b16 %v2401
      %v2811 = vunpack.c.h.b16 %v2401
      %v2812 = vunpack.c.l.b16 %v2402
      %v2813 = vunpack.c.h.b16 %v2402
      %v2814 = vunpack.c.l.b16 %v2403
      %v2815 = vunpack.c.h.b16 %v2403
      %v2816 = vunpack.c.l.b16 %v2404
      %v2817 = vunpack.c.h.b16 %v2404
      %v2818 = vunpack.c.l.b16 %v2405
      %v2819 = vunpack.c.h.b16 %v2405
      %v2820 = vunpack.c.l.b16 %v2406
      %v2821 = vunpack.c.h.b16 %v2406
      %v2822 = vunpack.c.l.b16 %v2407
      %v2823 = vunpack.c.h.b16 %v2407
      %v2824 = vunpack.c.l.b16 %v2408
      %v2825 = vunpack.c.h.b16 %v2408
      %v2826 = vunpack.c.l.b16 %v2409
      %v2827 = vunpack.c.h.b16 %v2409
      %v2828 = vunpack.c.l.b16 %v2410
      %v2829 = vunpack.c.h.b16 %v2410
      %v2830 = vunpack.c.l.b16 %v2411
      %v2831 = vunpack.c.h.b16 %v2411
      %v2832 = vunpack.c.l.b16 %v2412
      %v2833 = vunpack.c.h.b16 %v2412
      %v2834 = vunpack.c.l.b16 %v2413
      %v2835 = vunpack.c.h.b16 %v2413
      %v2836 = vunpack.c.l.b16 %v2414
      %v2837 = vunpack.c.h.b16 %v2414
      %v2838 = vunpack.c.l.b16 %v2415
      %v2839 = vunpack.c.h.b16 %v2415
      %v2840 = vunpack.c.l.b16 %v2416
      %v2841 = vunpack.c.h.b16 %v2416
      %v2842 = vunpack.c.l.b16 %v2417
      %v2843 = vunpack.c.h.b16 %v2417
      %v2844 = vunpack.c.l.b16 %v2418
      %v2845 = vunpack.c.h.b16 %v2418
      %v2846 = vunpack.c.l.b16 %v2419
      %v2847 = vunpack.c.h.b16 %v2419
      %v2848 = vunpack.c.l.b16 %v2420
      %v2849 = vunpack.c.h.b16 %v2420
      %v2850 = vunpack.c.l.b16 %v2421
      %v2851 = vunpack.c.h.b16 %v2421
      %v2852 = vunpack.c.l.b16 %v2422
      %v2853 = vunpack.c.h.b16 %v2422
      %v2854 = vunpack.c.l.b16 %v2423
      %v2855 = vunpack.c.h.b16 %v2423
      %v2856 = vunpack.c.l.b16 %v2424
      %v2857 = vunpack.c.h.b16 %v2424
      %v2858 = vunpack.c.l.b16 %v2425
      %v2859 = vunpack.c.h.b16 %v2425
      %v2860 = vunpack.c.l.b16 %v2426
      %v2861 = vunpack.c.h.b16 %v2426
      %v2862 = vunpack.c.l.b16 %v2427
      %v2863 = vunpack.c.h.b16 %v2427
      %v2864 = vunpack.c.l.b16 %v2428
      %v2865 = vunpack.c.h.b16 %v2428
      %v2866 = vunpack.c.l.b16 %v2429
      %v2867 = vunpack.c.h.b16 %v2429
      %v2868 = vunpack.c.l.b16 %v2430
      %v2869 = vunpack.c.h.b16 %v2430
      %v2870 = vunpack.c.l.b16 %v2431
      %v2871 = vunpack.c.h.b16 %v2431
      %v2872 = vunpack.c.l.b16 %v2432
      %v2873 = vunpack.c.h.b16 %v2432
      %v2874 = vunpack.c.l.b16 %v2433
      %v2875 = vunpack.c.h.b16 %v2433
      %v2876 = vunpack.c.l.b16 %v2434
      %v2877 = vunpack.c.h.b16 %v2434
      %v2878 = vunpack.c.l.b16 %v2435
      %v2879 = vunpack.c.h.b16 %v2435
      %v2880 = vunpack.c.l.b16 %v2436
      %v2881 = vunpack.c.h.b16 %v2436
      %v2882 = vunpack.c.l.b16 %v2437
      %v2883 = vunpack.c.h.b16 %v2437
      %v2884 = vunpack.c.l.b16 %v2438
      %v2885 = vunpack.c.h.b16 %v2438
      %v2886 = vunpack.c.l.b16 %v2439
      %v2887 = vunpack.c.h.b16 %v2439
      %v2888 = vunpack.c.l.b16 %v2440
      %v2889 = vunpack.c.h.b16 %v2440
      %v2890 = vunpack.c.l.b16 %v2441
      %v2891 = vunpack.c.h.b16 %v2441
      %v2892 = vunpack.c.l.b16 %v2442
      %v2893 = vunpack.c.h.b16 %v2442
      %v2894 = vunpack.c.l.b16 %v2443
      %v2895 = vunpack.c.h.b16 %v2443
      %v2896 = vunpack.c.l.b16 %v2444
      %v2897 = vunpack.c.h.b16 %v2444
      %v2898 = vunpack.c.l.b16 %v2445
      %v2899 = vunpack.c.h.b16 %v2445
      %v2900 = vunpack.c.l.b16 %v2446
      %v2901 = vunpack.c.h.b16 %v2446
      %v2902 = vunpack.c.l.b16 %v2447
      %v2903 = vunpack.c.h.b16 %v2447
      %v2904 = vunpack.c.l.b16 %v2448
      %v2905 = vunpack.c.h.b16 %v2448
      %v2906 = vunpack.c.l.b16 %v2449
      %v2907 = vunpack.c.h.b16 %v2449
      %v2908 = vunpack.c.l.b16 %v2450
      %v2909 = vunpack.c.h.b16 %v2450
      %v2910 = vunpack.c.l.b16 %v2451
      %v2911 = vunpack.c.h.b16 %v2451
      %v2912 = vunpack.c.l.b16 %v2452
      %v2913 = vunpack.c.h.b16 %v2452
      %v2914 = vunpack.c.l.b16 %v2453
      %v2915 = vunpack.c.h.b16 %v2453
      %v2916 = vunpack.c.l.b16 %v2454
      %v2917 = vunpack.c.h.b16 %v2454
      %v2918 = vunpack.c.l.b16 %v2455
      %v2919 = vunpack.c.h.b16 %v2455
      %v2920 = vunpack.c.l.b16 %v2456
      %v2921 = vunpack.c.h.b16 %v2456
      %v2922 = vunpack.c.l.b16 %v2457
      %v2923 = vunpack.c.h.b16 %v2457
      %v2924 = vunpack.c.l.b16 %v2458
      %v2925 = vunpack.c.h.b16 %v2458
      %v2926 = vunpack.c.l.b16 %v2459
      %v2927 = vunpack.c.h.b16 %v2459
      %v2928 = vunpack.c.l.b16 %v2460
      %v2929 = vunpack.c.h.b16 %v2460
      %v2930 = vunpack.c.l.b16 %v2461
      %v2931 = vunpack.c.h.b16 %v2461
      %v2932 = vunpack.c.l.b16 %v2462
      %v2933 = vunpack.c.h.b16 %v2462
      %v2934 = vunpack.c.l.b16 %v2463
      %v2935 = vunpack.c.h.b16 %v2463
      %v2936 = vunpack.c.l.b16 %v2464
      %v2937 = vunpack.c.h.b16 %v2464
      %v2938 = vunpack.c.l.b16 %v2465
      %v2939 = vunpack.c.h.b16 %v2465
      %v2940 = vunpack.c.l.b16 %v2466
      %v2941 = vunpack.c.h.b16 %v2466
      %v2942 = vunpack.c.l.b16 %v2467
      %v2943 = vunpack.c.h.b16 %v2467
      %v2944 = vunpack.c.l.b16 %v2468
      %v2945 = vunpack.c.h.b16 %v2468
      %v2946 = vunpack.c.l.b16 %v2469
      %v2947 = vunpack.c.h.b16 %v2469
      %v2948 = vunpack.c.l.b16 %v2470
      %v2949 = vunpack.c.h.b16 %v2470
      %v2950 = vunpack.c.l.b16 %v2471
      %v2951 = vunpack.c.h.b16 %v2471
      %v2952 = vunpack.c.l.b16 %v2472
      %v2953 = vunpack.c.h.b16 %v2472
      %v2954 = vunpack.c.l.b16 %v2473
      %v2955 = vunpack.c.h.b16 %v2473
      %v2956 = vunpack.c.l.b16 %v2474
      %v2957 = vunpack.c.h.b16 %v2474
      %v2958 = vunpack.c.l.b16 %v2475
      %v2959 = vunpack.c.h.b16 %v2475
      %v2960 = vunpack.c.l.b16 %v2476
      %v2961 = vunpack.c.h.b16 %v2476
      %v2962 = vunpack.c.l.b16 %v2477
      %v2963 = vunpack.c.h.b16 %v2477
      %v2964 = vpack.c.b16 %v2684, %v2676
      %v2965 = vpack.c.b16 %v2685, %v2677
      %v2966 = vpack.c.b16 %v2686, %v2678
      %v2967 = vpack.c.b16 %v2687, %v2679
      %v2968 = vpack.c.b16 %v2688, %v2680
      %v2969 = vpack.c.b16 %v2689, %v2681
      %v2970 = vpack.c.b16 %v2690, %v2682
      %v2971 = vpack.c.b16 %v2691, %v2683
      %v2972 = vpack.c.b16 %v2700, %v2692
      %v2973 = vpack.c.b16 %v2701, %v2693
      %v2974 = vpack.c.b16 %v2702, %v2694
      %v2975 = vpack.c.b16 %v2703, %v2695
      %v2976 = vpack.c.b16 %v2704, %v2696
      %v2977 = vpack.c.b16 %v2705, %v2697
      %v2978 = vpack.c.b16 %v2706, %v2698
      %v2979 = vpack.c.b16 %v2707, %v2699
      %v2980 = vpack.c.b16 %v2716, %v2708
      %v2981 = vpack.c.b16 %v2717, %v2709
      %v2982 = vpack.c.b16 %v2718, %v2710
      %v2983 = vpack.c.b16 %v2719, %v2711
      %v2984 = vpack.c.b16 %v2720, %v2712
      %v2985 = vpack.c.b16 %v2721, %v2713
      %v2986 = vpack.c.b16 %v2722, %v2714
      %v2987 = vpack.c.b16 %v2723, %v2715
      %v2988 = vpack.c.b16 %v2732, %v2724
      %v2989 = vpack.c.b16 %v2733, %v2725
      %v2990 = vpack.c.b16 %v2734, %v2726
      %v2991 = vpack.c.b16 %v2735, %v2727
      %v2992 = vpack.c.b16 %v2736, %v2728
      %v2993 = vpack.c.b16 %v2737, %v2729
      %v2994 = vpack.c.b16 %v2738, %v2730
      %v2995 = vpack.c.b16 %v2739, %v2731
      %v2996 = vpack.c.b16 %v2748, %v2740
      %v2997 = vpack.c.b16 %v2749, %v2741
      %v2998 = vpack.c.b16 %v2750, %v2742
      %v2999 = vpack.c.b16 %v2751, %v2743
      %v3000 = vpack.c.b16 %v2752, %v2744
      %v3001 = vpack.c.b16 %v2753, %v2745
      %v3002 = vpack.c.b16 %v2754, %v2746
      %v3003 = vpack.c.b16 %v2755, %v2747
      %v3004 = vpack.c.b16 %v2764, %v2756
      %v3005 = vpack.c.b16 %v2765, %v2757
      %v3006 = vpack.c.b16 %v2766, %v2758
      %v3007 = vpack.c.b16 %v2767, %v2759
      %v3008 = vpack.c.b16 %v2768, %v2760
      %v3009 = vpack.c.b16 %v2769, %v2761
      %v3010 = vpack.c.b16 %v2770, %v2762
      %v3011 = vpack.c.b16 %v2771, %v2763
      %v3012 = vpack.c.b16 %v2780, %v2772
      %v3013 = vpack.c.b16 %v2781, %v2773
      %v3014 = vpack.c.b16 %v2782, %v2774
      %v3015 = vpack.c.b16 %v2783, %v2775
      %v3016 = vpack.c.b16 %v2784, %v2776
      %v3017 = vpack.c.b16 %v2785, %v2777
      %v3018 = vpack.c.b16 %v2786, %v2778
      %v3019 = vpack.c.b16 %v2787, %v2779
      %v3020 = vpack.c.b16 %v2796, %v2788
      %v3021 = vpack.c.b16 %v2797, %v2789
      %v3022 = vpack.c.b16 %v2798, %v2790
      %v3023 = vpack.c.b16 %v2799, %v2791
      %v3024 = vpack.c.b16 %v2800, %v2792
      %v3025 = vpack.c.b16 %v2801, %v2793
      %v3026 = vpack.c.b16 %v2802, %v2794
      %v3027 = vpack.c.b16 %v2803, %v2795
      %v3028 = vpack.c.b16 %v2812, %v2804
      %v3029 = vpack.c.b16 %v2813, %v2805
      %v3030 = vpack.c.b16 %v2814, %v2806
      %v3031 = vpack.c.b16 %v2815, %v2807
      %v3032 = vpack.c.b16 %v2816, %v2808
      %v3033 = vpack.c.b16 %v2817, %v2809
      %v3034 = vpack.c.b16 %v2818, %v2810
      %v3035 = vpack.c.b16 %v2819, %v2811
      %v3036 = vpack.c.b16 %v2828, %v2820
      %v3037 = vpack.c.b16 %v2829, %v2821
      %v3038 = vpack.c.b16 %v2830, %v2822
      %v3039 = vpack.c.b16 %v2831, %v2823
      %v3040 = vpack.c.b16 %v2832, %v2824
      %v3041 = vpack.c.b16 %v2833, %v2825
      %v3042 = vpack.c.b16 %v2834, %v2826
      %v3043 = vpack.c.b16 %v2835, %v2827
      %v3044 = vpack.c.b16 %v2844, %v2836
      %v3045 = vpack.c.b16 %v2845, %v2837
      %v3046 = vpack.c.b16 %v2846, %v2838
      %v3047 = vpack.c.b16 %v2847, %v2839
      %v3048 = vpack.c.b16 %v2848, %v2840
      %v3049 = vpack.c.b16 %v2849, %v2841
      %v3050 = vpack.c.b16 %v2850, %v2842
      %v3051 = vpack.c.b16 %v2851, %v2843
      %v3052 = vpack.c.b16 %v2860, %v2852
      %v3053 = vpack.c.b16 %v2861, %v2853
      %v3054 = vpack.c.b16 %v2862, %v2854
      %v3055 = vpack.c.b16 %v2863, %v2855
      %v3056 = vpack.c.b16 %v2864, %v2856
      %v3057 = vpack.c.b16 %v2865, %v2857
      %v3058 = vpack.c.b16 %v2866, %v2858
      %v3059 = vpack.c.b16 %v2867, %v2859
      %v3060 = vpack.c.b16 %v2876, %v2868
      %v3061 = vpack.c.b16 %v2877, %v2869
      %v3062 = vpack.c.b16 %v2878, %v2870
      %v3063 = vpack.c.b16 %v2879, %v2871
      %v3064 = vpack.c.b16 %v2880, %v2872
      %v3065 = vpack.c.b16 %v2881, %v2873
      %v3066 = vpack.c.b16 %v2882, %v2874
      %v3067 = vpack.c.b16 %v2883, %v2875
      %v3068 = vpack.c.b16 %v2892, %v2884
      %v3069 = vpack.c.b16 %v2893, %v2885
      %v3070 = vpack.c.b16 %v2894, %v2886
      %v3071 = vpack.c.b16 %v2895, %v2887
      %v3072 = vpack.c.b16 %v2896, %v2888
      %v3073 = vpack.c.b16 %v2897, %v2889
      %v3074 = vpack.c.b16 %v2898, %v2890
      %v3075 = vpack.c.b16 %v2899, %v2891
      %v3076 = vpack.c.b16 %v2908, %v2900
      %v3077 = vpack.c.b16 %v2909, %v2901
      %v3078 = vpack.c.b16 %v2910, %v2902
      %v3079 = vpack.c.b16 %v2911, %v2903
      %v3080 = vpack.c.b16 %v2912, %v2904
      %v3081 = vpack.c.b16 %v2913, %v2905
      %v3082 = vpack.c.b16 %v2914, %v2906
      %v3083 = vpack.c.b16 %v2915, %v2907
      %v3084 = vpack.c.b16 %v2924, %v2916
      %v3085 = vpack.c.b16 %v2925, %v2917
      %v3086 = vpack.c.b16 %v2926, %v2918
      %v3087 = vpack.c.b16 %v2927, %v2919
      %v3088 = vpack.c.b16 %v2928, %v2920
      %v3089 = vpack.c.b16 %v2929, %v2921
      %v3090 = vpack.c.b16 %v2930, %v2922
      %v3091 = vpack.c.b16 %v2931, %v2923
      %v3092 = vpack.c.b16 %v2940, %v2932
      %v3093 = vpack.c.b16 %v2941, %v2933
      %v3094 = vpack.c.b16 %v2942, %v2934
      %v3095 = vpack.c.b16 %v2943, %v2935
      %v3096 = vpack.c.b16 %v2944, %v2936
      %v3097 = vpack.c.b16 %v2945, %v2937
      %v3098 = vpack.c.b16 %v2946, %v2938
      %v3099 = vpack.c.b16 %v2947, %v2939
      %v3100 = vpack.c.b16 %v2956, %v2948
      %v3101 = vpack.c.b16 %v2957, %v2949
      %v3102 = vpack.c.b16 %v2958, %v2950
      %v3103 = vpack.c.b16 %v2959, %v2951
      %v3104 = vpack.c.b16 %v2960, %v2952
      %v3105 = vpack.c.b16 %v2961, %v2953
      %v3106 = vpack.c.b16 %v2962, %v2954
      %v3107 = vpack.c.b16 %v2963, %v2955
      %vm3252 = vcmask 261120
      %v3254 = vsel %vm3252, %v2524, 0
      %v3257 = vsel %vm3252, %v2527, 0
      %3259 = vmatprep.subr.bf16.mxu0 %v2965
      %3260 = vmatpush1.bf16.msra.mxu0 %v2964
      %3261 = vmatprep.subr.bf16.mxu0 %v2973
      %3262 = vmatpush1.bf16.msra.mxu0 %v2972
      %3263 = vmatprep.subr.bf16.mxu0 %v2981
      %3264 = vmatpush1.bf16.msra.mxu0 %v2980
      %3265 = vmatprep.subr.bf16.mxu0 %v2989
      %3266 = vmatpush1.bf16.msra.mxu0 %v2988
      %3267 = vmatprep.subr.bf16.mxu0 %v2997
      %3268 = vmatpush1.bf16.msra.mxu0 %v2996
      %3269 = vmatprep.subr.bf16.mxu0 %v3005
      %3270 = vmatpush1.bf16.msra.mxu0 %v3004
      %3271 = vmatprep.subr.bf16.mxu0 %v3013
      %3272 = vmatpush1.bf16.msra.mxu0 %v3012
      %3273 = vmatprep.subr.bf16.mxu0 %v3021
      %3274 = vmatpush1.bf16.msra.mxu0 %v3020
      %3275 = vmatprep.subr.bf16.mxu0 %v3029
      %3276 = vmatpush1.bf16.msra.mxu0 %v3028
      %3277 = vmatprep.subr.bf16.mxu0 %v3037
      %3278 = vmatpush1.bf16.msra.mxu0 %v3036
      %3279 = vmatprep.subr.bf16.mxu0 %v3045
      %3280 = vmatpush1.bf16.msra.mxu0 %v3044
      %3281 = vmatprep.subr.bf16.mxu0 %v3053
      %3282 = vmatpush1.bf16.msra.mxu0 %v3052
      %3283 = vmatprep.subr.bf16.mxu0 %v3061
      %3284 = vmatpush1.bf16.msra.mxu0 %v3060
      %3285 = vmatprep.subr.bf16.mxu0 %v3069
      %3286 = vmatpush1.bf16.msra.mxu0 %v3068
      %3287 = vmatprep.subr.bf16.mxu0 %v3077
      %3288 = vmatpush1.bf16.msra.mxu0 %v3076
      %3289 = vmatprep.subr.bf16.mxu0 %v3085
      %3290 = vmatpush1.bf16.msra.mxu0 %v3084
      %3291 = vmatprep.mubr.bf16.mxu0 %v2523
      %3292 = vmatmul.mubr.bf16.gmra.mrb[0].mxu0 %v2522
      %v3293 = vpop.f32.mrb[0].mxu0
      %v3294 = vadd.f32 %v2485, %v3293
      %v3295 = vpop.f32.mrb[0].mxu0
      %v3296 = vadd.f32 %v2485, %v3295
      %v3297 = vpop.f32.mrb[0].mxu0
      %v3298 = vadd.f32 %v2490, %v3297
      %v3299 = vpop.f32.mrb[0].mxu0
      %v3300 = vadd.f32 %v2490, %v3299
      %3301 = vmatprep.mubr.bf16.mxu0 %v2526
      %3302 = vmatmul.mubr.bf16.gmra.mrb[0].mxu0 %v2525
      %v3303 = vpop.f32.mrb[0].mxu0
      %v3304 = vadd.f32 %v2495, %v3303
      %v3305 = vpop.f32.mrb[0].mxu0
      %v3306 = vadd.f32 %v2495, %v3305
      %v3307 = vpop.f32.mrb[0].mxu0
      %v3308 = vadd.f32 %v2500, %v3307
      %v3309 = vpop.f32.mrb[0].mxu0
      %v3310 = vadd.f32 %v2500, %v3309
      %3311 = vdwg.mxu0
      %3312 = vmatprep.subr.bf16.mxu0 %v3093
      %3313 = vmatpush1.bf16.msra.mxu0 %v3092
      %3314 = vmatprep.subr.bf16.mxu0 %v3101
      %3315 = vmatpush1.bf16.msra.mxu0 %v3100
      %3316 = vmatprep.subr.bf16.mxu0 0
      %3317 = vmatpush1.bf16.msra.mxu0 0
      %3318 = vmatprep.subr.bf16.mxu0 0
      %3319 = vmatpush1.bf16.msra.mxu0 0
      %3320 = vmatprep.subr.bf16.mxu0 0
      %3321 = vmatpush1.bf16.msra.mxu0 0
      %3322 = vmatprep.subr.bf16.mxu0 0
      %3323 = vmatpush1.bf16.msra.mxu0 0
      %3324 = vmatprep.subr.bf16.mxu0 0
      %3325 = vmatpush1.bf16.msra.mxu0 0
      %3326 = vmatprep.subr.bf16.mxu0 0
      %3327 = vmatpush1.bf16.msra.mxu0 0
      %3328 = vmatprep.subr.bf16.mxu0 0
      %3329 = vmatpush1.bf16.msra.mxu0 0
      %3330 = vmatprep.subr.bf16.mxu0 0
      %3331 = vmatpush1.bf16.msra.mxu0 0
      %3332 = vmatprep.subr.bf16.mxu0 0
      %3333 = vmatpush1.bf16.msra.mxu0 0
      %3334 = vmatprep.subr.bf16.mxu0 0
      %3335 = vmatpush1.bf16.msra.mxu0 0
      %3336 = vmatprep.subr.bf16.mxu0 0
      %3337 = vmatpush1.bf16.msra.mxu0 0
      %3338 = vmatprep.subr.bf16.mxu0 0
      %3339 = vmatpush1.bf16.msra.mxu0 0
      %3340 = vmatprep.subr.bf16.mxu0 0
      %3341 = vmatpush1.bf16.msra.mxu0 0
      %3342 = vmatprep.subr.bf16.mxu0 0
      %3343 = vmatpush1.bf16.msra.mxu0 0
      %3344 = vmatprep.mubr.bf16.mxu0 0
      %3345 = vmatmul.mubr.bf16.gmra.mrb[0].mxu0 %v3254
      %v3346 = vpop.f32.mrb[0].mxu0
      %v3347 = vadd.f32 %v3294, %v3346
      %v3348 = vpop.f32.mrb[0].mxu0
      %v3349 = vadd.f32 %v3296, %v3348
      %v3350 = vpop.f32.mrb[0].mxu0
      %v3351 = vadd.f32 %v3298, %v3350
      %v3352 = vpop.f32.mrb[0].mxu0
      %v3353 = vadd.f32 %v3300, %v3352
      %3354 = vmatprep.mubr.bf16.mxu0 0
      %3355 = vmatmul.mubr.bf16.gmra.mrb[0].mxu0 %v3257
      %v3356 = vpop.f32.mrb[0].mxu0
      %v3357 = vadd.f32 %v3304, %v3356
      %v3358 = vpop.f32.mrb[0].mxu0
      %v3359 = vadd.f32 %v3306, %v3358
      %v3360 = vpop.f32.mrb[0].mxu0
      %v3361 = vadd.f32 %v3308, %v3360
      %v3362 = vpop.f32.mrb[0].mxu0
      %v3363 = vadd.f32 %v3310, %v3362
      %3364 = vdwg.mxu0
      %3365 = vmatprep.subr.bf16.mxu0 %v2967
      %3366 = vmatpush1.bf16.msra.mxu0 %v2966
      %3367 = vmatprep.subr.bf16.mxu0 %v2975
      %3368 = vmatpush1.bf16.msra.mxu0 %v2974
      %3369 = vmatprep.subr.bf16.mxu0 %v2983
      %3370 = vmatpush1.bf16.msra.mxu0 %v2982
      %3371 = vmatprep.subr.bf16.mxu0 %v2991
      %3372 = vmatpush1.bf16.msra.mxu0 %v2990
      %3373 = vmatprep.subr.bf16.mxu0 %v2999
      %3374 = vmatpush1.bf16.msra.mxu0 %v2998
      %3375 = vmatprep.subr.bf16.mxu0 %v3007
      %3376 = vmatpush1.bf16.msra.mxu0 %v3006
      %3377 = vmatprep.subr.bf16.mxu0 %v3015
      %3378 = vmatpush1.bf16.msra.mxu0 %v3014
      %3379 = vmatprep.subr.bf16.mxu0 %v3023
      %3380 = vmatpush1.bf16.msra.mxu0 %v3022
      %3381 = vmatprep.subr.bf16.mxu0 %v3031
      %3382 = vmatpush1.bf16.msra.mxu0 %v3030
      %3383 = vmatprep.subr.bf16.mxu0 %v3039
      %3384 = vmatpush1.bf16.msra.mxu0 %v3038
      %3385 = vmatprep.subr.bf16.mxu0 %v3047
      %3386 = vmatpush1.bf16.msra.mxu0 %v3046
      %3387 = vmatprep.subr.bf16.mxu0 %v3055
      %3388 = vmatpush1.bf16.msra.mxu0 %v3054
      %3389 = vmatprep.subr.bf16.mxu0 %v3063
      %3390 = vmatpush1.bf16.msra.mxu0 %v3062
      %3391 = vmatprep.subr.bf16.mxu0 %v3071
      %3392 = vmatpush1.bf16.msra.mxu0 %v3070
      %3393 = vmatprep.subr.bf16.mxu0 %v3079
      %3394 = vmatpush1.bf16.msra.mxu0 %v3078
      %3395 = vmatprep.subr.bf16.mxu0 %v3087
      %3396 = vmatpush1.bf16.msra.mxu0 %v3086
      %3397 = vmatprep.mubr.bf16.mxu0 %v2523
      %3398 = vmatmul.mubr.bf16.gmra.mrb[0].mxu0 %v2522
      %v3399 = vpop.f32.mrb[0].mxu0
      %v3400 = vadd.f32 %v2485, %v3399
      %v3401 = vpop.f32.mrb[0].mxu0
      %v3402 = vadd.f32 %v2485, %v3401
      %v3403 = vpop.f32.mrb[0].mxu0
      %v3404 = vadd.f32 %v2490, %v3403
      %v3405 = vpop.f32.mrb[0].mxu0
      %v3406 = vadd.f32 %v2490, %v3405
      %3407 = vmatprep.mubr.bf16.mxu0 %v2526
      %3408 = vmatmul.mubr.bf16.gmra.mrb[0].mxu0 %v2525
      %v3409 = vpop.f32.mrb[0].mxu0
      %v3410 = vadd.f32 %v2495, %v3409
      %v3411 = vpop.f32.mrb[0].mxu0
      %v3412 = vadd.f32 %v2495, %v3411
      %v3413 = vpop.f32.mrb[0].mxu0
      %v3414 = vadd.f32 %v2500, %v3413
      %v3415 = vpop.f32.mrb[0].mxu0
      %v3416 = vadd.f32 %v2500, %v3415
      %3417 = vdwg.mxu0
      %3418 = vmatprep.subr.bf16.mxu0 %v3095
      %3419 = vmatpush1.bf16.msra.mxu0 %v3094
      %3420 = vmatprep.subr.bf16.mxu0 %v3103
      %3421 = vmatpush1.bf16.msra.mxu0 %v3102
      %3422 = vmatprep.subr.bf16.mxu0 0
      %3423 = vmatpush1.bf16.msra.mxu0 0
      %3424 = vmatprep.subr.bf16.mxu0 0
      %3425 = vmatpush1.bf16.msra.mxu0 0
      %3426 = vmatprep.subr.bf16.mxu0 0
      %3427 = vmatpush1.bf16.msra.mxu0 0
      %3428 = vmatprep.subr.bf16.mxu0 0
      %3429 = vmatpush1.bf16.msra.mxu0 0
      %3430 = vmatprep.subr.bf16.mxu0 0
      %3431 = vmatpush1.bf16.msra.mxu0 0
      %3432 = vmatprep.subr.bf16.mxu0 0
      %3433 = vmatpush1.bf16.msra.mxu0 0
      %3434 = vmatprep.subr.bf16.mxu0 0
      %3435 = vmatpush1.bf16.msra.mxu0 0
      %3436 = vmatprep.subr.bf16.mxu0 0
      %3437 = vmatpush1.bf16.msra.mxu0 0
      %3438 = vmatprep.subr.bf16.mxu0 0
      %3439 = vmatpush1.bf16.msra.mxu0 0
      %3440 = vmatprep.subr.bf16.mxu0 0
      %3441 = vmatpush1.bf16.msra.mxu0 0
      %3442 = vmatprep.subr.bf16.mxu0 0
      %3443 = vmatpush1.bf16.msra.mxu0 0
      %3444 = vmatprep.subr.bf16.mxu0 0
      %3445 = vmatpush1.bf16.msra.mxu0 0
      %3446 = vmatprep.subr.bf16.mxu0 0
      %3447 = vmatpush1.bf16.msra.mxu0 0
      %3448 = vmatprep.subr.bf16.mxu0 0
      %3449 = vmatpush1.bf16.msra.mxu0 0
      %3450 = vmatprep.mubr.bf16.mxu0 0
      %3451 = vmatmul.mubr.bf16.gmra.mrb[0].mxu0 %v3254
      %v3452 = vpop.f32.mrb[0].mxu0
      %v3453 = vadd.f32 %v3400, %v3452
      %v3454 = vpop.f32.mrb[0].mxu0
      %v3455 = vadd.f32 %v3402, %v3454
      %v3456 = vpop.f32.mrb[0].mxu0
      %v3457 = vadd.f32 %v3404, %v3456
      %v3458 = vpop.f32.mrb[0].mxu0
      %v3459 = vadd.f32 %v3406, %v3458
      %3460 = vmatprep.mubr.bf16.mxu0 0
      %3461 = vmatmul.mubr.bf16.gmra.mrb[0].mxu0 %v3257
      %v3462 = vpop.f32.mrb[0].mxu0
      %v3463 = vadd.f32 %v3410, %v3462
      %v3464 = vpop.f32.mrb[0].mxu0
      %v3465 = vadd.f32 %v3412, %v3464
      %v3466 = vpop.f32.mrb[0].mxu0
      %v3467 = vadd.f32 %v3414, %v3466
      %v3468 = vpop.f32.mrb[0].mxu0
      %v3469 = vadd.f32 %v3416, %v3468
      %3470 = vdwg.mxu0
      %3471 = vmatprep.subr.bf16.mxu0 %v2969
      %3472 = vmatpush1.bf16.msra.mxu0 %v2968
      %3473 = vmatprep.subr.bf16.mxu0 %v2977
      %3474 = vmatpush1.bf16.msra.mxu0 %v2976
      %3475 = vmatprep.subr.bf16.mxu0 %v2985
      %3476 = vmatpush1.bf16.msra.mxu0 %v2984
      %3477 = vmatprep.subr.bf16.mxu0 %v2993
      %3478 = vmatpush1.bf16.msra.mxu0 %v2992
      %3479 = vmatprep.subr.bf16.mxu0 %v3001
      %3480 = vmatpush1.bf16.msra.mxu0 %v3000
      %3481 = vmatprep.subr.bf16.mxu0 %v3009
      %3482 = vmatpush1.bf16.msra.mxu0 %v3008
      %3483 = vmatprep.subr.bf16.mxu0 %v3017
      %3484 = vmatpush1.bf16.msra.mxu0 %v3016
      %3485 = vmatprep.subr.bf16.mxu0 %v3025
      %3486 = vmatpush1.bf16.msra.mxu0 %v3024
      %3487 = vmatprep.subr.bf16.mxu0 %v3033
      %3488 = vmatpush1.bf16.msra.mxu0 %v3032
      %3489 = vmatprep.subr.bf16.mxu0 %v3041
      %3490 = vmatpush1.bf16.msra.mxu0 %v3040
      %3491 = vmatprep.subr.bf16.mxu0 %v3049
      %3492 = vmatpush1.bf16.msra.mxu0 %v3048
      %3493 = vmatprep.subr.bf16.mxu0 %v3057
      %3494 = vmatpush1.bf16.msra.mxu0 %v3056
      %3495 = vmatprep.subr.bf16.mxu0 %v3065
      %3496 = vmatpush1.bf16.msra.mxu0 %v3064
      %3497 = vmatprep.subr.bf16.mxu0 %v3073
      %3498 = vmatpush1.bf16.msra.mxu0 %v3072
      %3499 = vmatprep.subr.bf16.mxu0 %v3081
      %3500 = vmatpush1.bf16.msra.mxu0 %v3080
      %3501 = vmatprep.subr.bf16.mxu0 %v3089
      %3502 = vmatpush1.bf16.msra.mxu0 %v3088
      %3503 = vmatprep.mubr.bf16.mxu0 %v2523
      %3504 = vmatmul.mubr.bf16.gmra.mrb[0].mxu0 %v2522
      %v3505 = vpop.f32.mrb[0].mxu0
      %v3506 = vadd.f32 %v2485, %v3505
      %v3507 = vpop.f32.mrb[0].mxu0
      %v3508 = vadd.f32 %v2485, %v3507
      %v3509 = vpop.f32.mrb[0].mxu0
      %v3510 = vadd.f32 %v2490, %v3509
      %v3511 = vpop.f32.mrb[0].mxu0
      %v3512 = vadd.f32 %v2490, %v3511
      %3513 = vmatprep.mubr.bf16.mxu0 %v2526
      %3514 = vmatmul.mubr.bf16.gmra.mrb[0].mxu0 %v2525
      %v3515 = vpop.f32.mrb[0].mxu0
      %v3516 = vadd.f32 %v2495, %v3515
      %v3517 = vpop.f32.mrb[0].mxu0
      %v3518 = vadd.f32 %v2495, %v3517
      %v3519 = vpop.f32.mrb[0].mxu0
      %v3520 = vadd.f32 %v2500, %v3519
      %v3521 = vpop.f32.mrb[0].mxu0
      %v3522 = vadd.f32 %v2500, %v3521
      %3523 = vdwg.mxu0
      %3524 = vmatprep.subr.bf16.mxu0 %v3097
      %3525 = vmatpush1.bf16.msra.mxu0 %v3096
      %3526 = vmatprep.subr.bf16.mxu0 %v3105
      %3527 = vmatpush1.bf16.msra.mxu0 %v3104
      %3528 = vmatprep.subr.bf16.mxu0 0
      %3529 = vmatpush1.bf16.msra.mxu0 0
      %3530 = vmatprep.subr.bf16.mxu0 0
      %3531 = vmatpush1.bf16.msra.mxu0 0
      %3532 = vmatprep.subr.bf16.mxu0 0
      %3533 = vmatpush1.bf16.msra.mxu0 0
      %3534 = vmatprep.subr.bf16.mxu0 0
      %3535 = vmatpush1.bf16.msra.mxu0 0
      %3536 = vmatprep.subr.bf16.mxu0 0
      %3537 = vmatpush1.bf16.msra.mxu0 0
      %3538 = vmatprep.subr.bf16.mxu0 0
      %3539 = vmatpush1.bf16.msra.mxu0 0
      %3540 = vmatprep.subr.bf16.mxu0 0
      %3541 = vmatpush1.bf16.msra.mxu0 0
      %3542 = vmatprep.subr.bf16.mxu0 0
      %3543 = vmatpush1.bf16.msra.mxu0 0
      %3544 = vmatprep.subr.bf16.mxu0 0
      %3545 = vmatpush1.bf16.msra.mxu0 0
      %3546 = vmatprep.subr.bf16.mxu0 0
      %3547 = vmatpush1.bf16.msra.mxu0 0
      %3548 = vmatprep.subr.bf16.mxu0 0
      %3549 = vmatpush1.bf16.msra.mxu0 0
      %3550 = vmatprep.subr.bf16.mxu0 0
      %3551 = vmatpush1.bf16.msra.mxu0 0
      %3552 = vmatprep.subr.bf16.mxu0 0
      %3553 = vmatpush1.bf16.msra.mxu0 0
      %3554 = vmatprep.subr.bf16.mxu0 0
      %3555 = vmatpush1.bf16.msra.mxu0 0
      %3556 = vmatprep.mubr.bf16.mxu0 0
      %3557 = vmatmul.mubr.bf16.gmra.mrb[0].mxu0 %v3254
      %v3558 = vpop.f32.mrb[0].mxu0
      %v3559 = vadd.f32 %v3506, %v3558
      %v3560 = vpop.f32.mrb[0].mxu0
      %v3561 = vadd.f32 %v3508, %v3560
      %v3562 = vpop.f32.mrb[0].mxu0
      %v3563 = vadd.f32 %v3510, %v3562
      %v3564 = vpop.f32.mrb[0].mxu0
      %v3565 = vadd.f32 %v3512, %v3564
      %3566 = vmatprep.mubr.bf16.mxu0 0
      %3567 = vmatmul.mubr.bf16.gmra.mrb[0].mxu0 %v3257
      %v3568 = vpop.f32.mrb[0].mxu0
      %v3569 = vadd.f32 %v3516, %v3568
      %v3570 = vpop.f32.mrb[0].mxu0
      %v3571 = vadd.f32 %v3518, %v3570
      %v3572 = vpop.f32.mrb[0].mxu0
      %v3573 = vadd.f32 %v3520, %v3572
      %v3574 = vpop.f32.mrb[0].mxu0
      %v3575 = vadd.f32 %v3522, %v3574
      %3576 = vdwg.mxu0
      %3577 = vmatprep.subr.bf16.mxu0 %v2971
      %3578 = vmatpush1.bf16.msra.mxu0 %v2970
      %3579 = vmatprep.subr.bf16.mxu0 %v2979
      %3580 = vmatpush1.bf16.msra.mxu0 %v2978
      %3581 = vmatprep.subr.bf16.mxu0 %v2987
      %3582 = vmatpush1.bf16.msra.mxu0 %v2986
      %3583 = vmatprep.subr.bf16.mxu0 %v2995
      %3584 = vmatpush1.bf16.msra.mxu0 %v2994
      %3585 = vmatprep.subr.bf16.mxu0 %v3003
      %3586 = vmatpush1.bf16.msra.mxu0 %v3002
      %3587 = vmatprep.subr.bf16.mxu0 %v3011
      %3588 = vmatpush1.bf16.msra.mxu0 %v3010
      %3589 = vmatprep.subr.bf16.mxu0 %v3019
      %3590 = vmatpush1.bf16.msra.mxu0 %v3018
      %3591 = vmatprep.subr.bf16.mxu0 %v3027
      %3592 = vmatpush1.bf16.msra.mxu0 %v3026
      %3593 = vmatprep.subr.bf16.mxu0 %v3035
      %3594 = vmatpush1.bf16.msra.mxu0 %v3034
      %3595 = vmatprep.subr.bf16.mxu0 %v3043
      %3596 = vmatpush1.bf16.msra.mxu0 %v3042
      %3597 = vmatprep.subr.bf16.mxu0 %v3051
      %3598 = vmatpush1.bf16.msra.mxu0 %v3050
      %3599 = vmatprep.subr.bf16.mxu0 %v3059
      %3600 = vmatpush1.bf16.msra.mxu0 %v3058
      %3601 = vmatprep.subr.bf16.mxu0 %v3067
      %3602 = vmatpush1.bf16.msra.mxu0 %v3066
      %3603 = vmatprep.subr.bf16.mxu0 %v3075
      %3604 = vmatpush1.bf16.msra.mxu0 %v3074
      %3605 = vmatprep.subr.bf16.mxu0 %v3083
      %3606 = vmatpush1.bf16.msra.mxu0 %v3082
      %3607 = vmatprep.subr.bf16.mxu0 %v3091
      %3608 = vmatpush1.bf16.msra.mxu0 %v3090
      %3609 = vmatprep.mubr.bf16.mxu0 %v2523
      %3610 = vmatmul.mubr.bf16.gmra.mrb[0].mxu0 %v2522
      %v3611 = vpop.f32.mrb[0].mxu0
      %v3612 = vadd.f32 %v2485, %v3611
      %v3613 = vpop.f32.mrb[0].mxu0
      %v3614 = vadd.f32 %v2485, %v3613
      %v3615 = vpop.f32.mrb[0].mxu0
      %v3616 = vadd.f32 %v2490, %v3615
      %v3617 = vpop.f32.mrb[0].mxu0
      %v3618 = vadd.f32 %v2490, %v3617
      %3619 = vmatprep.mubr.bf16.mxu0 %v2526
      %3620 = vmatmul.mubr.bf16.gmra.mrb[0].mxu0 %v2525
      %v3621 = vpop.f32.mrb[0].mxu0
      %v3622 = vadd.f32 %v2495, %v3621
      %v3623 = vpop.f32.mrb[0].mxu0
      %v3624 = vadd.f32 %v2495, %v3623
      %v3625 = vpop.f32.mrb[0].mxu0
      %v3626 = vadd.f32 %v2500, %v3625
      %v3627 = vpop.f32.mrb[0].mxu0
      %v3628 = vadd.f32 %v2500, %v3627
      %3629 = vdwg.mxu0
      %3630 = vmatprep.subr.bf16.mxu0 %v3099
      %3631 = vmatpush1.bf16.msra.mxu0 %v3098
      %3632 = vmatprep.subr.bf16.mxu0 %v3107
      %3633 = vmatpush1.bf16.msra.mxu0 %v3106
      %3634 = vmatprep.subr.bf16.mxu0 0
      %3635 = vmatpush1.bf16.msra.mxu0 0
      %3636 = vmatprep.subr.bf16.mxu0 0
      %3637 = vmatpush1.bf16.msra.mxu0 0
      %3638 = vmatprep.subr.bf16.mxu0 0
      %3639 = vmatpush1.bf16.msra.mxu0 0
      %3640 = vmatprep.subr.bf16.mxu0 0
      %3641 = vmatpush1.bf16.msra.mxu0 0
      %3642 = vmatprep.subr.bf16.mxu0 0
      %3643 = vmatpush1.bf16.msra.mxu0 0
      %3644 = vmatprep.subr.bf16.mxu0 0
      %3645 = vmatpush1.bf16.msra.mxu0 0
      %3646 = vmatprep.subr.bf16.mxu0 0
      %3647 = vmatpush1.bf16.msra.mxu0 0
      %3648 = vmatprep.subr.bf16.mxu0 0
      %3649 = vmatpush1.bf16.msra.mxu0 0
      %3650 = vmatprep.subr.bf16.mxu0 0
      %3651 = vmatpush1.bf16.msra.mxu0 0
      %3652 = vmatprep.subr.bf16.mxu0 0
      %3653 = vmatpush1.bf16.msra.mxu0 0
      %3654 = vmatprep.subr.bf16.mxu0 0
      %3655 = vmatpush1.bf16.msra.mxu0 0
      %3656 = vmatprep.subr.bf16.mxu0 0
      %3657 = vmatpush1.bf16.msra.mxu0 0
      %3658 = vmatprep.subr.bf16.mxu0 0
      %3659 = vmatpush1.bf16.msra.mxu0 0
      %3660 = vmatprep.subr.bf16.mxu0 0
      %3661 = vmatpush1.bf16.msra.mxu0 0
      %3662 = vmatprep.mubr.bf16.mxu0 0
      %3663 = vmatmul.mubr.bf16.gmra.mrb[0].mxu0 %v3254
      %v3664 = vpop.f32.mrb[0].mxu0
      %v3665 = vadd.f32 %v3612, %v3664
      %v3666 = vpop.f32.mrb[0].mxu0
      %v3667 = vadd.f32 %v3614, %v3666
      %v3668 = vpop.f32.mrb[0].mxu0
      %v3669 = vadd.f32 %v3616, %v3668
      %v3670 = vpop.f32.mrb[0].mxu0
      %v3671 = vadd.f32 %v3618, %v3670
      %3672 = vmatprep.mubr.bf16.mxu0 0
      %3673 = vmatmul.mubr.bf16.gmra.mrb[0].mxu0 %v3257
      %v3674 = vpop.f32.mrb[0].mxu0
      %v3675 = vadd.f32 %v3622, %v3674
      %v3676 = vpop.f32.mrb[0].mxu0
      %v3677 = vadd.f32 %v3624, %v3676
      %v3678 = vpop.f32.mrb[0].mxu0
      %v3679 = vadd.f32 %v3626, %v3678
      %v3680 = vpop.f32.mrb[0].mxu0
      %v3681 = vadd.f32 %v3628, %v3680
      %3682 = vdwg.mxu0
      %v3683 = vxor.u32 %v3347, 2147483648
      %v3684 = vxor.u32 %v3349, 2147483648
      %v3685 = vxor.u32 %v3453, 2147483648
      %v3686 = vxor.u32 %v3455, 2147483648
      %v3687 = vxor.u32 %v3559, 2147483648
      %v3688 = vxor.u32 %v3561, 2147483648
      %v3689 = vxor.u32 %v3665, 2147483648
      %v3690 = vxor.u32 %v3667, 2147483648
      %v3691 = vxor.u32 %v3351, 2147483648
      %v3692 = vxor.u32 %v3353, 2147483648
      %v3693 = vxor.u32 %v3457, 2147483648
      %v3694 = vxor.u32 %v3459, 2147483648
      %v3695 = vxor.u32 %v3563, 2147483648
      %v3696 = vxor.u32 %v3565, 2147483648
      %v3697 = vxor.u32 %v3669, 2147483648
      %v3698 = vxor.u32 %v3671, 2147483648
      %v3699 = vxor.u32 %v3357, 2147483648
      %v3700 = vxor.u32 %v3359, 2147483648
      %v3701 = vxor.u32 %v3463, 2147483648
      %v3702 = vxor.u32 %v3465, 2147483648
      %v3703 = vxor.u32 %v3569, 2147483648
      %v3704 = vxor.u32 %v3571, 2147483648
      %v3705 = vxor.u32 %v3675, 2147483648
      %v3706 = vxor.u32 %v3677, 2147483648
      %v3707 = vxor.u32 %v3361, 2147483648
      %v3708 = vxor.u32 %v3363, 2147483648
      %v3709 = vxor.u32 %v3467, 2147483648
      %v3710 = vxor.u32 %v3469, 2147483648
      %v3711 = vxor.u32 %v3573, 2147483648
      %v3712 = vxor.u32 %v3575, 2147483648
      %v3713 = vxor.u32 %v3679, 2147483648
      %v3714 = vxor.u32 %v3681, 2147483648
      %v3715 = vmul.f32 %v3683, 1.442695
      %v3716 = vpow.pop %v3715
      %v3717 = vmul.f32 %v3684, 1.442695
      %v3718 = vpow.pop %v3717
      %v3719 = vmul.f32 %v3685, 1.442695
      %v3720 = vpow.pop %v3719
      %v3721 = vmul.f32 %v3686, 1.442695
      %v3722 = vpow.pop %v3721
      %v3723 = vmul.f32 %v3687, 1.442695
      %v3724 = vpow.pop %v3723
      %v3725 = vmul.f32 %v3688, 1.442695
      %v3726 = vpow.pop %v3725
      %v3727 = vmul.f32 %v3689, 1.442695
      %v3728 = vpow.pop %v3727
      %v3729 = vmul.f32 %v3690, 1.442695
      %v3730 = vpow.pop %v3729
      %v3731 = vmul.f32 %v3691, 1.442695
      %v3732 = vpow.pop %v3731
      %v3733 = vmul.f32 %v3692, 1.442695
      %v3734 = vpow.pop %v3733
      %v3735 = vmul.f32 %v3693, 1.442695
      %v3736 = vpow.pop %v3735
      %v3737 = vmul.f32 %v3694, 1.442695
      %v3738 = vpow.pop %v3737
      %v3739 = vmul.f32 %v3695, 1.442695
      %v3740 = vpow.pop %v3739
      %v3741 = vmul.f32 %v3696, 1.442695
      %v3742 = vpow.pop %v3741
      %v3743 = vmul.f32 %v3697, 1.442695
      %v3744 = vpow.pop %v3743
      %v3745 = vmul.f32 %v3698, 1.442695
      %v3746 = vpow.pop %v3745
      %v3747 = vmul.f32 %v3699, 1.442695
      %v3748 = vpow.pop %v3747
      %v3749 = vmul.f32 %v3700, 1.442695
      %v3750 = vpow.pop %v3749
      %v3751 = vmul.f32 %v3701, 1.442695
      %v3752 = vpow.pop %v3751
      %v3753 = vmul.f32 %v3702, 1.442695
      %v3754 = vpow.pop %v3753
      %v3755 = vmul.f32 %v3703, 1.442695
      %v3756 = vpow.pop %v3755
      %v3757 = vmul.f32 %v3704, 1.442695
      %v3758 = vpow.pop %v3757
      %v3759 = vmul.f32 %v3705, 1.442695
      %v3760 = vpow.pop %v3759
      %v3761 = vmul.f32 %v3706, 1.442695
      %v3762 = vpow.pop %v3761
      %v3763 = vmul.f32 %v3707, 1.442695
      %v3764 = vpow.pop %v3763
      %v3765 = vmul.f32 %v3708, 1.442695
      %v3766 = vpow.pop %v3765
      %v3767 = vmul.f32 %v3709, 1.442695
      %v3768 = vpow.pop %v3767
      %v3769 = vmul.f32 %v3710, 1.442695
      %v3770 = vpow.pop %v3769
      %v3771 = vmul.f32 %v3711, 1.442695
      %v3772 = vpow.pop %v3771
      %v3773 = vmul.f32 %v3712, 1.442695
      %v3774 = vpow.pop %v3773
      %v3775 = vmul.f32 %v3713, 1.442695
      %v3776 = vpow.pop %v3775
      %v3777 = vmul.f32 %v3714, 1.442695
      %v3778 = vpow.pop %v3777
      %v3779 = vadd.f32 %v3716, 1.0
      %v3780 = vadd.f32 %v3718, 1.0
      %v3781 = vadd.f32 %v3720, 1.0
      %v3782 = vadd.f32 %v3722, 1.0
      %v3783 = vadd.f32 %v3724, 1.0
      %v3784 = vadd.f32 %v3726, 1.0
      %v3785 = vadd.f32 %v3728, 1.0
      %v3786 = vadd.f32 %v3730, 1.0
      %v3787 = vadd.f32 %v3732, 1.0
      %v3788 = vadd.f32 %v3734, 1.0
      %v3789 = vadd.f32 %v3736, 1.0
      %v3790 = vadd.f32 %v3738, 1.0
      %v3791 = vadd.f32 %v3740, 1.0
      %v3792 = vadd.f32 %v3742, 1.0
      %v3793 = vadd.f32 %v3744, 1.0
      %v3794 = vadd.f32 %v3746, 1.0
      %v3795 = vadd.f32 %v3748, 1.0
      %v3796 = vadd.f32 %v3750, 1.0
      %v3797 = vadd.f32 %v3752, 1.0
      %v3798 = vadd.f32 %v3754, 1.0
      %v3799 = vadd.f32 %v3756, 1.0
      %v3800 = vadd.f32 %v3758, 1.0
      %v3801 = vadd.f32 %v3760, 1.0
      %v3802 = vadd.f32 %v3762, 1.0
      %v3803 = vadd.f32 %v3764, 1.0
      %v3804 = vadd.f32 %v3766, 1.0
      %v3805 = vadd.f32 %v3768, 1.0
      %v3806 = vadd.f32 %v3770, 1.0
      %v3807 = vadd.f32 %v3772, 1.0
      %v3808 = vadd.f32 %v3774, 1.0
      %v3809 = vadd.f32 %v3776, 1.0
      %v3810 = vadd.f32 %v3778, 1.0
      %v3811 = vrcp.pop %v3779
      %v3812 = vmul.f32 1.0, %v3811
      %v3813 = vrcp.pop %v3780
      %v3814 = vmul.f32 1.0, %v3813
      %v3815 = vrcp.pop %v3781
      %v3816 = vmul.f32 1.0, %v3815
      %v3817 = vrcp.pop %v3782
      %v3818 = vmul.f32 1.0, %v3817
      %v3819 = vrcp.pop %v3783
      %v3820 = vmul.f32 1.0, %v3819
      %v3821 = vrcp.pop %v3784
      %v3822 = vmul.f32 1.0, %v3821
      %v3823 = vrcp.pop %v3785
      %v3824 = vmul.f32 1.0, %v3823
      %v3825 = vrcp.pop %v3786
      %v3826 = vmul.f32 1.0, %v3825
      %v3827 = vrcp.pop %v3787
      %v3828 = vmul.f32 1.0, %v3827
      %v3829 = vrcp.pop %v3788
      %v3830 = vmul.f32 1.0, %v3829
      %v3831 = vrcp.pop %v3789
      %v3832 = vmul.f32 1.0, %v3831
      %v3833 = vrcp.pop %v3790
      %v3834 = vmul.f32 1.0, %v3833
      %v3835 = vrcp.pop %v3791
      %v3836 = vmul.f32 1.0, %v3835
      %v3837 = vrcp.pop %v3792
      %v3838 = vmul.f32 1.0, %v3837
      %v3839 = vrcp.pop %v3793
      %v3840 = vmul.f32 1.0, %v3839
      %v3841 = vrcp.pop %v3794
      %v3842 = vmul.f32 1.0, %v3841
      %v3843 = vrcp.pop %v3795
      %v3844 = vmul.f32 1.0, %v3843
      %v3845 = vrcp.pop %v3796
      %v3846 = vmul.f32 1.0, %v3845
      %v3847 = vrcp.pop %v3797
      %v3848 = vmul.f32 1.0, %v3847
      %v3849 = vrcp.pop %v3798
      %v3850 = vmul.f32 1.0, %v3849
      %v3851 = vrcp.pop %v3799
      %v3852 = vmul.f32 1.0, %v3851
      %v3853 = vrcp.pop %v3800
      %v3854 = vmul.f32 1.0, %v3853
      %v3855 = vrcp.pop %v3801
      %v3856 = vmul.f32 1.0, %v3855
      %v3857 = vrcp.pop %v3802
      %v3858 = vmul.f32 1.0, %v3857
      %v3859 = vrcp.pop %v3803
      %v3860 = vmul.f32 1.0, %v3859
      %v3861 = vrcp.pop %v3804
      %v3862 = vmul.f32 1.0, %v3861
      %v3863 = vrcp.pop %v3805
      %v3864 = vmul.f32 1.0, %v3863
      %v3865 = vrcp.pop %v3806
      %v3866 = vmul.f32 1.0, %v3865
      %v3867 = vrcp.pop %v3807
      %v3868 = vmul.f32 1.0, %v3867
      %v3869 = vrcp.pop %v3808
      %v3870 = vmul.f32 1.0, %v3869
      %v3871 = vrcp.pop %v3809
      %v3872 = vmul.f32 1.0, %v3871
      %v3873 = vrcp.pop %v3810
      %v3874 = vmul.f32 1.0, %v3873
      %v3875 = vld [vmem:[%s642] sm:$0xff]
      %v3876 = vld [vmem:[%s642 + $0x8] sm:$0xff]
      %v3877 = vld [vmem:[%s642 + $0x10] sm:$0xff]
      %v3878 = vld [vmem:[%s642 + $0x18] sm:$0xff]
      %v3879 = vld [vmem:[%s642 + $0x20] sm:$0xff]
      %v3880 = vld [vmem:[%s642 + $0x28] sm:$0xff]
      %v3881 = vld [vmem:[%s642 + $0x30] sm:$0xff]
      %v3882 = vld [vmem:[%s642 + $0x38] sm:$0xff]
      %v3883 = vld [vmem:[%s642 + $0x40] sm:$0xff]
      %v3884 = vld [vmem:[%s642 + $0x48] sm:$0xff]
      %v3885 = vld [vmem:[%s642 + $0x50] sm:$0xff]
      %v3886 = vld [vmem:[%s642 + $0x58] sm:$0xff]
      %v3887 = vld [vmem:[%s642 + $0x60] sm:$0xff]
      %v3888 = vld [vmem:[%s642 + $0x68] sm:$0xff]
      %v3889 = vld [vmem:[%s642 + $0x70] sm:$0xff]
      %v3890 = vld [vmem:[%s642 + $0x78] sm:$0xff]
      %v3891 = vld [vmem:[%s642 + $0x80] sm:$0xff]
      %v3892 = vld [vmem:[%s642 + $0x88] sm:$0xff]
      %v3893 = vld [vmem:[%s642 + $0x90] sm:$0xff]
      %v3894 = vld [vmem:[%s642 + $0x98] sm:$0xff]
      %v3895 = vld [vmem:[%s642 + $0xa0] sm:$0xff]
      %v3896 = vld [vmem:[%s642 + $0xa8] sm:$0xff]
      %v3897 = vld [vmem:[%s642 + $0xb0] sm:$0xff]
      %v3898 = vld [vmem:[%s642 + $0xb8] sm:$0xff]
      %v3899 = vld [vmem:[%s642 + $0xc0] sm:$0xff]
      %v3900 = vld [vmem:[%s642 + $0xc8] sm:$0xff]
      %v3901 = vld [vmem:[%s642 + $0xd0] sm:$0xff]
      %v3902 = vld [vmem:[%s642 + $0xd8] sm:$0xff]
      %v3903 = vld [vmem:[%s642 + $0xe0] sm:$0xff]
      %v3904 = vld [vmem:[%s642 + $0xe8] sm:$0xff]
      %v3905 = vld [vmem:[%s642 + $0xf0] sm:$0xff]
      %v3906 = vld [vmem:[%s642 + $0xf8] sm:$0xff]
      %v3907 = vld [vmem:[%s10] sm:$0xff]
      %v3908 = vld [vmem:[%s10 + $0x8] sm:$0xff]
      %v3909 = vld [vmem:[%s10 + $0x10] sm:$0xff]
      %v3910 = vld [vmem:[%s10 + $0x18] sm:$0xff]
      %3912 = vset.pattern.permute.xlu0 0
      %3913 = vperm.xlu0 %3912, %v3907
      %v3914 = vpop.permute.xlu0 %3913
      %3917 = vset.pattern.permute.xlu0 0
      %3918 = vperm.xlu0 %3917, %v3908
      %v3919 = vpop.permute.xlu0 %3918
      %3922 = vset.pattern.permute.xlu0 0
      %3923 = vperm.xlu0 %3922, %v3909
      %v3924 = vpop.permute.xlu0 %3923
      %3927 = vset.pattern.permute.xlu0 0
      %3928 = vperm.xlu0 %3927, %v3910
      %v3929 = vpop.permute.xlu0 %3928
      %v3931 = vmul.f32 %v3875, %v3914
      %v3932 = vmul.f32 %v3876, %v3914
      %v3933 = vmul.f32 %v3877, %v3914
      %v3934 = vmul.f32 %v3878, %v3914
      %v3935 = vmul.f32 %v3879, %v3914
      %v3936 = vmul.f32 %v3880, %v3914
      %v3937 = vmul.f32 %v3881, %v3914
      %v3938 = vmul.f32 %v3882, %v3914
      %v3939 = vmul.f32 %v3883, %v3919
      %v3940 = vmul.f32 %v3884, %v3919
      %v3941 = vmul.f32 %v3885, %v3919
      %v3942 = vmul.f32 %v3886, %v3919
      %v3943 = vmul.f32 %v3887, %v3919
      %v3944 = vmul.f32 %v3888, %v3919
      %v3945 = vmul.f32 %v3889, %v3919
      %v3946 = vmul.f32 %v3890, %v3919
      %v3947 = vmul.f32 %v3891, %v3924
      %v3948 = vmul.f32 %v3892, %v3924
      %v3949 = vmul.f32 %v3893, %v3924
      %v3950 = vmul.f32 %v3894, %v3924
      %v3951 = vmul.f32 %v3895, %v3924
      %v3952 = vmul.f32 %v3896, %v3924
      %v3953 = vmul.f32 %v3897, %v3924
      %v3954 = vmul.f32 %v3898, %v3924
      %v3955 = vmul.f32 %v3899, %v3929
      %v3956 = vmul.f32 %v3900, %v3929
      %v3957 = vmul.f32 %v3901, %v3929
      %v3958 = vmul.f32 %v3902, %v3929
      %v3959 = vmul.f32 %v3903, %v3929
      %v3960 = vmul.f32 %v3904, %v3929
      %v3961 = vmul.f32 %v3905, %v3929
      %v3962 = vmul.f32 %v3906, %v3929
      %v3963 = vld [vmem:[%s11] sm:$0xff]
      %v3964 = vld [vmem:[%s11 + $0x8] sm:$0xff]
      %v3965 = vld [vmem:[%s11 + $0x10] sm:$0xff]
      %v3966 = vld [vmem:[%s11 + $0x18] sm:$0xff]
      %3968 = vset.pattern.permute.xlu0 0
      %3969 = vperm.xlu0 %3968, %v3963
      %v3970 = vpop.permute.xlu0 %3969
      %3973 = vset.pattern.permute.xlu0 0
      %3974 = vperm.xlu0 %3973, %v3964
      %v3975 = vpop.permute.xlu0 %3974
      %3978 = vset.pattern.permute.xlu0 0
      %3979 = vperm.xlu0 %3978, %v3965
      %v3980 = vpop.permute.xlu0 %3979
      %3983 = vset.pattern.permute.xlu0 0
      %3984 = vperm.xlu0 %3983, %v3966
      %v3985 = vpop.permute.xlu0 %3984
      %v3987 = vadd.f32 %v3931, %v3970
      %v3988 = vadd.f32 %v3932, %v3970
      %v3989 = vadd.f32 %v3933, %v3970
      %v3990 = vadd.f32 %v3934, %v3970
      %v3991 = vadd.f32 %v3935, %v3970
      %v3992 = vadd.f32 %v3936, %v3970
      %v3993 = vadd.f32 %v3937, %v3970
      %v3994 = vadd.f32 %v3938, %v3970
      %v3995 = vadd.f32 %v3939, %v3975
      %v3996 = vadd.f32 %v3940, %v3975
      %v3997 = vadd.f32 %v3941, %v3975
      %v3998 = vadd.f32 %v3942, %v3975
      %v3999 = vadd.f32 %v3943, %v3975
      %v4000 = vadd.f32 %v3944, %v3975
      %v4001 = vadd.f32 %v3945, %v3975
      %v4002 = vadd.f32 %v3946, %v3975
      %v4003 = vadd.f32 %v3947, %v3980
      %v4004 = vadd.f32 %v3948, %v3980
      %v4005 = vadd.f32 %v3949, %v3980
      %v4006 = vadd.f32 %v3950, %v3980
      %v4007 = vadd.f32 %v3951, %v3980
      %v4008 = vadd.f32 %v3952, %v3980
      %v4009 = vadd.f32 %v3953, %v3980
      %v4010 = vadd.f32 %v3954, %v3980
      %v4011 = vadd.f32 %v3955, %v3985
      %v4012 = vadd.f32 %v3956, %v3985
      %v4013 = vadd.f32 %v3957, %v3985
      %v4014 = vadd.f32 %v3958, %v3985
      %v4015 = vadd.f32 %v3959, %v3985
      %v4016 = vadd.f32 %v3960, %v3985
      %v4017 = vadd.f32 %v3961, %v3985
      %v4018 = vadd.f32 %v3962, %v3985
      %v4019 = vld [vmem:[%s651] sm:$0xff]
      %v4020 = vsub.f32 %v1241, %v2069
      %v4021 = vsub.f32 %v1243, %v2071
      %v4022 = vsub.f32 %v1314, %v2142
      %v4023 = vsub.f32 %v1316, %v2144
      %v4024 = vsub.f32 %v1387, %v2215
      %v4025 = vsub.f32 %v1389, %v2217
      %v4026 = vsub.f32 %v1460, %v2288
      %v4027 = vsub.f32 %v1462, %v2290
      %v4028 = vsub.f32 %v1245, %v2073
      %v4029 = vsub.f32 %v1247, %v2075
      %v4030 = vsub.f32 %v1318, %v2146
      %v4031 = vsub.f32 %v1320, %v2148
      %v4032 = vsub.f32 %v1391, %v2219
      %v4033 = vsub.f32 %v1393, %v2221
      %v4034 = vsub.f32 %v1464, %v2292
      %v4035 = vsub.f32 %v1466, %v2294
      %v4036 = vsub.f32 %v1251, %v2079
      %v4037 = vsub.f32 %v1253, %v2081
      %v4038 = vsub.f32 %v1324, %v2152
      %v4039 = vsub.f32 %v1326, %v2154
      %v4040 = vsub.f32 %v1397, %v2225
      %v4041 = vsub.f32 %v1399, %v2227
      %v4042 = vsub.f32 %v1470, %v2298
      %v4043 = vsub.f32 %v1472, %v2300
      %v4044 = vsub.f32 %v1255, %v2083
      %v4045 = vsub.f32 %v1257, %v2085
      %v4046 = vsub.f32 %v1328, %v2156
      %v4047 = vsub.f32 %v1330, %v2158
      %v4048 = vsub.f32 %v1401, %v2229
      %v4049 = vsub.f32 %v1403, %v2231
      %v4050 = vsub.f32 %v1474, %v2302
      %v4051 = vsub.f32 %v1476, %v2304
      %v4053 = vlaneseq
      %v4054 = vshrl.u32 %v4053, 7
      %v4055 = vsub.s32 0, %v4054
      %v4056 = vrot.slane %v4019, %v4055
      %v4057 = vlaneseq
      %v4058 = vshrl.u32 %v4057, 7
      %v4059 = vsub.s32 1, %v4058
      %v4060 = vrot.slane %v4019, %v4059
      %v4061 = vlaneseq
      %v4062 = vshrl.u32 %v4061, 7
      %v4063 = vsub.s32 2, %v4062
      %v4064 = vrot.slane %v4019, %v4063
      %v4065 = vlaneseq
      %v4066 = vshrl.u32 %v4065, 7
      %v4067 = vsub.s32 3, %v4066
      %v4068 = vrot.slane %v4019, %v4067
      %v4069 = vlaneseq
      %v4070 = vshrl.u32 %v4069, 7
      %v4071 = vsub.s32 4, %v4070
      %v4072 = vrot.slane %v4019, %v4071
      %v4073 = vlaneseq
      %v4074 = vshrl.u32 %v4073, 7
      %v4075 = vsub.s32 5, %v4074
      %v4076 = vrot.slane %v4019, %v4075
      %v4077 = vlaneseq
      %v4078 = vshrl.u32 %v4077, 7
      %v4079 = vsub.s32 6, %v4078
      %v4080 = vrot.slane %v4019, %v4079
      %v4081 = vlaneseq
      %v4082 = vshrl.u32 %v4081, 7
      %v4083 = vsub.s32 7, %v4082
      %v4084 = vrot.slane %v4019, %v4083
      %v4093 = vmul.f32 %v4056, %v4020
      %v4094 = vmul.f32 %v4060, %v4021
      %v4095 = vmul.f32 %v4064, %v4022
      %v4096 = vmul.f32 %v4068, %v4023
      %v4097 = vmul.f32 %v4072, %v4024
      %v4098 = vmul.f32 %v4076, %v4025
      %v4099 = vmul.f32 %v4080, %v4026
      %v4100 = vmul.f32 %v4084, %v4027
      %v4101 = vmul.f32 %v4056, %v4028
      %v4102 = vmul.f32 %v4060, %v4029
      %v4103 = vmul.f32 %v4064, %v4030
      %v4104 = vmul.f32 %v4068, %v4031
      %v4105 = vmul.f32 %v4072, %v4032
      %v4106 = vmul.f32 %v4076, %v4033
      %v4107 = vmul.f32 %v4080, %v4034
      %v4108 = vmul.f32 %v4084, %v4035
      %v4109 = vmul.f32 %v4056, %v4036
      %v4110 = vmul.f32 %v4060, %v4037
      %v4111 = vmul.f32 %v4064, %v4038
      %v4112 = vmul.f32 %v4068, %v4039
      %v4113 = vmul.f32 %v4072, %v4040
      %v4114 = vmul.f32 %v4076, %v4041
      %v4115 = vmul.f32 %v4080, %v4042
      %v4116 = vmul.f32 %v4084, %v4043
      %v4117 = vmul.f32 %v4056, %v4044
      %v4118 = vmul.f32 %v4060, %v4045
      %v4119 = vmul.f32 %v4064, %v4046
      %v4120 = vmul.f32 %v4068, %v4047
      %v4121 = vmul.f32 %v4072, %v4048
      %v4122 = vmul.f32 %v4076, %v4049
      %v4123 = vmul.f32 %v4080, %v4050
      %v4124 = vmul.f32 %v4084, %v4051
      %v4125 = vadd.f32 %v2069, %v4093
      %v4126 = vadd.f32 %v2071, %v4094
      %v4127 = vadd.f32 %v2142, %v4095
      %v4128 = vadd.f32 %v2144, %v4096
      %v4129 = vadd.f32 %v2215, %v4097
      %v4130 = vadd.f32 %v2217, %v4098
      %v4131 = vadd.f32 %v2288, %v4099
      %v4132 = vadd.f32 %v2290, %v4100
      %v4133 = vadd.f32 %v2073, %v4101
      %v4134 = vadd.f32 %v2075, %v4102
      %v4135 = vadd.f32 %v2146, %v4103
      %v4136 = vadd.f32 %v2148, %v4104
      %v4137 = vadd.f32 %v2219, %v4105
      %v4138 = vadd.f32 %v2221, %v4106
      %v4139 = vadd.f32 %v2292, %v4107
      %v4140 = vadd.f32 %v2294, %v4108
      %v4141 = vadd.f32 %v2079, %v4109
      %v4142 = vadd.f32 %v2081, %v4110
      %v4143 = vadd.f32 %v2152, %v4111
      %v4144 = vadd.f32 %v2154, %v4112
      %v4145 = vadd.f32 %v2225, %v4113
      %v4146 = vadd.f32 %v2227, %v4114
      %v4147 = vadd.f32 %v2298, %v4115
      %v4148 = vadd.f32 %v2300, %v4116
      %v4149 = vadd.f32 %v2083, %v4117
      %v4150 = vadd.f32 %v2085, %v4118
      %v4151 = vadd.f32 %v2156, %v4119
      %v4152 = vadd.f32 %v2158, %v4120
      %v4153 = vadd.f32 %v2229, %v4121
      %v4154 = vadd.f32 %v2231, %v4122
      %v4155 = vadd.f32 %v2302, %v4123
      %v4156 = vadd.f32 %v2304, %v4124
      %v4157 = vsub.f32 %v1261, %v2089
      %v4158 = vsub.f32 %v1263, %v2091
      %v4159 = vsub.f32 %v1334, %v2162
      %v4160 = vsub.f32 %v1336, %v2164
      %v4161 = vsub.f32 %v1407, %v2235
      %v4162 = vsub.f32 %v1409, %v2237
      %v4163 = vsub.f32 %v1480, %v2308
      %v4164 = vsub.f32 %v1482, %v2310
      %v4165 = vsub.f32 %v1265, %v2093
      %v4166 = vsub.f32 %v1267, %v2095
      %v4167 = vsub.f32 %v1338, %v2166
      %v4168 = vsub.f32 %v1340, %v2168
      %v4169 = vsub.f32 %v1411, %v2239
      %v4170 = vsub.f32 %v1413, %v2241
      %v4171 = vsub.f32 %v1484, %v2312
      %v4172 = vsub.f32 %v1486, %v2314
      %v4173 = vsub.f32 %v1271, %v2099
      %v4174 = vsub.f32 %v1273, %v2101
      %v4175 = vsub.f32 %v1344, %v2172
      %v4176 = vsub.f32 %v1346, %v2174
      %v4177 = vsub.f32 %v1417, %v2245
      %v4178 = vsub.f32 %v1419, %v2247
      %v4179 = vsub.f32 %v1490, %v2318
      %v4180 = vsub.f32 %v1492, %v2320
      %v4181 = vsub.f32 %v1275, %v2103
      %v4182 = vsub.f32 %v1277, %v2105
      %v4183 = vsub.f32 %v1348, %v2176
      %v4184 = vsub.f32 %v1350, %v2178
      %v4185 = vsub.f32 %v1421, %v2249
      %v4186 = vsub.f32 %v1423, %v2251
      %v4187 = vsub.f32 %v1494, %v2322
      %v4188 = vsub.f32 %v1496, %v2324
      %v4189 = vmul.f32 %v4056, %v4157
      %v4190 = vmul.f32 %v4060, %v4158
      %v4191 = vmul.f32 %v4064, %v4159
      %v4192 = vmul.f32 %v4068, %v4160
      %v4193 = vmul.f32 %v4072, %v4161
      %v4194 = vmul.f32 %v4076, %v4162
      %v4195 = vmul.f32 %v4080, %v4163
      %v4196 = vmul.f32 %v4084, %v4164
      %v4197 = vmul.f32 %v4056, %v4165
      %v4198 = vmul.f32 %v4060, %v4166
      %v4199 = vmul.f32 %v4064, %v4167
      %v4200 = vmul.f32 %v4068, %v4168
      %v4201 = vmul.f32 %v4072, %v4169
      %v4202 = vmul.f32 %v4076, %v4170
      %v4203 = vmul.f32 %v4080, %v4171
      %v4204 = vmul.f32 %v4084, %v4172
      %v4205 = vmul.f32 %v4056, %v4173
      %v4206 = vmul.f32 %v4060, %v4174
      %v4207 = vmul.f32 %v4064, %v4175
      %v4208 = vmul.f32 %v4068, %v4176
      %v4209 = vmul.f32 %v4072, %v4177
      %v4210 = vmul.f32 %v4076, %v4178
      %v4211 = vmul.f32 %v4080, %v4179
      %v4212 = vmul.f32 %v4084, %v4180
      %v4213 = vmul.f32 %v4056, %v4181
      %v4214 = vmul.f32 %v4060, %v4182
      %v4215 = vmul.f32 %v4064, %v4183
      %v4216 = vmul.f32 %v4068, %v4184
      %v4217 = vmul.f32 %v4072, %v4185
      %v4218 = vmul.f32 %v4076, %v4186
      %v4219 = vmul.f32 %v4080, %v4187
      %v4220 = vmul.f32 %v4084, %v4188
      %v4221 = vadd.f32 %v2089, %v4189
      %v4222 = vadd.f32 %v2091, %v4190
      %v4223 = vadd.f32 %v2162, %v4191
      %v4224 = vadd.f32 %v2164, %v4192
      %v4225 = vadd.f32 %v2235, %v4193
      %v4226 = vadd.f32 %v2237, %v4194
      %v4227 = vadd.f32 %v2308, %v4195
      %v4228 = vadd.f32 %v2310, %v4196
      %v4229 = vadd.f32 %v2093, %v4197
      %v4230 = vadd.f32 %v2095, %v4198
      %v4231 = vadd.f32 %v2166, %v4199
      %v4232 = vadd.f32 %v2168, %v4200
      %v4233 = vadd.f32 %v2239, %v4201
      %v4234 = vadd.f32 %v2241, %v4202
      %v4235 = vadd.f32 %v2312, %v4203
      %v4236 = vadd.f32 %v2314, %v4204
      %v4237 = vadd.f32 %v2099, %v4205
      %v4238 = vadd.f32 %v2101, %v4206
      %v4239 = vadd.f32 %v2172, %v4207
      %v4240 = vadd.f32 %v2174, %v4208
      %v4241 = vadd.f32 %v2245, %v4209
      %v4242 = vadd.f32 %v2247, %v4210
      %v4243 = vadd.f32 %v2318, %v4211
      %v4244 = vadd.f32 %v2320, %v4212
      %v4245 = vadd.f32 %v2103, %v4213
      %v4246 = vadd.f32 %v2105, %v4214
      %v4247 = vadd.f32 %v2176, %v4215
      %v4248 = vadd.f32 %v2178, %v4216
      %v4249 = vadd.f32 %v2249, %v4217
      %v4250 = vadd.f32 %v2251, %v4218
      %v4251 = vadd.f32 %v2322, %v4219
      %v4252 = vadd.f32 %v2324, %v4220
      %v4253 = vld [vmem:[%s657] sm:$0xff]
      %v4254 = vld [vmem:[%s657 + $0x8] sm:$0xff]
      %v4255 = vld [vmem:[%s657 + $0x10] sm:$0xff]
      %v4256 = vld [vmem:[%s657 + $0x18] sm:$0xff]
      %v4257 = vld [vmem:[%s657 + $0x20] sm:$0xff]
      %v4258 = vld [vmem:[%s657 + $0x28] sm:$0xff]
      %v4259 = vld [vmem:[%s657 + $0x30] sm:$0xff]
      %v4260 = vld [vmem:[%s657 + $0x38] sm:$0xff]
      %4262 = vset.pattern.permute.xlu0 0
      %4263 = vperm.xlu0 %4262, %v4253
      %v4264 = vpop.permute.xlu0 %4263
      %4267 = vset.pattern.permute.xlu0 0
      %4268 = vperm.xlu0 %4267, %v4254
      %v4269 = vpop.permute.xlu0 %4268
      %4272 = vset.pattern.permute.xlu0 0
      %4273 = vperm.xlu0 %4272, %v4255
      %v4274 = vpop.permute.xlu0 %4273
      %4277 = vset.pattern.permute.xlu0 0
      %4278 = vperm.xlu0 %4277, %v4256
      %v4279 = vpop.permute.xlu0 %4278
      %v4281 = vmul.f32 %v4264, %v3987
      %v4282 = vmul.f32 %v4264, %v3988
      %v4283 = vmul.f32 %v4264, %v3989
      %v4284 = vmul.f32 %v4264, %v3990
      %v4285 = vmul.f32 %v4264, %v3991
      %v4286 = vmul.f32 %v4264, %v3992
      %v4287 = vmul.f32 %v4264, %v3993
      %v4288 = vmul.f32 %v4264, %v3994
      %v4289 = vmul.f32 %v4269, %v3995
      %v4290 = vmul.f32 %v4269, %v3996
      %v4291 = vmul.f32 %v4269, %v3997
      %v4292 = vmul.f32 %v4269, %v3998
      %v4293 = vmul.f32 %v4269, %v3999
      %v4294 = vmul.f32 %v4269, %v4000
      %v4295 = vmul.f32 %v4269, %v4001
      %v4296 = vmul.f32 %v4269, %v4002
      %v4297 = vmul.f32 %v4274, %v4003
      %v4298 = vmul.f32 %v4274, %v4004
      %v4299 = vmul.f32 %v4274, %v4005
      %v4300 = vmul.f32 %v4274, %v4006
      %v4301 = vmul.f32 %v4274, %v4007
      %v4302 = vmul.f32 %v4274, %v4008
      %v4303 = vmul.f32 %v4274, %v4009
      %v4304 = vmul.f32 %v4274, %v4010
      %v4305 = vmul.f32 %v4279, %v4011
      %v4306 = vmul.f32 %v4279, %v4012
      %v4307 = vmul.f32 %v4279, %v4013
      %v4308 = vmul.f32 %v4279, %v4014
      %v4309 = vmul.f32 %v4279, %v4015
      %v4310 = vmul.f32 %v4279, %v4016
      %v4311 = vmul.f32 %v4279, %v4017
      %v4312 = vmul.f32 %v4279, %v4018
      %4314 = vset.pattern.permute.xlu0 0
      %4315 = vperm.xlu0 %4314, %v4257
      %v4316 = vpop.permute.xlu0 %4315
      %4319 = vset.pattern.permute.xlu0 0
      %4320 = vperm.xlu0 %4319, %v4258
      %v4321 = vpop.permute.xlu0 %4320
      %4324 = vset.pattern.permute.xlu0 0
      %4325 = vperm.xlu0 %4324, %v4259
      %v4326 = vpop.permute.xlu0 %4325
      %4329 = vset.pattern.permute.xlu0 0
      %4330 = vperm.xlu0 %4329, %v4260
      %v4331 = vpop.permute.xlu0 %4330
      %v4333 = vadd.f32 %v4281, %v4316
      %v4334 = vadd.f32 %v4282, %v4316
      %v4335 = vadd.f32 %v4283, %v4316
      %v4336 = vadd.f32 %v4284, %v4316
      %v4337 = vadd.f32 %v4285, %v4316
      %v4338 = vadd.f32 %v4286, %v4316
      %v4339 = vadd.f32 %v4287, %v4316
      %v4340 = vadd.f32 %v4288, %v4316
      %v4341 = vadd.f32 %v4289, %v4321
      %v4342 = vadd.f32 %v4290, %v4321
      %v4343 = vadd.f32 %v4291, %v4321
      %v4344 = vadd.f32 %v4292, %v4321
      %v4345 = vadd.f32 %v4293, %v4321
      %v4346 = vadd.f32 %v4294, %v4321
      %v4347 = vadd.f32 %v4295, %v4321
      %v4348 = vadd.f32 %v4296, %v4321
      %v4349 = vadd.f32 %v4297, %v4326
      %v4350 = vadd.f32 %v4298, %v4326
      %v4351 = vadd.f32 %v4299, %v4326
      %v4352 = vadd.f32 %v4300, %v4326
      %v4353 = vadd.f32 %v4301, %v4326
      %v4354 = vadd.f32 %v4302, %v4326
      %v4355 = vadd.f32 %v4303, %v4326
      %v4356 = vadd.f32 %v4304, %v4326
      %v4357 = vadd.f32 %v4305, %v4331
      %v4358 = vadd.f32 %v4306, %v4331
      %v4359 = vadd.f32 %v4307, %v4331
      %v4360 = vadd.f32 %v4308, %v4331
      %v4361 = vadd.f32 %v4309, %v4331
      %v4362 = vadd.f32 %v4310, %v4331
      %v4363 = vadd.f32 %v4311, %v4331
      %v4364 = vadd.f32 %v4312, %v4331
      %v4365 = vmul.f32 %v4125, %v3987
      %v4366 = vmul.f32 %v4126, %v3988
      %v4367 = vmul.f32 %v4127, %v3989
      %v4368 = vmul.f32 %v4128, %v3990
      %v4369 = vmul.f32 %v4129, %v3991
      %v4370 = vmul.f32 %v4130, %v3992
      %v4371 = vmul.f32 %v4131, %v3993
      %v4372 = vmul.f32 %v4132, %v3994
      %v4373 = vmul.f32 %v4133, %v3995
      %v4374 = vmul.f32 %v4134, %v3996
      %v4375 = vmul.f32 %v4135, %v3997
      %v4376 = vmul.f32 %v4136, %v3998
      %v4377 = vmul.f32 %v4137, %v3999
      %v4378 = vmul.f32 %v4138, %v4000
      %v4379 = vmul.f32 %v4139, %v4001
      %v4380 = vmul.f32 %v4140, %v4002
      %v4381 = vmul.f32 %v4141, %v4003
      %v4382 = vmul.f32 %v4142, %v4004
      %v4383 = vmul.f32 %v4143, %v4005
      %v4384 = vmul.f32 %v4144, %v4006
      %v4385 = vmul.f32 %v4145, %v4007
      %v4386 = vmul.f32 %v4146, %v4008
      %v4387 = vmul.f32 %v4147, %v4009
      %v4388 = vmul.f32 %v4148, %v4010
      %v4389 = vmul.f32 %v4149, %v4011
      %v4390 = vmul.f32 %v4150, %v4012
      %v4391 = vmul.f32 %v4151, %v4013
      %v4392 = vmul.f32 %v4152, %v4014
      %v4393 = vmul.f32 %v4153, %v4015
      %v4394 = vmul.f32 %v4154, %v4016
      %v4395 = vmul.f32 %v4155, %v4017
      %v4396 = vmul.f32 %v4156, %v4018
      %v4397 = vadd.f32 %v4365, %v4221
      %v4398 = vadd.f32 %v4366, %v4222
      %v4399 = vadd.f32 %v4367, %v4223
      %v4400 = vadd.f32 %v4368, %v4224
      %v4401 = vadd.f32 %v4369, %v4225
      %v4402 = vadd.f32 %v4370, %v4226
      %v4403 = vadd.f32 %v4371, %v4227
      %v4404 = vadd.f32 %v4372, %v4228
      %v4405 = vadd.f32 %v4373, %v4229
      %v4406 = vadd.f32 %v4374, %v4230
      %v4407 = vadd.f32 %v4375, %v4231
      %v4408 = vadd.f32 %v4376, %v4232
      %v4409 = vadd.f32 %v4377, %v4233
      %v4410 = vadd.f32 %v4378, %v4234
      %v4411 = vadd.f32 %v4379, %v4235
      %v4412 = vadd.f32 %v4380, %v4236
      %v4413 = vadd.f32 %v4381, %v4237
      %v4414 = vadd.f32 %v4382, %v4238
      %v4415 = vadd.f32 %v4383, %v4239
      %v4416 = vadd.f32 %v4384, %v4240
      %v4417 = vadd.f32 %v4385, %v4241
      %v4418 = vadd.f32 %v4386, %v4242
      %v4419 = vadd.f32 %v4387, %v4243
      %v4420 = vadd.f32 %v4388, %v4244
      %v4421 = vadd.f32 %v4389, %v4245
      %v4422 = vadd.f32 %v4390, %v4246
      %v4423 = vadd.f32 %v4391, %v4247
      %v4424 = vadd.f32 %v4392, %v4248
      %v4425 = vadd.f32 %v4393, %v4249
      %v4426 = vadd.f32 %v4394, %v4250
      %v4427 = vadd.f32 %v4395, %v4251
      %v4428 = vadd.f32 %v4396, %v4252
      %v4429 = vsub.f32 %v4333, %v4397
      %v4430 = vsub.f32 %v4334, %v4398
      %v4431 = vsub.f32 %v4335, %v4399
      %v4432 = vsub.f32 %v4336, %v4400
      %v4433 = vsub.f32 %v4337, %v4401
      %v4434 = vsub.f32 %v4338, %v4402
      %v4435 = vsub.f32 %v4339, %v4403
      %v4436 = vsub.f32 %v4340, %v4404
      %v4437 = vsub.f32 %v4341, %v4405
      %v4438 = vsub.f32 %v4342, %v4406
      %v4439 = vsub.f32 %v4343, %v4407
      %v4440 = vsub.f32 %v4344, %v4408
      %v4441 = vsub.f32 %v4345, %v4409
      %v4442 = vsub.f32 %v4346, %v4410
      %v4443 = vsub.f32 %v4347, %v4411
      %v4444 = vsub.f32 %v4348, %v4412
      %v4445 = vsub.f32 %v4349, %v4413
      %v4446 = vsub.f32 %v4350, %v4414
      %v4447 = vsub.f32 %v4351, %v4415
      %v4448 = vsub.f32 %v4352, %v4416
      %v4449 = vsub.f32 %v4353, %v4417
      %v4450 = vsub.f32 %v4354, %v4418
      %v4451 = vsub.f32 %v4355, %v4419
      %v4452 = vsub.f32 %v4356, %v4420
      %v4453 = vsub.f32 %v4357, %v4421
      %v4454 = vsub.f32 %v4358, %v4422
      %v4455 = vsub.f32 %v4359, %v4423
      %v4456 = vsub.f32 %v4360, %v4424
      %v4457 = vsub.f32 %v4361, %v4425
      %v4458 = vsub.f32 %v4362, %v4426
      %v4459 = vsub.f32 %v4363, %v4427
      %v4460 = vsub.f32 %v4364, %v4428
      %v4461 = vmul.f32 %v3812, %v4429
      %v4462 = vmul.f32 %v3814, %v4430
      %v4463 = vmul.f32 %v3816, %v4431
      %v4464 = vmul.f32 %v3818, %v4432
      %v4465 = vmul.f32 %v3820, %v4433
      %v4466 = vmul.f32 %v3822, %v4434
      %v4467 = vmul.f32 %v3824, %v4435
      %v4468 = vmul.f32 %v3826, %v4436
      %v4469 = vmul.f32 %v3828, %v4437
      %v4470 = vmul.f32 %v3830, %v4438
      %v4471 = vmul.f32 %v3832, %v4439
      %v4472 = vmul.f32 %v3834, %v4440
      %v4473 = vmul.f32 %v3836, %v4441
      %v4474 = vmul.f32 %v3838, %v4442
      %v4475 = vmul.f32 %v3840, %v4443
      %v4476 = vmul.f32 %v3842, %v4444
      %v4477 = vmul.f32 %v3844, %v4445
      %v4478 = vmul.f32 %v3846, %v4446
      %v4479 = vmul.f32 %v3848, %v4447
      %v4480 = vmul.f32 %v3850, %v4448
      %v4481 = vmul.f32 %v3852, %v4449
      %v4482 = vmul.f32 %v3854, %v4450
      %v4483 = vmul.f32 %v3856, %v4451
      %v4484 = vmul.f32 %v3858, %v4452
      %v4485 = vmul.f32 %v3860, %v4453
      %v4486 = vmul.f32 %v3862, %v4454
      %v4487 = vmul.f32 %v3864, %v4455
      %v4488 = vmul.f32 %v3866, %v4456
      %v4489 = vmul.f32 %v3868, %v4457
      %v4490 = vmul.f32 %v3870, %v4458
      %v4491 = vmul.f32 %v3872, %v4459
      %v4492 = vmul.f32 %v3874, %v4460
      %v4493 = vadd.f32 %v4397, %v4461
      %v4494 = vadd.f32 %v4398, %v4462
      %v4495 = vadd.f32 %v4399, %v4463
      %v4496 = vadd.f32 %v4400, %v4464
      %v4497 = vadd.f32 %v4401, %v4465
      %v4498 = vadd.f32 %v4402, %v4466
      %v4499 = vadd.f32 %v4403, %v4467
      %v4500 = vadd.f32 %v4404, %v4468
      %v4501 = vadd.f32 %v4405, %v4469
      %v4502 = vadd.f32 %v4406, %v4470
      %v4503 = vadd.f32 %v4407, %v4471
      %v4504 = vadd.f32 %v4408, %v4472
      %v4505 = vadd.f32 %v4409, %v4473
      %v4506 = vadd.f32 %v4410, %v4474
      %v4507 = vadd.f32 %v4411, %v4475
      %v4508 = vadd.f32 %v4412, %v4476
      %v4509 = vadd.f32 %v4413, %v4477
      %v4510 = vadd.f32 %v4414, %v4478
      %v4511 = vadd.f32 %v4415, %v4479
      %v4512 = vadd.f32 %v4416, %v4480
      %v4513 = vadd.f32 %v4417, %v4481
      %v4514 = vadd.f32 %v4418, %v4482
      %v4515 = vadd.f32 %v4419, %v4483
      %v4516 = vadd.f32 %v4420, %v4484
      %v4517 = vadd.f32 %v4421, %v4485
      %v4518 = vadd.f32 %v4422, %v4486
      %v4519 = vadd.f32 %v4423, %v4487
      %v4520 = vadd.f32 %v4424, %v4488
      %v4521 = vadd.f32 %v4425, %v4489
      %v4522 = vadd.f32 %v4426, %v4490
      %v4523 = vadd.f32 %v4427, %v4491
      %v4524 = vadd.f32 %v4428, %v4492
      %4525 = vst [vmem:[%s666] sm:$0xff] %v4493
      %4526 = vst [vmem:[%s666 + $0x8] sm:$0xff] %v4494
      %4527 = vst [vmem:[%s666 + $0x10] sm:$0xff] %v4495
      %4528 = vst [vmem:[%s666 + $0x18] sm:$0xff] %v4496
      %4529 = vst [vmem:[%s666 + $0x20] sm:$0xff] %v4497
      %4530 = vst [vmem:[%s666 + $0x28] sm:$0xff] %v4498
      %4531 = vst [vmem:[%s666 + $0x30] sm:$0xff] %v4499
      %4532 = vst [vmem:[%s666 + $0x38] sm:$0xff] %v4500
      %4533 = vst [vmem:[%s666 + $0x40] sm:$0xff] %v4501
      %4534 = vst [vmem:[%s666 + $0x48] sm:$0xff] %v4502
      %4535 = vst [vmem:[%s666 + $0x50] sm:$0xff] %v4503
      %4536 = vst [vmem:[%s666 + $0x58] sm:$0xff] %v4504
      %4537 = vst [vmem:[%s666 + $0x60] sm:$0xff] %v4505
      %4538 = vst [vmem:[%s666 + $0x68] sm:$0xff] %v4506
      %4539 = vst [vmem:[%s666 + $0x70] sm:$0xff] %v4507
      %4540 = vst [vmem:[%s666 + $0x78] sm:$0xff] %v4508
      %4541 = vst [vmem:[%s666 + $0x80] sm:$0xff] %v4509
      %4542 = vst [vmem:[%s666 + $0x88] sm:$0xff] %v4510
      %4543 = vst [vmem:[%s666 + $0x90] sm:$0xff] %v4511
      %4544 = vst [vmem:[%s666 + $0x98] sm:$0xff] %v4512
      %4545 = vst [vmem:[%s666 + $0xa0] sm:$0xff] %v4513
      %4546 = vst [vmem:[%s666 + $0xa8] sm:$0xff] %v4514
      %4547 = vst [vmem:[%s666 + $0xb0] sm:$0xff] %v4515
      %4548 = vst [vmem:[%s666 + $0xb8] sm:$0xff] %v4516
      %4549 = vst [vmem:[%s666 + $0xc0] sm:$0xff] %v4517
      %4550 = vst [vmem:[%s666 + $0xc8] sm:$0xff] %v4518
      %4551 = vst [vmem:[%s666 + $0xd0] sm:$0xff] %v4519
      %4552 = vst [vmem:[%s666 + $0xd8] sm:$0xff] %v4520
      %4553 = vst [vmem:[%s666 + $0xe0] sm:$0xff] %v4521
      %4554 = vst [vmem:[%s666 + $0xe8] sm:$0xff] %v4522
      %4555 = vst [vmem:[%s666 + $0xf0] sm:$0xff] %v4523
      %4556 = vst [vmem:[%s666 + $0xf8] sm:$0xff] %v4524
      %s4557 = smul.u32 8, %s30
      %p4558 = scmp.lt.s32.totalorder %s29, 1
      %s4559 = scalar_select %p4558, %s29, 1
      %p4560 = scmp.lt.s32.totalorder %s4557, 7
      %s4561 = scalar_select %p4560, %s4557, 7
      %s4562 = smul.addr %s4559, 32
      %s4563 = sadd.s32 %s4561, %s4562
      %s4564 = smul.addr %s4563, 8
      %s4565 = scalar_lea.vmem %s14, %s4564
      // Predicated region
      $region77: #{biadd_forward.1} parent=75 // pred_check
        %p4566 = pneg %p391
      $region78: #{biadd_forward.1} parent=75 // pred_check_branch
        %4568 = sbr.rel (%p4566) target = $region80
      $region79: #{biadd_forward.1} parent=75 // pred_region
        %s4569 = smul.u32 8, %s30
      $region80: #{biadd_forward.1} parent=75 // pred_fallthru
        _
    $region76: #{biadd_forward.1} parent=5 // pred_fallthru
      _
    %p4570 = scmp.le.s32.totalorder 2, %s20
    // Predicated region
    $region81: #{biadd_forward.1} parent=5 // pred_check
      %p4571 = pneg %p4570
    $region82: #{biadd_forward.1} parent=5 // pred_check_branch
      %4573 = sbr.rel (%p4571) target = $region84
    $region83: #{biadd_forward.1} parent=5 // pred_region
      %s4574 = ssub.s32 %s20, 2
      // Predicated region
      $region85: #{biadd_forward.1} parent=83 // pred_check
        %p4575 = pneg %p397
      $region86: #{biadd_forward.1} parent=83 // pred_check_branch
        %4577 = sbr.rel (%p4575) target = $region88
      $region87: #{biadd_forward.1} parent=83 // pred_region
        %s4578 = smul.u32 8, %s32
        %p4579 = scmp.lt.s32.totalorder %s31, 1
        %s4580 = scalar_select %p4579, %s31, 1
        %p4581 = scmp.lt.s32.totalorder %s4578, 7
        %s4582 = scalar_select %p4581, %s4578, 7
        %s4583 = smul.addr %s4580, 32
        %s4584 = sadd.s32 %s4582, %s4583
        %s4585 = smul.addr %s4584, 8
        %s4586 = scalar_lea.vmem %s14, %s4585
      $region88: #{biadd_forward.1} parent=83 // pred_fallthru
        _
    $region84: #{biadd_forward.1} parent=5 // pred_fallthru
      _
  $region6: #{biadd_forward.1} parent=0 // loop_footer
    %s24 = sadd.s32 1, %s20
  $region7: #{biadd_forward.1} parent=0 // loop_footer_branch
    %19 = sbr.rel target = $region3
  $region8: #{biadd_forward.1} parent=0 // loop_exit
    _

</llo_original>
